<compile_context>
chip_gen: v6e
topology: v6e:2x2x1
jax: 0.10.0
libtpu: 0.0.40
codegen_flags: <defaults>
</compile_context>

<pallas_src>
import functools

import jax
import jax.numpy as jnp
from jax import lax
from jax.experimental import pallas as pl
from jax.experimental.pallas import tpu as pltpu

EPS = 1e-5


# ---------------------------- fused Pallas kernel ----------------------------

def _make_fused_kernel(treedef, H, W, compute_dtype):
    HW = H * W

    def _dot(w, a):
        # MXU matmul with optional low-precision operands, f32 accumulation.
        return jnp.dot(w.astype(compute_dtype), a.astype(compute_dtype),
                       preferred_element_type=jnp.float32)

    def _preconv(p, x):
        # folded BN (inference) + ReLU + 1x1 conv (+ optional bias)
        a = jnp.maximum(x * p["scale"][...] + p["shift"][...], 0.0)
        y = _dot(p["w"][...], a)
        if "b" in p:
            y = y + p["b"][...]
        return y

    def _conv3x3(p, x, masks):
        # folded BN + ReLU + 3x3 conv (pad=1, stride=1, dilation=1):
        # 8 masked lane-rolls + center tap, concatenated into one stacked
        # (9*Cmid, HW) operand, then a SINGLE MXU matmul against the
        # pre-reshaped (Cout, 9*Cmid) weight.
        a = jnp.maximum(x * p["scale"][...] + p["shift"][...], 0.0)   # (Cmid, HW)
        taps = []
        mi = 0
        for dy in range(3):
            for dx in range(3):
                oy, ox = dy - 1, dx - 1
                k = oy * W + ox
                if k == 0:
                    taps.append(a)
                else:
                    rolled = pltpu.roll(a, shift=(-k) % HW, axis=1)
                    taps.append(rolled * masks[mi:mi + 1, :])          # (1, HW) mask
                    mi += 1
        stacked = jnp.concatenate(taps, axis=0)                        # (9*Cmid, HW)
        return _dot(p["w9r"][...], stacked)                            # (Cout, HW)

    def kernel(*refs):
        x_ref, mask_ref = refs[0], refs[1]
        o_ref = refs[-1]
        p = jax.tree_util.tree_unflatten(treedef, refs[2:-1])

        # Border-validity masks for the 8 non-center conv taps: loaded once
        # per kernel invocation, reused by every FishBlock.
        masks = mask_ref[...]                                          # (8, HW)

        x = x_ref[0]                                                   # (Cin, HW)
        x1 = _preconv(p["conv1"], x)                                   # (Cin//2, HW)
        x2 = _preconv(p["conv2"], x1)                                  # (2*Cin, HW)

        # --- SE attention (PreSEAttBlock), pool-first: tiny column compute.
        se = p["se"]
        a = jnp.maximum(x2 * se["scale"][...] + se["shift"][...], 0.0)
        pooled = jnp.mean(a, axis=1, keepdims=True)                    # (mid2, 1)
        h = jnp.maximum(
            jnp.dot(se["w1"][...], pooled, preferred_element_type=jnp.float32)
            + se["b1"][...], 0.0)                                      # (mid, 1)
        w_att = jax.nn.sigmoid(
            jnp.dot(se["w2"][...], h, preferred_element_type=jnp.float32)
            + se["b2"][...])                                           # (Clast, 1)

        # --- FishBlocks (stride=1, dilation=1, squeeze=False in SkipAttUnit)
        y = x2
        for bp in p["blocks"]:
            ident = _preconv(bp["identity"], y) if "identity" in bp else y
            b = _preconv(bp["conv1"], y)
            b = _conv3x3(bp["conv2"], b, masks)
            y = _preconv(bp["conv3"], b) + ident

        # --- epilogue fused into the final writeback: x * w + w
        # (w_att broadcasts from (Clast, 1) across the HW lanes here only)
        o_ref[0] = y * w_att + w_att

    return kernel


def _make_border_masks(H, W):
    """(8, HW) validity masks for the 8 non-center 3x3 taps (host-side)."""
    HW = H * W
    lane = jnp.arange(HW, dtype=jnp.int32)
    hh = lane // W
    ww = lane % W
    rows = []
    for dy in range(3):
        for dx in range(3):
            oy, ox = dy - 1, dx - 1
            if oy == 0 and ox == 0:
                continue
            valid = ((hh + oy >= 0) & (hh + oy < H)
                     & (ww + ox >= 0) & (ww + ox < W))
            rows.append(valid.astype(jnp.float32))
    return jnp.stack(rows, axis=0)                                     # (8, HW)


def _pack_params_for_kernel(params, compute_dtype):
    """Reshape 3x3 weights to (Cout, 9*Cin) and cast dot weights."""
    def pack_pre(p):
        q = dict(p)
        q["w"] = p["w"].astype(compute_dtype)
        return q

    def pack_conv3(p):
        cout = p["w9"].shape[1]
        w9r = jnp.transpose(p["w9"], (1, 0, 2)).reshape(cout, -1)      # (Cout, 9*Cin)
        return dict(scale=p["scale"], shift=p["shift"],
                    w9r=w9r.astype(compute_dtype))

    packed = dict(
        conv1=pack_pre(params["conv1"]),
        conv2=pack_pre(params["conv2"]),
        se=dict(params["se"]),     # tiny column fcs kept f32
        blocks=[],
    )
    for bp in params["blocks"]:
        q = dict(conv1=pack_pre(bp["conv1"]),
                 conv2=pack_conv3(bp["conv2"]),
                 conv3=pack_pre(bp["conv3"]))
        if "identity" in bp:
            q["identity"] = pack_pre(bp["identity"])
        packed["blocks"].append(q)
    return packed


def skip_att_unit_forward(x_nchw, params, *, compute_dtype=jnp.float32):
    N, C, H, W = x_nchw.shape
    HW = H * W
    x = x_nchw.reshape(N, C, HW)                        # NCHW -> (N, C, HW), no transpose

    masks = _make_border_masks(H, W)
    packed = _pack_params_for_kernel(params, compute_dtype)
    flat, treedef = jax.tree_util.tree_flatten(packed)
    clast = params["se"]["w2"].shape[0]

    kernel = _make_fused_kernel(treedef, H, W, compute_dtype)

    in_specs = [pl.BlockSpec((1, C, HW), lambda n: (n, 0, 0)),
                pl.BlockSpec(masks.shape, lambda n: (0, 0))]
    # Parameters are tiny; constant block index => they stay VMEM-resident
    # across the whole batch grid.
    in_specs += [pl.BlockSpec(a.shape, lambda n, nd=a.ndim: (0,) * nd) for a in flat]
    out_specs = pl.BlockSpec((1, clast, HW), lambda n: (n, 0, 0))

    out = pl.pallas_call(
        kernel,
        out_shape=jax.ShapeDtypeStruct((N, clast, HW), jnp.float32),
        grid=(N,),
        in_specs=in_specs,
        out_specs=out_specs,
        compiler_params=pltpu.CompilerParams(
            dimension_semantics=("parallel",)),
    )(x, masks, *flat)
    return out.reshape(N, clast, H, W)


# ---------------------------- parameter init ----------------------------

def _folded_bn(key, c):
    k = jax.random.split(key, 4)
    gamma = 0.5 + jax.random.uniform(k[0], (c,), dtype=jnp.float32)
    beta = 0.1 * jax.random.normal(k[1], (c,), dtype=jnp.float32)
    mean = 0.1 * jax.random.normal(k[2], (c,), dtype=jnp.float32)
    var = 0.5 + jax.random.uniform(k[3], (c,), dtype=jnp.float32)
    scale = gamma / jnp.sqrt(var + EPS)
    shift = beta - mean * scale
    return scale.reshape(c, 1), shift.reshape(c, 1)


def make_preconv1x1_params(key, cin, cout, bias=False):
    kb, kw, kbi = jax.random.split(key, 3)
    scale, shift = _folded_bn(kb, cin)
    w = jax.random.normal(kw, (cout, cin), dtype=jnp.float32) / jnp.sqrt(cin)
    p = dict(scale=scale, shift=shift, w=w)
    if bias:
        p["b"] = (0.1 * jax.random.normal(kbi, (cout,), dtype=jnp.float32)).reshape(cout, 1)
    return p


def make_conv3x3_params(key, cin, cout):
    kb, kw = jax.random.split(key)
    scale, shift = _folded_bn(kb, cin)
    # w9[t] = W[:, :, dy, dx] with t = dy*3 + dx, shape (Cout, Cin)
    w9 = jax.random.normal(kw, (9, cout, cin), dtype=jnp.float32) / jnp.sqrt(9 * cin)
    return dict(scale=scale, shift=shift, w9=w9)


def make_se_params(key, cin, cout, reduction=16):
    mid = max(cout // reduction, 1)
    kb, kw1, kb1, kw2, kb2 = jax.random.split(key, 5)
    scale, shift = _folded_bn(kb, cin)
    return dict(
        scale=scale, shift=shift,
        w1=jax.random.normal(kw1, (mid, cin), dtype=jnp.float32) / jnp.sqrt(cin),
        b1=(0.1 * jax.random.normal(kb1, (mid,), dtype=jnp.float32)).reshape(mid, 1),
        w2=jax.random.normal(kw2, (cout, mid), dtype=jnp.float32) / jnp.sqrt(mid),
        b2=(0.1 * jax.random.normal(kb2, (cout,), dtype=jnp.float32)).reshape(cout, 1),
    )


def make_fishblock_params(key, cin, cout):
    mid = cout // 4
    k1, k2, k3, k4 = jax.random.split(key, 4)
    p = dict(
        conv1=make_preconv1x1_params(k1, cin, mid),
        conv2=make_conv3x3_params(k2, mid, mid),
        conv3=make_preconv1x1_params(k3, mid, cout),
    )
    if cin != cout:  # resize_identity path (stride is always 1 in SkipAttUnit)
        p["identity"] = make_preconv1x1_params(k4, cin, cout)
    return p


def make_skip_att_unit_params(key, in_channels, out_channels_list):
    mid1 = in_channels // 2
    mid2 = 2 * in_channels
    keys = jax.random.split(key, 3 + len(out_channels_list))
    params = dict(
        conv1=make_preconv1x1_params(keys[0], in_channels, mid1),
        conv2=make_preconv1x1_params(keys[1], mid1, mid2, bias=True),
        se=make_se_params(keys[2], mid2, out_channels_list[-1]),
        blocks=[],
    )
    cin = mid2
    for i, cout in enumerate(out_channels_list):
        params["blocks"].append(make_fishblock_params(keys[3 + i], cin, cout))
        cin = cout
    return params


# ---------------------------- pure-JAX reference ----------------------------

def _ref_preconv(x, p):
    a = jnp.maximum(x * p["scale"].reshape(1, -1, 1, 1)
                    + p["shift"].reshape(1, -1, 1, 1), 0.0)
    y = jnp.einsum("oc,nchw->nohw", p["w"], a)
    if "b" in p:
        y = y + p["b"].reshape(1, -1, 1, 1)
    return y


def _ref_conv3x3(x, p):
    a = jnp.maximum(x * p["scale"].reshape(1, -1, 1, 1)
                    + p["shift"].reshape(1, -1, 1, 1), 0.0)
    cout, cin = p["w9"].shape[1:]
    w_oihw = p["w9"].reshape(3, 3, cout, cin).transpose(2, 3, 0, 1)
    return lax.conv_general_dilated(
        a, w_oihw, window_strides=(1, 1), padding=((1, 1), (1, 1)),
        dimension_numbers=("NCHW", "OIHW", "NCHW"))


def ref_forward(x, params):
    x1 = _ref_preconv(x, params["conv1"])
    x2 = _ref_preconv(x1, params["conv2"])
    se = params["se"]
    a = jnp.maximum(x2 * se["scale"].reshape(1, -1, 1, 1)
                    + se["shift"].reshape(1, -1, 1, 1), 0.0)
    pooled = a.mean(axis=(2, 3))                                    # (N, mid2)
    h = jnp.maximum(pooled @ se["w1"].T + se["b1"].reshape(-1), 0.0)
    w_att = jax.nn.sigmoid(h @ se["w2"].T + se["b2"].reshape(-1))   # (N, Clast)
    y = x2
    for bp in params["blocks"]:
        ident = _ref_preconv(y, bp["identity"]) if "identity" in bp else y
        b = _ref_preconv(y, bp["conv1"])
        b = _ref_conv3x3(b, bp["conv2"])
        y = _ref_preconv(b, bp["conv3"]) + ident
    w_b = w_att[:, :, None, None]
    return y * w_b + w_b


# ---------------------------- main ----------------------------

if __name__ == "__main__":
    key = jax.random.PRNGKey(0)
    k_x, k_p = jax.random.split(key)

    N, in_channels, H, W = 2, 8, 16, 16
    out_channels_list = [16, 32]     # last must be >= 16 (SE reduction = 16)

    x = jax.random.normal(k_x, (N, in_channels, H, W), dtype=jnp.float32)  # NCHW
    params = make_skip_att_unit_params(k_p, in_channels, out_channels_list)

    ref = jax.block_until_ready(ref_forward(x, params))

    # --- f32 dot operands: tight correctness check against the reference.
    fwd = jax.jit(functools.partial(skip_att_unit_forward, params=params))
    out = jax.block_until_ready(fwd(x))
    assert out.shape == (N, out_channels_list[-1], H, W), out.shape
    max_err = float(jnp.max(jnp.abs(out - ref)))
    assert max_err < 2e-3, f"mismatch vs reference: max abs err = {max_err}"

    # --- bf16 dot operands (v6e/v7x perf mode), f32 accumulation: loose check.
    fwd_bf16 = jax.jit(functools.partial(
        skip_att_unit_forward, params=params, compute_dtype=jnp.bfloat16))
    out_bf16 = jax.block_until_ready(fwd_bf16(x))
    assert out_bf16.shape == (N, out_channels_list[-1], H, W), out_bf16.shape
    assert bool(jnp.all(jnp.isfinite(out_bf16)))
    rel = float(jnp.max(jnp.abs(out_bf16 - ref))
                / (jnp.max(jnp.abs(ref)) + 1e-6))
    assert rel < 0.1, f"bf16 mode too far from reference: rel err = {rel}"

    print("KERNEL_OK")
</pallas_src>

<mosaic_0001>
module attributes {stable_mosaic.version = 11 : i64} {
  func.func @kernel(%arg0: i32, %arg1: memref<1x8x256xf32, #tpu.memory_space<vmem>>, %arg2: memref<8x256xf32, #tpu.memory_space<vmem>>, %arg3: memref<16x1xf32, #tpu.memory_space<vmem>>, %arg4: memref<16x1xf32, #tpu.memory_space<vmem>>, %arg5: memref<4x16xf32, #tpu.memory_space<vmem>>, %arg6: memref<4x1xf32, #tpu.memory_space<vmem>>, %arg7: memref<4x1xf32, #tpu.memory_space<vmem>>, %arg8: memref<4x36xf32, #tpu.memory_space<vmem>>, %arg9: memref<4x1xf32, #tpu.memory_space<vmem>>, %arg10: memref<4x1xf32, #tpu.memory_space<vmem>>, %arg11: memref<16x4xf32, #tpu.memory_space<vmem>>, %arg12: memref<16x1xf32, #tpu.memory_space<vmem>>, %arg13: memref<16x1xf32, #tpu.memory_space<vmem>>, %arg14: memref<8x16xf32, #tpu.memory_space<vmem>>, %arg15: memref<8x1xf32, #tpu.memory_space<vmem>>, %arg16: memref<8x1xf32, #tpu.memory_space<vmem>>, %arg17: memref<8x72xf32, #tpu.memory_space<vmem>>, %arg18: memref<8x1xf32, #tpu.memory_space<vmem>>, %arg19: memref<8x1xf32, #tpu.memory_space<vmem>>, %arg20: memref<32x8xf32, #tpu.memory_space<vmem>>, %arg21: memref<16x1xf32, #tpu.memory_space<vmem>>, %arg22: memref<16x1xf32, #tpu.memory_space<vmem>>, %arg23: memref<32x16xf32, #tpu.memory_space<vmem>>, %arg24: memref<8x1xf32, #tpu.memory_space<vmem>>, %arg25: memref<8x1xf32, #tpu.memory_space<vmem>>, %arg26: memref<4x8xf32, #tpu.memory_space<vmem>>, %arg27: memref<16x1xf32, #tpu.memory_space<vmem>>, %arg28: memref<4x1xf32, #tpu.memory_space<vmem>>, %arg29: memref<4x1xf32, #tpu.memory_space<vmem>>, %arg30: memref<16x4xf32, #tpu.memory_space<vmem>>, %arg31: memref<2x1xf32, #tpu.memory_space<vmem>>, %arg32: memref<32x1xf32, #tpu.memory_space<vmem>>, %arg33: memref<16x1xf32, #tpu.memory_space<vmem>>, %arg34: memref<16x1xf32, #tpu.memory_space<vmem>>, %arg35: memref<2x16xf32, #tpu.memory_space<vmem>>, %arg36: memref<32x2xf32, #tpu.memory_space<vmem>>, %arg37: memref<1x32x256xf32, #tpu.memory_space<vmem>>) attributes {dimension_semantics = [#tpu.dimension_semantics<parallel>], iteration_bounds = array<i64: 2>, scalar_prefetch = 0 : i64, scratch_operands = 0 : i64, tpu.core_type = #tpu.core_type<tc>, window_params = [{transform_indices = @transform_0, window_bounds = array<i64: 1, 8, 256>}, {pipeline_mode = #tpu.pipeline_mode<synchronous>, transform_indices = @transform_1, window_bounds = array<i64: 8, 256>}, {pipeline_mode = #tpu.pipeline_mode<synchronous>, transform_indices = @transform_2, window_bounds = array<i64: 16, 1>}, {pipeline_mode = #tpu.pipeline_mode<synchronous>, transform_indices = @transform_3, window_bounds = array<i64: 16, 1>}, {pipeline_mode = #tpu.pipeline_mode<synchronous>, transform_indices = @transform_4, window_bounds = array<i64: 4, 16>}, {pipeline_mode = #tpu.pipeline_mode<synchronous>, transform_indices = @transform_5, window_bounds = array<i64: 4, 1>}, {pipeline_mode = #tpu.pipeline_mode<synchronous>, transform_indices = @transform_6, window_bounds = array<i64: 4, 1>}, {pipeline_mode = #tpu.pipeline_mode<synchronous>, transform_indices = @transform_7, window_bounds = array<i64: 4, 36>}, {pipeline_mode = #tpu.pipeline_mode<synchronous>, transform_indices = @transform_8, window_bounds = array<i64: 4, 1>}, {pipeline_mode = #tpu.pipeline_mode<synchronous>, transform_indices = @transform_9, window_bounds = array<i64: 4, 1>}, {pipeline_mode = #tpu.pipeline_mode<synchronous>, transform_indices = @transform_10, window_bounds = array<i64: 16, 4>}, {pipeline_mode = #tpu.pipeline_mode<synchronous>, transform_indices = @transform_11, window_bounds = array<i64: 16, 1>}, {pipeline_mode = #tpu.pipeline_mode<synchronous>, transform_indices = @transform_12, window_bounds = array<i64: 16, 1>}, {pipeline_mode = #tpu.pipeline_mode<synchronous>, transform_indices = @transform_13, window_bounds = array<i64: 8, 16>}, {pipeline_mode = #tpu.pipeline_mode<synchronous>, transform_indices = @transform_14, window_bounds = array<i64: 8, 1>}, {pipeline_mode = #tpu.pipeline_mode<synchronous>, transform_indices = @transform_15, window_bounds = array<i64: 8, 1>}, {pipeline_mode = #tpu.pipeline_mode<synchronous>, transform_indices = @transform_16, window_bounds = array<i64: 8, 72>}, {pipeline_mode = #tpu.pipeline_mode<synchronous>, transform_indices = @transform_17, window_bounds = array<i64: 8, 1>}, {pipeline_mode = #tpu.pipeline_mode<synchronous>, transform_indices = @transform_18, window_bounds = array<i64: 8, 1>}, {pipeline_mode = #tpu.pipeline_mode<synchronous>, transform_indices = @transform_19, window_bounds = array<i64: 32, 8>}, {pipeline_mode = #tpu.pipeline_mode<synchronous>, transform_indices = @transform_20, window_bounds = array<i64: 16, 1>}, {pipeline_mode = #tpu.pipeline_mode<synchronous>, transform_indices = @transform_21, window_bounds = array<i64: 16, 1>}, {pipeline_mode = #tpu.pipeline_mode<synchronous>, transform_indices = @transform_22, window_bounds = array<i64: 32, 16>}, {pipeline_mode = #tpu.pipeline_mode<synchronous>, transform_indices = @transform_23, window_bounds = array<i64: 8, 1>}, {pipeline_mode = #tpu.pipeline_mode<synchronous>, transform_indices = @transform_24, window_bounds = array<i64: 8, 1>}, {pipeline_mode = #tpu.pipeline_mode<synchronous>, transform_indices = @transform_25, window_bounds = array<i64: 4, 8>}, {pipeline_mode = #tpu.pipeline_mode<synchronous>, transform_indices = @transform_26, window_bounds = array<i64: 16, 1>}, {pipeline_mode = #tpu.pipeline_mode<synchronous>, transform_indices = @transform_27, window_bounds = array<i64: 4, 1>}, {pipeline_mode = #tpu.pipeline_mode<synchronous>, transform_indices = @transform_28, window_bounds = array<i64: 4, 1>}, {pipeline_mode = #tpu.pipeline_mode<synchronous>, transform_indices = @transform_29, window_bounds = array<i64: 16, 4>}, {pipeline_mode = #tpu.pipeline_mode<synchronous>, transform_indices = @transform_30, window_bounds = array<i64: 2, 1>}, {pipeline_mode = #tpu.pipeline_mode<synchronous>, transform_indices = @transform_31, window_bounds = array<i64: 32, 1>}, {pipeline_mode = #tpu.pipeline_mode<synchronous>, transform_indices = @transform_32, window_bounds = array<i64: 16, 1>}, {pipeline_mode = #tpu.pipeline_mode<synchronous>, transform_indices = @transform_33, window_bounds = array<i64: 16, 1>}, {pipeline_mode = #tpu.pipeline_mode<synchronous>, transform_indices = @transform_34, window_bounds = array<i64: 2, 16>}, {pipeline_mode = #tpu.pipeline_mode<synchronous>, transform_indices = @transform_35, window_bounds = array<i64: 32, 2>}, {transform_indices = @transform_36, window_bounds = array<i64: 1, 32, 256>}]} {
    %c0 = arith.constant 0 : index
    %c0_0 = arith.constant 0 : index
    %0 = vector.load %arg2[%c0, %c0_0] : memref<8x256xf32, #tpu.memory_space<vmem>>, vector<8x256xf32>
    %c0_1 = arith.constant 0 : index
    %c0_2 = arith.constant 0 : index
    %c0_3 = arith.constant 0 : index
    %1 = vector.load %arg1[%c0_1, %c0_2, %c0_3] : memref<1x8x256xf32, #tpu.memory_space<vmem>>, vector<1x8x256xf32>
    %2 = vector.shape_cast %1 : vector<1x8x256xf32> to vector<8x256xf32>
    %c0_4 = arith.constant 0 : index
    %c0_5 = arith.constant 0 : index
    %3 = vector.load %arg24[%c0_4, %c0_5] : memref<8x1xf32, #tpu.memory_space<vmem>>, vector<8x1xf32>
    %4 = vector.broadcast %3 : vector<8x1xf32> to vector<8x256xf32>
    %5 = arith.mulf %2, %4 : vector<8x256xf32>
    %c0_6 = arith.constant 0 : index
    %c0_7 = arith.constant 0 : index
    %6 = vector.load %arg25[%c0_6, %c0_7] : memref<8x1xf32, #tpu.memory_space<vmem>>, vector<8x1xf32>
    %7 = vector.broadcast %6 : vector<8x1xf32> to vector<8x256xf32>
    %8 = arith.addf %5, %7 : vector<8x256xf32>
    %cst = arith.constant 0.000000e+00 : f32
    %9 = vector.broadcast %cst : f32 to vector<8x256xf32>
    %10 = arith.maximumf %8, %9 : vector<8x256xf32>
    %c0_8 = arith.constant 0 : index
    %c0_9 = arith.constant 0 : index
    %11 = vector.load %arg26[%c0_8, %c0_9] : memref<4x8xf32, #tpu.memory_space<vmem>>, vector<4x8xf32>
    %cst_10 = arith.constant dense<0.000000e+00> : vector<4x256xf32>
    %12 = tpu.matmul %11, %10, %cst_10 {dimension_numbers = #tpu.dot_dimension_numbers<[1], [0], [0], [1], [0, 0, 1, 1], [], []>} : vector<4x8xf32>, vector<8x256xf32>, vector<4x256xf32> -> vector<4x256xf32>
    %c0_11 = arith.constant 0 : index
    %c0_12 = arith.constant 0 : index
    %13 = vector.load %arg28[%c0_11, %c0_12] : memref<4x1xf32, #tpu.memory_space<vmem>>, vector<4x1xf32>
    %14 = vector.broadcast %13 : vector<4x1xf32> to vector<4x256xf32>
    %15 = arith.mulf %12, %14 : vector<4x256xf32>
    %c0_13 = arith.constant 0 : index
    %c0_14 = arith.constant 0 : index
    %16 = vector.load %arg29[%c0_13, %c0_14] : memref<4x1xf32, #tpu.memory_space<vmem>>, vector<4x1xf32>
    %17 = vector.broadcast %16 : vector<4x1xf32> to vector<4x256xf32>
    %18 = arith.addf %15, %17 : vector<4x256xf32>
    %cst_15 = arith.constant 0.000000e+00 : f32
    %19 = vector.broadcast %cst_15 : f32 to vector<4x256xf32>
    %20 = arith.maximumf %18, %19 : vector<4x256xf32>
    %c0_16 = arith.constant 0 : index
    %c0_17 = arith.constant 0 : index
    %21 = vector.load %arg30[%c0_16, %c0_17] : memref<16x4xf32, #tpu.memory_space<vmem>>, vector<16x4xf32>
    %cst_18 = arith.constant dense<0.000000e+00> : vector<16x256xf32>
    %22 = tpu.matmul %21, %20, %cst_18 {dimension_numbers = #tpu.dot_dimension_numbers<[1], [0], [0], [1], [0, 0, 1, 1], [], []>} : vector<16x4xf32>, vector<4x256xf32>, vector<16x256xf32> -> vector<16x256xf32>
    %c0_19 = arith.constant 0 : index
    %c0_20 = arith.constant 0 : index
    %23 = vector.load %arg27[%c0_19, %c0_20] : memref<16x1xf32, #tpu.memory_space<vmem>>, vector<16x1xf32>
    %24 = vector.broadcast %23 : vector<16x1xf32> to vector<16x256xf32>
    %25 = arith.addf %22, %24 : vector<16x256xf32>
    %c0_21 = arith.constant 0 : index
    %c0_22 = arith.constant 0 : index
    %26 = vector.load %arg33[%c0_21, %c0_22] : memref<16x1xf32, #tpu.memory_space<vmem>>, vector<16x1xf32>
    %27 = vector.broadcast %26 : vector<16x1xf32> to vector<16x256xf32>
    %28 = arith.mulf %25, %27 : vector<16x256xf32>
    %c0_23 = arith.constant 0 : index
    %c0_24 = arith.constant 0 : index
    %29 = vector.load %arg34[%c0_23, %c0_24] : memref<16x1xf32, #tpu.memory_space<vmem>>, vector<16x1xf32>
    %30 = vector.broadcast %29 : vector<16x1xf32> to vector<16x256xf32>
    %31 = arith.addf %28, %30 : vector<16x256xf32>
    %cst_25 = arith.constant 0.000000e+00 : f32
    %32 = vector.broadcast %cst_25 : f32 to vector<16x256xf32>
    %33 = arith.maximumf %31, %32 : vector<16x256xf32>
    %cst_26 = arith.constant dense<0.000000e+00> : vector<16xf32>
    %34 = vector.multi_reduction <add>, %33, %cst_26 [1] : vector<16x256xf32> to vector<16xf32>
    %35 = vector.shape_cast %34 : vector<16xf32> to vector<16x1xf32>
    %cst_27 = arith.constant 2.560000e+02 : f32
    %36 = vector.broadcast %cst_27 : f32 to vector<16x1xf32>
    %37 = arith.divf %35, %36 : vector<16x1xf32>
    %c0_28 = arith.constant 0 : index
    %c0_29 = arith.constant 0 : index
    %38 = vector.load %arg35[%c0_28, %c0_29] : memref<2x16xf32, #tpu.memory_space<vmem>>, vector<2x16xf32>
    %cst_30 = arith.constant dense<0.000000e+00> : vector<2x1xf32>
    %39 = tpu.matmul %38, %37, %cst_30 {dimension_numbers = #tpu.dot_dimension_numbers<[1], [0], [0], [1], [0, 0, 1, 1], [], []>} : vector<2x16xf32>, vector<16x1xf32>, vector<2x1xf32> -> vector<2x1xf32>
    %c0_31 = arith.constant 0 : index
    %c0_32 = arith.constant 0 : index
    %40 = vector.load %arg31[%c0_31, %c0_32] : memref<2x1xf32, #tpu.memory_space<vmem>>, vector<2x1xf32>
    %41 = arith.addf %39, %40 : vector<2x1xf32>
    %cst_33 = arith.constant 0.000000e+00 : f32
    %42 = vector.broadcast %cst_33 : f32 to vector<2x1xf32>
    %43 = arith.maximumf %41, %42 : vector<2x1xf32>
    %c0_34 = arith.constant 0 : index
    %c0_35 = arith.constant 0 : index
    %44 = vector.load %arg36[%c0_34, %c0_35] : memref<32x2xf32, #tpu.memory_space<vmem>>, vector<32x2xf32>
    %cst_36 = arith.constant dense<0.000000e+00> : vector<32x1xf32>
    %45 = tpu.matmul %44, %43, %cst_36 {dimension_numbers = #tpu.dot_dimension_numbers<[1], [0], [0], [1], [0, 0, 1, 1], [], []>} : vector<32x2xf32>, vector<2x1xf32>, vector<32x1xf32> -> vector<32x1xf32>
    %c0_37 = arith.constant 0 : index
    %c0_38 = arith.constant 0 : index
    %46 = vector.load %arg32[%c0_37, %c0_38] : memref<32x1xf32, #tpu.memory_space<vmem>>, vector<32x1xf32>
    %47 = arith.addf %45, %46 : vector<32x1xf32>
    %48 = arith.negf %47 : vector<32x1xf32>
    %49 = math.exp %48 : vector<32x1xf32>
    %cst_39 = arith.constant 1.000000e+00 : f32
    %50 = vector.broadcast %cst_39 : f32 to vector<32x1xf32>
    %51 = arith.addf %50, %49 : vector<32x1xf32>
    %52 = arith.divf %50, %51 : vector<32x1xf32>
    %c0_40 = arith.constant 0 : index
    %c0_41 = arith.constant 0 : index
    %53 = vector.load %arg3[%c0_40, %c0_41] : memref<16x1xf32, #tpu.memory_space<vmem>>, vector<16x1xf32>
    %54 = vector.broadcast %53 : vector<16x1xf32> to vector<16x256xf32>
    %55 = arith.mulf %25, %54 : vector<16x256xf32>
    %c0_42 = arith.constant 0 : index
    %c0_43 = arith.constant 0 : index
    %56 = vector.load %arg4[%c0_42, %c0_43] : memref<16x1xf32, #tpu.memory_space<vmem>>, vector<16x1xf32>
    %57 = vector.broadcast %56 : vector<16x1xf32> to vector<16x256xf32>
    %58 = arith.addf %55, %57 : vector<16x256xf32>
    %cst_44 = arith.constant 0.000000e+00 : f32
    %59 = vector.broadcast %cst_44 : f32 to vector<16x256xf32>
    %60 = arith.maximumf %58, %59 : vector<16x256xf32>
    %c0_45 = arith.constant 0 : index
    %c0_46 = arith.constant 0 : index
    %61 = vector.load %arg5[%c0_45, %c0_46] : memref<4x16xf32, #tpu.memory_space<vmem>>, vector<4x16xf32>
    %cst_47 = arith.constant dense<0.000000e+00> : vector<4x256xf32>
    %62 = tpu.matmul %61, %60, %cst_47 {dimension_numbers = #tpu.dot_dimension_numbers<[1], [0], [0], [1], [0, 0, 1, 1], [], []>} : vector<4x16xf32>, vector<16x256xf32>, vector<4x256xf32> -> vector<4x256xf32>
    %c0_48 = arith.constant 0 : index
    %c0_49 = arith.constant 0 : index
    %63 = vector.load %arg6[%c0_48, %c0_49] : memref<4x1xf32, #tpu.memory_space<vmem>>, vector<4x1xf32>
    %64 = vector.broadcast %63 : vector<4x1xf32> to vector<4x256xf32>
    %65 = arith.mulf %62, %64 : vector<4x256xf32>
    %c0_50 = arith.constant 0 : index
    %c0_51 = arith.constant 0 : index
    %66 = vector.load %arg7[%c0_50, %c0_51] : memref<4x1xf32, #tpu.memory_space<vmem>>, vector<4x1xf32>
    %67 = vector.broadcast %66 : vector<4x1xf32> to vector<4x256xf32>
    %68 = arith.addf %65, %67 : vector<4x256xf32>
    %cst_52 = arith.constant 0.000000e+00 : f32
    %69 = vector.broadcast %cst_52 : f32 to vector<4x256xf32>
    %70 = arith.maximumf %68, %69 : vector<4x256xf32>
    %c17_i32 = arith.constant 17 : i32
    %71 = tpu.dynamic_rotate %70 by %c17_i32 dim 1 : vector<4x256xf32>, i32 -> vector<4x256xf32>
    %72 = vector.extract_strided_slice %0 {offsets = [0, 0], sizes = [1, 256], strides = [1, 1]} : vector<8x256xf32> to vector<1x256xf32>
    %73 = vector.broadcast %72 : vector<1x256xf32> to vector<4x256xf32>
    %74 = arith.mulf %71, %73 : vector<4x256xf32>
    %c16_i32 = arith.constant 16 : i32
    %75 = tpu.dynamic_rotate %70 by %c16_i32 dim 1 : vector<4x256xf32>, i32 -> vector<4x256xf32>
    %76 = vector.extract_strided_slice %0 {offsets = [1, 0], sizes = [1, 256], strides = [1, 1]} : vector<8x256xf32> to vector<1x256xf32>
    %77 = vector.broadcast %76 : vector<1x256xf32> to vector<4x256xf32>
    %78 = arith.mulf %75, %77 : vector<4x256xf32>
    %c15_i32 = arith.constant 15 : i32
    %79 = tpu.dynamic_rotate %70 by %c15_i32 dim 1 : vector<4x256xf32>, i32 -> vector<4x256xf32>
    %80 = vector.extract_strided_slice %0 {offsets = [2, 0], sizes = [1, 256], strides = [1, 1]} : vector<8x256xf32> to vector<1x256xf32>
    %81 = vector.broadcast %80 : vector<1x256xf32> to vector<4x256xf32>
    %82 = arith.mulf %79, %81 : vector<4x256xf32>
    %c1_i32 = arith.constant 1 : i32
    %83 = tpu.dynamic_rotate %70 by %c1_i32 dim 1 : vector<4x256xf32>, i32 -> vector<4x256xf32>
    %84 = vector.extract_strided_slice %0 {offsets = [3, 0], sizes = [1, 256], strides = [1, 1]} : vector<8x256xf32> to vector<1x256xf32>
    %85 = vector.broadcast %84 : vector<1x256xf32> to vector<4x256xf32>
    %86 = arith.mulf %83, %85 : vector<4x256xf32>
    %c255_i32 = arith.constant 255 : i32
    %87 = tpu.dynamic_rotate %70 by %c255_i32 dim 1 : vector<4x256xf32>, i32 -> vector<4x256xf32>
    %88 = vector.extract_strided_slice %0 {offsets = [4, 0], sizes = [1, 256], strides = [1, 1]} : vector<8x256xf32> to vector<1x256xf32>
    %89 = vector.broadcast %88 : vector<1x256xf32> to vector<4x256xf32>
    %90 = arith.mulf %87, %89 : vector<4x256xf32>
    %c241_i32 = arith.constant 241 : i32
    %91 = tpu.dynamic_rotate %70 by %c241_i32 dim 1 : vector<4x256xf32>, i32 -> vector<4x256xf32>
    %92 = vector.extract_strided_slice %0 {offsets = [5, 0], sizes = [1, 256], strides = [1, 1]} : vector<8x256xf32> to vector<1x256xf32>
    %93 = vector.broadcast %92 : vector<1x256xf32> to vector<4x256xf32>
    %94 = arith.mulf %91, %93 : vector<4x256xf32>
    %c240_i32 = arith.constant 240 : i32
    %95 = tpu.dynamic_rotate %70 by %c240_i32 dim 1 : vector<4x256xf32>, i32 -> vector<4x256xf32>
    %96 = vector.extract_strided_slice %0 {offsets = [6, 0], sizes = [1, 256], strides = [1, 1]} : vector<8x256xf32> to vector<1x256xf32>
    %97 = vector.broadcast %96 : vector<1x256xf32> to vector<4x256xf32>
    %98 = arith.mulf %95, %97 : vector<4x256xf32>
    %c239_i32 = arith.constant 239 : i32
    %99 = tpu.dynamic_rotate %70 by %c239_i32 dim 1 : vector<4x256xf32>, i32 -> vector<4x256xf32>
    %100 = vector.extract_strided_slice %0 {offsets = [7, 0], sizes = [1, 256], strides = [1, 1]} : vector<8x256xf32> to vector<1x256xf32>
    %101 = vector.broadcast %100 : vector<1x256xf32> to vector<4x256xf32>
    %102 = arith.mulf %99, %101 : vector<4x256xf32>
    %103 = tpu.concatenate %74, %78, %82, %86, %70, %90, %94, %98, %102 in 0 : vector<4x256xf32>, vector<4x256xf32>, vector<4x256xf32>, vector<4x256xf32>, vector<4x256xf32>, vector<4x256xf32>, vector<4x256xf32>, vector<4x256xf32>, vector<4x256xf32> -> vector<36x256xf32>
    %c0_53 = arith.constant 0 : index
    %c0_54 = arith.constant 0 : index
    %104 = vector.load %arg8[%c0_53, %c0_54] : memref<4x36xf32, #tpu.memory_space<vmem>>, vector<4x36xf32>
    %cst_55 = arith.constant dense<0.000000e+00> : vector<4x256xf32>
    %105 = tpu.matmul %104, %103, %cst_55 {dimension_numbers = #tpu.dot_dimension_numbers<[1], [0], [0], [1], [0, 0, 1, 1], [], []>} : vector<4x36xf32>, vector<36x256xf32>, vector<4x256xf32> -> vector<4x256xf32>
    %c0_56 = arith.constant 0 : index
    %c0_57 = arith.constant 0 : index
    %106 = vector.load %arg9[%c0_56, %c0_57] : memref<4x1xf32, #tpu.memory_space<vmem>>, vector<4x1xf32>
    %107 = vector.broadcast %106 : vector<4x1xf32> to vector<4x256xf32>
    %108 = arith.mulf %105, %107 : vector<4x256xf32>
    %c0_58 = arith.constant 0 : index
    %c0_59 = arith.constant 0 : index
    %109 = vector.load %arg10[%c0_58, %c0_59] : memref<4x1xf32, #tpu.memory_space<vmem>>, vector<4x1xf32>
    %110 = vector.broadcast %109 : vector<4x1xf32> to vector<4x256xf32>
    %111 = arith.addf %108, %110 : vector<4x256xf32>
    %cst_60 = arith.constant 0.000000e+00 : f32
    %112 = vector.broadcast %cst_60 : f32 to vector<4x256xf32>
    %113 = arith.maximumf %111, %112 : vector<4x256xf32>
    %c0_61 = arith.constant 0 : index
    %c0_62 = arith.constant 0 : index
    %114 = vector.load %arg11[%c0_61, %c0_62] : memref<16x4xf32, #tpu.memory_space<vmem>>, vector<16x4xf32>
    %cst_63 = arith.constant dense<0.000000e+00> : vector<16x256xf32>
    %115 = tpu.matmul %114, %113, %cst_63 {dimension_numbers = #tpu.dot_dimension_numbers<[1], [0], [0], [1], [0, 0, 1, 1], [], []>} : vector<16x4xf32>, vector<4x256xf32>, vector<16x256xf32> -> vector<16x256xf32>
    %116 = arith.addf %115, %25 : vector<16x256xf32>
    %c0_64 = arith.constant 0 : index
    %c0_65 = arith.constant 0 : index
    %117 = vector.load %arg21[%c0_64, %c0_65] : memref<16x1xf32, #tpu.memory_space<vmem>>, vector<16x1xf32>
    %118 = vector.broadcast %117 : vector<16x1xf32> to vector<16x256xf32>
    %119 = arith.mulf %116, %118 : vector<16x256xf32>
    %c0_66 = arith.constant 0 : index
    %c0_67 = arith.constant 0 : index
    %120 = vector.load %arg22[%c0_66, %c0_67] : memref<16x1xf32, #tpu.memory_space<vmem>>, vector<16x1xf32>
    %121 = vector.broadcast %120 : vector<16x1xf32> to vector<16x256xf32>
    %122 = arith.addf %119, %121 : vector<16x256xf32>
    %cst_68 = arith.constant 0.000000e+00 : f32
    %123 = vector.broadcast %cst_68 : f32 to vector<16x256xf32>
    %124 = arith.maximumf %122, %123 : vector<16x256xf32>
    %c0_69 = arith.constant 0 : index
    %c0_70 = arith.constant 0 : index
    %125 = vector.load %arg23[%c0_69, %c0_70] : memref<32x16xf32, #tpu.memory_space<vmem>>, vector<32x16xf32>
    %cst_71 = arith.constant dense<0.000000e+00> : vector<32x256xf32>
    %126 = tpu.matmul %125, %124, %cst_71 {dimension_numbers = #tpu.dot_dimension_numbers<[1], [0], [0], [1], [0, 0, 1, 1], [], []>} : vector<32x16xf32>, vector<16x256xf32>, vector<32x256xf32> -> vector<32x256xf32>
    %c0_72 = arith.constant 0 : index
    %c0_73 = arith.constant 0 : index
    %127 = vector.load %arg12[%c0_72, %c0_73] : memref<16x1xf32, #tpu.memory_space<vmem>>, vector<16x1xf32>
    %128 = vector.broadcast %127 : vector<16x1xf32> to vector<16x256xf32>
    %129 = arith.mulf %116, %128 : vector<16x256xf32>
    %c0_74 = arith.constant 0 : index
    %c0_75 = arith.constant 0 : index
    %130 = vector.load %arg13[%c0_74, %c0_75] : memref<16x1xf32, #tpu.memory_space<vmem>>, vector<16x1xf32>
    %131 = vector.broadcast %130 : vector<16x1xf32> to vector<16x256xf32>
    %132 = arith.addf %129, %131 : vector<16x256xf32>
    %cst_76 = arith.constant 0.000000e+00 : f32
    %133 = vector.broadcast %cst_76 : f32 to vector<16x256xf32>
    %134 = arith.maximumf %132, %133 : vector<16x256xf32>
    %c0_77 = arith.constant 0 : index
    %c0_78 = arith.constant 0 : index
    %135 = vector.load %arg14[%c0_77, %c0_78] : memref<8x16xf32, #tpu.memory_space<vmem>>, vector<8x16xf32>
    %cst_79 = arith.constant dense<0.000000e+00> : vector<8x256xf32>
    %136 = tpu.matmul %135, %134, %cst_79 {dimension_numbers = #tpu.dot_dimension_numbers<[1], [0], [0], [1], [0, 0, 1, 1], [], []>} : vector<8x16xf32>, vector<16x256xf32>, vector<8x256xf32> -> vector<8x256xf32>
    %c0_80 = arith.constant 0 : index
    %c0_81 = arith.constant 0 : index
    %137 = vector.load %arg15[%c0_80, %c0_81] : memref<8x1xf32, #tpu.memory_space<vmem>>, vector<8x1xf32>
    %138 = vector.broadcast %137 : vector<8x1xf32> to vector<8x256xf32>
    %139 = arith.mulf %136, %138 : vector<8x256xf32>
    %c0_82 = arith.constant 0 : index
    %c0_83 = arith.constant 0 : index
    %140 = vector.load %arg16[%c0_82, %c0_83] : memref<8x1xf32, #tpu.memory_space<vmem>>, vector<8x1xf32>
    %141 = vector.broadcast %140 : vector<8x1xf32> to vector<8x256xf32>
    %142 = arith.addf %139, %141 : vector<8x256xf32>
    %cst_84 = arith.constant 0.000000e+00 : f32
    %143 = vector.broadcast %cst_84 : f32 to vector<8x256xf32>
    %144 = arith.maximumf %142, %143 : vector<8x256xf32>
    %c17_i32_85 = arith.constant 17 : i32
    %145 = tpu.dynamic_rotate %144 by %c17_i32_85 dim 1 : vector<8x256xf32>, i32 -> vector<8x256xf32>
    %146 = vector.extract_strided_slice %0 {offsets = [0, 0], sizes = [1, 256], strides = [1, 1]} : vector<8x256xf32> to vector<1x256xf32>
    %147 = vector.broadcast %146 : vector<1x256xf32> to vector<8x256xf32>
    %148 = arith.mulf %145, %147 : vector<8x256xf32>
    %c16_i32_86 = arith.constant 16 : i32
    %149 = tpu.dynamic_rotate %144 by %c16_i32_86 dim 1 : vector<8x256xf32>, i32 -> vector<8x256xf32>
    %150 = vector.extract_strided_slice %0 {offsets = [1, 0], sizes = [1, 256], strides = [1, 1]} : vector<8x256xf32> to vector<1x256xf32>
    %151 = vector.broadcast %150 : vector<1x256xf32> to vector<8x256xf32>
    %152 = arith.mulf %149, %151 : vector<8x256xf32>
    %c15_i32_87 = arith.constant 15 : i32
    %153 = tpu.dynamic_rotate %144 by %c15_i32_87 dim 1 : vector<8x256xf32>, i32 -> vector<8x256xf32>
    %154 = vector.extract_strided_slice %0 {offsets = [2, 0], sizes = [1, 256], strides = [1, 1]} : vector<8x256xf32> to vector<1x256xf32>
    %155 = vector.broadcast %154 : vector<1x256xf32> to vector<8x256xf32>
    %156 = arith.mulf %153, %155 : vector<8x256xf32>
    %c1_i32_88 = arith.constant 1 : i32
    %157 = tpu.dynamic_rotate %144 by %c1_i32_88 dim 1 : vector<8x256xf32>, i32 -> vector<8x256xf32>
    %158 = vector.extract_strided_slice %0 {offsets = [3, 0], sizes = [1, 256], strides = [1, 1]} : vector<8x256xf32> to vector<1x256xf32>
    %159 = vector.broadcast %158 : vector<1x256xf32> to vector<8x256xf32>
    %160 = arith.mulf %157, %159 : vector<8x256xf32>
    %c255_i32_89 = arith.constant 255 : i32
    %161 = tpu.dynamic_rotate %144 by %c255_i32_89 dim 1 : vector<8x256xf32>, i32 -> vector<8x256xf32>
    %162 = vector.extract_strided_slice %0 {offsets = [4, 0], sizes = [1, 256], strides = [1, 1]} : vector<8x256xf32> to vector<1x256xf32>
    %163 = vector.broadcast %162 : vector<1x256xf32> to vector<8x256xf32>
    %164 = arith.mulf %161, %163 : vector<8x256xf32>
    %c241_i32_90 = arith.constant 241 : i32
    %165 = tpu.dynamic_rotate %144 by %c241_i32_90 dim 1 : vector<8x256xf32>, i32 -> vector<8x256xf32>
    %166 = vector.extract_strided_slice %0 {offsets = [5, 0], sizes = [1, 256], strides = [1, 1]} : vector<8x256xf32> to vector<1x256xf32>
    %167 = vector.broadcast %166 : vector<1x256xf32> to vector<8x256xf32>
    %168 = arith.mulf %165, %167 : vector<8x256xf32>
    %c240_i32_91 = arith.constant 240 : i32
    %169 = tpu.dynamic_rotate %144 by %c240_i32_91 dim 1 : vector<8x256xf32>, i32 -> vector<8x256xf32>
    %170 = vector.extract_strided_slice %0 {offsets = [6, 0], sizes = [1, 256], strides = [1, 1]} : vector<8x256xf32> to vector<1x256xf32>
    %171 = vector.broadcast %170 : vector<1x256xf32> to vector<8x256xf32>
    %172 = arith.mulf %169, %171 : vector<8x256xf32>
    %c239_i32_92 = arith.constant 239 : i32
    %173 = tpu.dynamic_rotate %144 by %c239_i32_92 dim 1 : vector<8x256xf32>, i32 -> vector<8x256xf32>
    %174 = vector.extract_strided_slice %0 {offsets = [7, 0], sizes = [1, 256], strides = [1, 1]} : vector<8x256xf32> to vector<1x256xf32>
    %175 = vector.broadcast %174 : vector<1x256xf32> to vector<8x256xf32>
    %176 = arith.mulf %173, %175 : vector<8x256xf32>
    %177 = tpu.concatenate %148, %152, %156, %160, %144, %164, %168, %172, %176 in 0 : vector<8x256xf32>, vector<8x256xf32>, vector<8x256xf32>, vector<8x256xf32>, vector<8x256xf32>, vector<8x256xf32>, vector<8x256xf32>, vector<8x256xf32>, vector<8x256xf32> -> vector<72x256xf32>
    %c0_93 = arith.constant 0 : index
    %c0_94 = arith.constant 0 : index
    %178 = vector.load %arg17[%c0_93, %c0_94] : memref<8x72xf32, #tpu.memory_space<vmem>>, vector<8x72xf32>
    %cst_95 = arith.constant dense<0.000000e+00> : vector<8x256xf32>
    %179 = tpu.matmul %178, %177, %cst_95 {dimension_numbers = #tpu.dot_dimension_numbers<[1], [0], [0], [1], [0, 0, 1, 1], [], []>} : vector<8x72xf32>, vector<72x256xf32>, vector<8x256xf32> -> vector<8x256xf32>
    %c0_96 = arith.constant 0 : index
    %c0_97 = arith.constant 0 : index
    %180 = vector.load %arg18[%c0_96, %c0_97] : memref<8x1xf32, #tpu.memory_space<vmem>>, vector<8x1xf32>
    %181 = vector.broadcast %180 : vector<8x1xf32> to vector<8x256xf32>
    %182 = arith.mulf %179, %181 : vector<8x256xf32>
    %c0_98 = arith.constant 0 : index
    %c0_99 = arith.constant 0 : index
    %183 = vector.load %arg19[%c0_98, %c0_99] : memref<8x1xf32, #tpu.memory_space<vmem>>, vector<8x1xf32>
    %184 = vector.broadcast %183 : vector<8x1xf32> to vector<8x256xf32>
    %185 = arith.addf %182, %184 : vector<8x256xf32>
    %cst_100 = arith.constant 0.000000e+00 : f32
    %186 = vector.broadcast %cst_100 : f32 to vector<8x256xf32>
    %187 = arith.maximumf %185, %186 : vector<8x256xf32>
    %c0_101 = arith.constant 0 : index
    %c0_102 = arith.constant 0 : index
    %188 = vector.load %arg20[%c0_101, %c0_102] : memref<32x8xf32, #tpu.memory_space<vmem>>, vector<32x8xf32>
    %cst_103 = arith.constant dense<0.000000e+00> : vector<32x256xf32>
    %189 = tpu.matmul %188, %187, %cst_103 {dimension_numbers = #tpu.dot_dimension_numbers<[1], [0], [0], [1], [0, 0, 1, 1], [], []>} : vector<32x8xf32>, vector<8x256xf32>, vector<32x256xf32> -> vector<32x256xf32>
    %190 = arith.addf %189, %126 : vector<32x256xf32>
    %191 = vector.broadcast %52 : vector<32x1xf32> to vector<32x256xf32>
    %192 = arith.mulf %190, %191 : vector<32x256xf32>
    %193 = vector.broadcast %52 : vector<32x1xf32> to vector<32x256xf32>
    %194 = arith.addf %192, %193 : vector<32x256xf32>
    %c0_104 = arith.constant 0 : index
    %c0_105 = arith.constant 0 : index
    %c0_106 = arith.constant 0 : index
    %195 = vector.load %arg37[%c0_104, %c0_105, %c0_106] : memref<1x32x256xf32, #tpu.memory_space<vmem>>, vector<1x32x256xf32>
    %196 = vector.shape_cast %195 : vector<1x32x256xf32> to vector<32x256xf32>
    %197 = vector.shape_cast %194 : vector<32x256xf32> to vector<1x32x256xf32>
    tpu.vector_store %arg37[%c0_104, %c0_105, %c0_106], %197 {strides = array<i32>} : memref<1x32x256xf32, #tpu.memory_space<vmem>>, vector<1x32x256xf32>,
    return
  }
  func.func @transform_0(%arg0: i32) -> (i32, i32, i32) {
    %c0_i32 = arith.constant 0 : i32
    %c0_i32_0 = arith.constant 0 : i32
    %c0_i32_1 = arith.constant 0 : i32
    return %arg0, %c0_i32, %c0_i32_0 : i32, i32, i32
  }
  func.func @transform_1(%arg0: i32) -> (i32, i32) {
    %c0_i32 = arith.constant 0 : i32
    %c0_i32_0 = arith.constant 0 : i32
    %c0_i32_1 = arith.constant 0 : i32
    return %c0_i32, %c0_i32_0 : i32, i32
  }
  func.func @transform_2(%arg0: i32) -> (i32, i32) {
    %c0_i32 = arith.constant 0 : i32
    %c0_i32_0 = arith.constant 0 : i32
    %c0_i32_1 = arith.constant 0 : i32
    return %c0_i32, %c0_i32_0 : i32, i32
  }
  func.func @transform_3(%arg0: i32) -> (i32, i32) {
    %c0_i32 = arith.constant 0 : i32
    %c0_i32_0 = arith.constant 0 : i32
    %c0_i32_1 = arith.constant 0 : i32
    return %c0_i32, %c0_i32_0 : i32, i32
  }
  func.func @transform_4(%arg0: i32) -> (i32, i32) {
    %c0_i32 = arith.constant 0 : i32
    %c0_i32_0 = arith.constant 0 : i32
    %c0_i32_1 = arith.constant 0 : i32
    return %c0_i32, %c0_i32_0 : i32, i32
  }
  func.func @transform_5(%arg0: i32) -> (i32, i32) {
    %c0_i32 = arith.constant 0 : i32
    %c0_i32_0 = arith.constant 0 : i32
    %c0_i32_1 = arith.constant 0 : i32
    return %c0_i32, %c0_i32_0 : i32, i32
  }
  func.func @transform_6(%arg0: i32) -> (i32, i32) {
    %c0_i32 = arith.constant 0 : i32
    %c0_i32_0 = arith.constant 0 : i32
    %c0_i32_1 = arith.constant 0 : i32
    return %c0_i32, %c0_i32_0 : i32, i32
  }
  func.func @transform_7(%arg0: i32) -> (i32, i32) {
    %c0_i32 = arith.constant 0 : i32
    %c0_i32_0 = arith.constant 0 : i32
    %c0_i32_1 = arith.constant 0 : i32
    return %c0_i32, %c0_i32_0 : i32, i32
  }
  func.func @transform_8(%arg0: i32) -> (i32, i32) {
    %c0_i32 = arith.constant 0 : i32
    %c0_i32_0 = arith.constant 0 : i32
    %c0_i32_1 = arith.constant 0 : i32
    return %c0_i32, %c0_i32_0 : i32, i32
  }
  func.func @transform_9(%arg0: i32) -> (i32, i32) {
    %c0_i32 = arith.constant 0 : i32
    %c0_i32_0 = arith.constant 0 : i32
    %c0_i32_1 = arith.constant 0 : i32
    return %c0_i32, %c0_i32_0 : i32, i32
  }
  func.func @transform_10(%arg0: i32) -> (i32, i32) {
    %c0_i32 = arith.constant 0 : i32
    %c0_i32_0 = arith.constant 0 : i32
    %c0_i32_1 = arith.constant 0 : i32
    return %c0_i32, %c0_i32_0 : i32, i32
  }
  func.func @transform_11(%arg0: i32) -> (i32, i32) {
    %c0_i32 = arith.constant 0 : i32
    %c0_i32_0 = arith.constant 0 : i32
    %c0_i32_1 = arith.constant 0 : i32
    return %c0_i32, %c0_i32_0 : i32, i32
  }
  func.func @transform_12(%arg0: i32) -> (i32, i32) {
    %c0_i32 = arith.constant 0 : i32
    %c0_i32_0 = arith.constant 0 : i32
    %c0_i32_1 = arith.constant 0 : i32
    return %c0_i32, %c0_i32_0 : i32, i32
  }
  func.func @transform_13(%arg0: i32) -> (i32, i32) {
    %c0_i32 = arith.constant 0 : i32
    %c0_i32_0 = arith.constant 0 : i32
    %c0_i32_1 = arith.constant 0 : i32
    return %c0_i32, %c0_i32_0 : i32, i32
  }
  func.func @transform_14(%arg0: i32) -> (i32, i32) {
    %c0_i32 = arith.constant 0 : i32
    %c0_i32_0 = arith.constant 0 : i32
    %c0_i32_1 = arith.constant 0 : i32
    return %c0_i32, %c0_i32_0 : i32, i32
  }
  func.func @transform_15(%arg0: i32) -> (i32, i32) {
    %c0_i32 = arith.constant 0 : i32
    %c0_i32_0 = arith.constant 0 : i32
    %c0_i32_1 = arith.constant 0 : i32
    return %c0_i32, %c0_i32_0 : i32, i32
  }
  func.func @transform_16(%arg0: i32) -> (i32, i32) {
    %c0_i32 = arith.constant 0 : i32
    %c0_i32_0 = arith.constant 0 : i32
    %c0_i32_1 = arith.constant 0 : i32
    return %c0_i32, %c0_i32_0 : i32, i32
  }
  func.func @transform_17(%arg0: i32) -> (i32, i32) {
    %c0_i32 = arith.constant 0 : i32
    %c0_i32_0 = arith.constant 0 : i32
    %c0_i32_1 = arith.constant 0 : i32
    return %c0_i32, %c0_i32_0 : i32, i32
  }
  func.func @transform_18(%arg0: i32) -> (i32, i32) {
    %c0_i32 = arith.constant 0 : i32
    %c0_i32_0 = arith.constant 0 : i32
    %c0_i32_1 = arith.constant 0 : i32
    return %c0_i32, %c0_i32_0 : i32, i32
  }
  func.func @transform_19(%arg0: i32) -> (i32, i32) {
    %c0_i32 = arith.constant 0 : i32
    %c0_i32_0 = arith.constant 0 : i32
    %c0_i32_1 = arith.constant 0 : i32
    return %c0_i32, %c0_i32_0 : i32, i32
  }
  func.func @transform_20(%arg0: i32) -> (i32, i32) {
    %c0_i32 = arith.constant 0 : i32
    %c0_i32_0 = arith.constant 0 : i32
    %c0_i32_1 = arith.constant 0 : i32
    return %c0_i32, %c0_i32_0 : i32, i32
  }
  func.func @transform_21(%arg0: i32) -> (i32, i32) {
    %c0_i32 = arith.constant 0 : i32
    %c0_i32_0 = arith.constant 0 : i32
    %c0_i32_1 = arith.constant 0 : i32
    return %c0_i32, %c0_i32_0 : i32, i32
  }
  func.func @transform_22(%arg0: i32) -> (i32, i32) {
    %c0_i32 = arith.constant 0 : i32
    %c0_i32_0 = arith.constant 0 : i32
    %c0_i32_1 = arith.constant 0 : i32
    return %c0_i32, %c0_i32_0 : i32, i32
  }
  func.func @transform_23(%arg0: i32) -> (i32, i32) {
    %c0_i32 = arith.constant 0 : i32
    %c0_i32_0 = arith.constant 0 : i32
    %c0_i32_1 = arith.constant 0 : i32
    return %c0_i32, %c0_i32_0 : i32, i32
  }
  func.func @transform_24(%arg0: i32) -> (i32, i32) {
    %c0_i32 = arith.constant 0 : i32
    %c0_i32_0 = arith.constant 0 : i32
    %c0_i32_1 = arith.constant 0 : i32
    return %c0_i32, %c0_i32_0 : i32, i32
  }
  func.func @transform_25(%arg0: i32) -> (i32, i32) {
    %c0_i32 = arith.constant 0 : i32
    %c0_i32_0 = arith.constant 0 : i32
    %c0_i32_1 = arith.constant 0 : i32
    return %c0_i32, %c0_i32_0 : i32, i32
  }
  func.func @transform_26(%arg0: i32) -> (i32, i32) {
    %c0_i32 = arith.constant 0 : i32
    %c0_i32_0 = arith.constant 0 : i32
    %c0_i32_1 = arith.constant 0 : i32
    return %c0_i32, %c0_i32_0 : i32, i32
  }
  func.func @transform_27(%arg0: i32) -> (i32, i32) {
    %c0_i32 = arith.constant 0 : i32
    %c0_i32_0 = arith.constant 0 : i32
    %c0_i32_1 = arith.constant 0 : i32
    return %c0_i32, %c0_i32_0 : i32, i32
  }
  func.func @transform_28(%arg0: i32) -> (i32, i32) {
    %c0_i32 = arith.constant 0 : i32
    %c0_i32_0 = arith.constant 0 : i32
    %c0_i32_1 = arith.constant 0 : i32
    return %c0_i32, %c0_i32_0 : i32, i32
  }
  func.func @transform_29(%arg0: i32) -> (i32, i32) {
    %c0_i32 = arith.constant 0 : i32
    %c0_i32_0 = arith.constant 0 : i32
    %c0_i32_1 = arith.constant 0 : i32
    return %c0_i32, %c0_i32_0 : i32, i32
  }
  func.func @transform_30(%arg0: i32) -> (i32, i32) {
    %c0_i32 = arith.constant 0 : i32
    %c0_i32_0 = arith.constant 0 : i32
    %c0_i32_1 = arith.constant 0 : i32
    return %c0_i32, %c0_i32_0 : i32, i32
  }
  func.func @transform_31(%arg0: i32) -> (i32, i32) {
    %c0_i32 = arith.constant 0 : i32
    %c0_i32_0 = arith.constant 0 : i32
    %c0_i32_1 = arith.constant 0 : i32
    return %c0_i32, %c0_i32_0 : i32, i32
  }
  func.func @transform_32(%arg0: i32) -> (i32, i32) {
    %c0_i32 = arith.constant 0 : i32
    %c0_i32_0 = arith.constant 0 : i32
    %c0_i32_1 = arith.constant 0 : i32
    return %c0_i32, %c0_i32_0 : i32, i32
  }
  func.func @transform_33(%arg0: i32) -> (i32, i32) {
    %c0_i32 = arith.constant 0 : i32
    %c0_i32_0 = arith.constant 0 : i32
    %c0_i32_1 = arith.constant 0 : i32
    return %c0_i32, %c0_i32_0 : i32, i32
  }
  func.func @transform_34(%arg0: i32) -> (i32, i32) {
    %c0_i32 = arith.constant 0 : i32
    %c0_i32_0 = arith.constant 0 : i32
    %c0_i32_1 = arith.constant 0 : i32
    return %c0_i32, %c0_i32_0 : i32, i32
  }
  func.func @transform_35(%arg0: i32) -> (i32, i32) {
    %c0_i32 = arith.constant 0 : i32
    %c0_i32_0 = arith.constant 0 : i32
    %c0_i32_1 = arith.constant 0 : i32
    return %c0_i32, %c0_i32_0 : i32, i32
  }
  func.func @transform_36(%arg0: i32) -> (i32, i32, i32) {
    %c0_i32 = arith.constant 0 : i32
    %c0_i32_0 = arith.constant 0 : i32
    %c0_i32_1 = arith.constant 0 : i32
    return %arg0, %c0_i32, %c0_i32_0 : i32, i32, i32
  }
}

</mosaic_0001>

<llo_original>
// kernel: skip_att_unit_forward.1
$region0: #{skip_att_unit_forward.1}
  #allocation0 [shape = 'u32[]', space=smem, size = 0x4, offset = 0x4, fixed_abs, tag = 'smem constant byte address 0x4 - core index']
  #allocation1 [shape = 'u32[144,128]{1,0:T(1,128)}', space=vmem, size = 0x12000, scoped, tag = 'internal scratch']
  %s0 = inlined_call_operand.smem [shape: u32[37], index: -1, kind: input, shape index: {}]
  %s1 = sld [smem:[%s0]]
  %s2 = scalar_lea.smem %s0, 1
  %s3 = sld [smem:[%s2]]
  %s4 = scalar_lea.smem %s0, 2
  %s5 = sld [smem:[%s4]]
  %s6 = scalar_lea.smem %s0, 3
  %s7 = sld [smem:[%s6]]
  %s8 = scalar_lea.smem %s0, 4
  %s9 = sld [smem:[%s8]]
  %s10 = scalar_lea.smem %s0, 5
  %s11 = sld [smem:[%s10]]
  %s12 = scalar_lea.smem %s0, 6
  %s13 = sld [smem:[%s12]]
  %s14 = scalar_lea.smem %s0, 7
  %s15 = sld [smem:[%s14]]
  %s16 = scalar_lea.smem %s0, 8
  %s17 = sld [smem:[%s16]]
  %s18 = scalar_lea.smem %s0, 9
  %s19 = sld [smem:[%s18]]
  %s20 = scalar_lea.smem %s0, 10
  %s21 = sld [smem:[%s20]]
  %s22 = scalar_lea.smem %s0, 11
  %s23 = sld [smem:[%s22]]
  %s24 = scalar_lea.smem %s0, 12
  %s25 = sld [smem:[%s24]]
  %s26 = scalar_lea.smem %s0, 13
  %s27 = sld [smem:[%s26]]
  %s28 = scalar_lea.smem %s0, 14
  %s29 = sld [smem:[%s28]]
  %s30 = scalar_lea.smem %s0, 15
  %s31 = sld [smem:[%s30]]
  %s32 = scalar_lea.smem %s0, 16
  %s33 = sld [smem:[%s32]]
  %s34 = scalar_lea.smem %s0, 17
  %s35 = sld [smem:[%s34]]
  %s36 = scalar_lea.smem %s0, 18
  %s37 = sld [smem:[%s36]]
  %s38 = scalar_lea.smem %s0, 19
  %s39 = sld [smem:[%s38]]
  %s40 = scalar_lea.smem %s0, 20
  %s41 = sld [smem:[%s40]]
  %s42 = scalar_lea.smem %s0, 21
  %s43 = sld [smem:[%s42]]
  %s44 = scalar_lea.smem %s0, 22
  %s45 = sld [smem:[%s44]]
  %s46 = scalar_lea.smem %s0, 23
  %s47 = sld [smem:[%s46]]
  %s48 = scalar_lea.smem %s0, 24
  %s49 = sld [smem:[%s48]]
  %s50 = scalar_lea.smem %s0, 25
  %s51 = sld [smem:[%s50]]
  %s52 = scalar_lea.smem %s0, 26
  %s53 = sld [smem:[%s52]]
  %s54 = scalar_lea.smem %s0, 27
  %s55 = sld [smem:[%s54]]
  %s56 = scalar_lea.smem %s0, 28
  %s57 = sld [smem:[%s56]]
  %s58 = scalar_lea.smem %s0, 29
  %s59 = sld [smem:[%s58]]
  %s60 = scalar_lea.smem %s0, 30
  %s61 = sld [smem:[%s60]]
  %s62 = scalar_lea.smem %s0, 31
  %s63 = sld [smem:[%s62]]
  %s64 = scalar_lea.smem %s0, 32
  %s65 = sld [smem:[%s64]]
  %s66 = scalar_lea.smem %s0, 33
  %s67 = sld [smem:[%s66]]
  %s68 = scalar_lea.smem %s0, 34
  %s69 = sld [smem:[%s68]]
  %s70 = scalar_lea.smem %s0, 35
  %s71 = sld [smem:[%s70]]
  %s72 = scalar_lea.smem %s0, 36
  %s73 = sld [smem:[%s72]]
  %s74 = sld [smem:[#allocation0]]
  $region205: #{skip_att_unit_forward.1} parent=0
    _
  %s76 = ssub.s32 1, %s74
  %s77 = scalar_select 0, %s76, %s74
  $region1: #{skip_att_unit_forward.1} parent=0
    #allocation2 [shape = 'u8[2048]{0}', space=vmem, size = 0x800, scoped, tag = 'input window, operand 4, single buffered']
    #allocation3 [shape = 's32[2]{0}', space=sflag, size = 0x8, scoped, tag = 'scoped memory for skip_att_unit_forward.1']
    #allocation4 [shape = 'u8[2048]{0}', space=vmem, size = 0x800, scoped, tag = 'input window, operand 5, single buffered']
    #allocation5 [shape = 's32[1]{0}', space=sflag, size = 0x4, scoped, tag = 'scoped memory for skip_att_unit_forward.1']
    #allocation6 [shape = 'u8[2048]{0}', space=vmem, size = 0x800, scoped, tag = 'input window, operand 6, single buffered']
    #allocation7 [shape = 'u8[2048]{0}', space=vmem, size = 0x800, scoped, tag = 'input window, operand 7, single buffered']
    #allocation8 [shape = 's32[1]{0}', space=sflag, size = 0x4, scoped, tag = 'scoped memory for skip_att_unit_forward.1']
    #allocation9 [shape = 'u8[2048]{0}', space=vmem, size = 0x800, scoped, tag = 'input window, operand 8, single buffered']
    #allocation10 [shape = 'u8[2048]{0}', space=vmem, size = 0x800, scoped, tag = 'input window, operand 9, single buffered']
    #allocation11 [shape = 's32[1]{0}', space=sflag, size = 0x4, scoped, tag = 'scoped memory for skip_att_unit_forward.1']
    #allocation12 [shape = 'u8[4096]{0}', space=vmem, size = 0x1000, scoped, tag = 'input window, operand 16, single buffered']
    %78 = vsyncpa [#allocation3], 0
    %79 = vsyncpa [#allocation5], 0
    %80 = vsyncpa [#allocation8], 0
    %81 = vsyncpa [#allocation11], 0
    loop: start=0, step=1, limit=4
    $region2: #{skip_att_unit_forward.1} parent=1 // loop_pre_header
      _
    $region3: #{skip_att_unit_forward.1} parent=1 // loop_header
      %s83 = sphi 0, %s87
      %p84 = scmp.ge.s32.totalorder %s83, 4
      %s93 = sphi 0, %s95
      %s96 = sphi 0, %s93
      %s97 = sphi 0, %s96
      %s113 = sphi 0, %s97
      %s117 = sphi 0, %s117
      %s119 = sphi 0, %s117
      %s120 = sphi 0, %s119
      %s134 = sphi 0, %s120
      %s138 = sphi 0, %s138
      %s140 = sphi 0, %s138
      %s141 = sphi 0, %s140
      %s155 = sphi 0, %s141
      %s159 = sphi 0, %s159
      %s161 = sphi 0, %s159
      %s162 = sphi 0, %s161
      %s176 = sphi 0, %s162
      %s180 = sphi 0, %s180
      %s182 = sphi 0, %s180
      %s183 = sphi 0, %s182
      %s197 = sphi 0, %s183
      %s201 = sphi 0, %s201
      %s203 = sphi 0, %s201
      %s204 = sphi 0, %s203
      %s218 = sphi 0, %s204
      %s222 = sphi 0, %s222
      %s224 = sphi 0, %s222
      %s225 = sphi 0, %s224
      %s239 = sphi 0, %s225
      %s243 = sphi 0, %s243
      %s245 = sphi 0, %s243
      %s246 = sphi 0, %s245
      %s260 = sphi 0, %s246
      %s264 = sphi 0, %s264
      %s266 = sphi 0, %s264
      %s267 = sphi 0, %s266
      %s281 = sphi 0, %s267
      %s285 = sphi 0, %s285
      %s287 = sphi 0, %s285
      %s288 = sphi 0, %s287
      %s302 = sphi 0, %s288
      %s306 = sphi 0, %s306
      %s308 = sphi 0, %s306
      %s309 = sphi 0, %s308
      %s323 = sphi 0, %s309
      %s327 = sphi 0, %s327
      %s329 = sphi 0, %s327
      %s330 = sphi 0, %s329
      %s344 = sphi 0, %s330
      %s348 = sphi 0, %s348
      %s350 = sphi 0, %s348
      %s351 = sphi 0, %s350
      %s365 = sphi 0, %s351
      %s369 = sphi 0, %s369
      %s371 = sphi 0, %s369
      %s372 = sphi 0, %s371
      %s386 = sphi 0, %s372
      %s390 = sphi 0, %s390
      %s392 = sphi 0, %s390
      %s393 = sphi 0, %s392
      %s407 = sphi 0, %s393
      %s411 = sphi 0, %s411
      %s413 = sphi 0, %s411
      %s414 = sphi 0, %s413
      %s428 = sphi 0, %s414
      %s432 = sphi 0, %s432
      %s434 = sphi 0, %s432
      %s435 = sphi 0, %s434
      %s449 = sphi 0, %s435
      %s453 = sphi 0, %s453
      %s455 = sphi 0, %s453
      %s456 = sphi 0, %s455
      %s470 = sphi 0, %s456
      %s474 = sphi 0, %s474
      %s476 = sphi 0, %s474
      %s477 = sphi 0, %s476
      %s491 = sphi 0, %s477
      %s495 = sphi 0, %s495
      %s497 = sphi 0, %s495
      %s498 = sphi 0, %s497
      %s512 = sphi 0, %s498
      %s516 = sphi 0, %s516
      %s518 = sphi 0, %s516
      %s519 = sphi 0, %s518
      %s533 = sphi 0, %s519
      %s537 = sphi 0, %s537
      %s539 = sphi 0, %s537
      %s540 = sphi 0, %s539
      %s554 = sphi 0, %s540
      %s558 = sphi 0, %s558
      %s560 = sphi 0, %s558
      %s561 = sphi 0, %s560
      %s575 = sphi 0, %s561
      %s579 = sphi 0, %s579
      %s581 = sphi 0, %s579
      %s582 = sphi 0, %s581
      %s596 = sphi 0, %s582
      %s600 = sphi 0, %s600
      %s602 = sphi 0, %s600
      %s603 = sphi 0, %s602
      %s617 = sphi 0, %s603
      %s621 = sphi 0, %s621
      %s623 = sphi 0, %s621
      %s624 = sphi 0, %s623
      %s638 = sphi 0, %s624
      %s642 = sphi 0, %s642
      %s644 = sphi 0, %s642
      %s645 = sphi 0, %s644
      %s659 = sphi 0, %s645
      %s663 = sphi 0, %s663
      %s665 = sphi 0, %s663
      %s666 = sphi 0, %s665
      %s680 = sphi 0, %s666
      %s684 = sphi 0, %s684
      %s686 = sphi 0, %s684
      %s687 = sphi 0, %s686
      %s701 = sphi 0, %s687
      %s705 = sphi 0, %s705
      %s707 = sphi 0, %s705
      %s708 = sphi 0, %s707
      %s722 = sphi 0, %s708
      %s726 = sphi 0, %s726
      %s728 = sphi 0, %s726
      %s729 = sphi 0, %s728
      %s743 = sphi 0, %s729
      %s747 = sphi 0, %s747
      %s749 = sphi 0, %s747
      %s750 = sphi 0, %s749
      %s764 = sphi 0, %s750
      %s768 = sphi 0, %s768
      %s770 = sphi 0, %s768
      %s771 = sphi 0, %s770
      %s785 = sphi 0, %s771
      %s789 = sphi 0, %s789
      %s791 = sphi 0, %s789
      %s792 = sphi 0, %s791
      %s806 = sphi 0, %s792
      %s810 = sphi 0, %s810
      %s812 = sphi 0, %s810
      %s813 = sphi 0, %s812
      %s827 = sphi 0, %s813
      %s831 = sphi 0, %s831
      %s833 = sphi 0, %s831
      %s834 = sphi 0, %s833
      %s848 = sphi 0, %s834
      %s854 = sphi 0, %s856
      %s857 = sphi 0, %s854
      %s858 = sphi 0, %s857
      %s874 = sphi 0, %s858
    $region4: #{skip_att_unit_forward.1} parent=1 // loop_header_branch
      %86 = sbr.rel (%p84) target = $region8
    $region5: #{skip_att_unit_forward.1} parent=1 // loop_body
      %s88 = ssub.s32 %s83, 1
      %s89 = ssub.s32 %s83, 2
      %s90 = sadd.s32 %s83, 1
      %s91 = ssub.s32 %s83, %s90
      %p92 = scmp.eq.s32.totalorder %s91, 0
      %s94 = sadd.s32 %s93, 1
      %s95 = scalar_select %p92, %s93, %s94
      %p98 = pneg %p92
      %p99 = scmp.eq.s32.totalorder %s83, 1
      %p100 = por %p98, %p99
      %p101 = scmp.ne.s32.totalorder %s93, %s96
      %p102 = scmp.eq.s32.totalorder %s83, 0
      %p103 = por %p101, %p102
      %p104 = scmp.ne.s32.totalorder %s93, %s96
      %p105 = scmp.eq.s32.totalorder %s88, 1
      %p106 = por %p104, %p105
      %p107 = scmp.ne.s32.totalorder %s96, %s97
      %p108 = scmp.eq.s32.totalorder %s88, 0
      %p109 = por %p107, %p108
      %p110 = scmp.ne.s32.totalorder %s96, %s97
      %p111 = scmp.eq.s32.totalorder %s89, 1
      %p112 = por %p110, %p111
      %p114 = scmp.ne.s32.totalorder %s97, %s113
      %p115 = scmp.eq.s32.totalorder %s89, 0
      %p116 = por %p114, %p115
      %s118 = sadd.s32 %s117, 1
      %p121 = scmp.eq.s32.totalorder %s83, 1
      %p122 = scmp.ne.s32.totalorder %s117, %s119
      %p123 = scmp.eq.s32.totalorder %s83, 0
      %p124 = por %p122, %p123
      %p125 = scmp.ne.s32.totalorder %s117, %s119
      %p126 = scmp.eq.s32.totalorder %s88, 1
      %p127 = por %p125, %p126
      %p128 = scmp.ne.s32.totalorder %s119, %s120
      %p129 = scmp.eq.s32.totalorder %s88, 0
      %p130 = por %p128, %p129
      %p131 = scmp.ne.s32.totalorder %s119, %s120
      %p132 = scmp.eq.s32.totalorder %s89, 1
      %p133 = por %p131, %p132
      %p135 = scmp.ne.s32.totalorder %s120, %s134
      %p136 = scmp.eq.s32.totalorder %s89, 0
      %p137 = por %p135, %p136
      %s139 = sadd.s32 %s138, 1
      %p142 = scmp.eq.s32.totalorder %s83, 1
      %p143 = scmp.ne.s32.totalorder %s138, %s140
      %p144 = scmp.eq.s32.totalorder %s83, 0
      %p145 = por %p143, %p144
      %p146 = scmp.ne.s32.totalorder %s138, %s140
      %p147 = scmp.eq.s32.totalorder %s88, 1
      %p148 = por %p146, %p147
      %p149 = scmp.ne.s32.totalorder %s140, %s141
      %p150 = scmp.eq.s32.totalorder %s88, 0
      %p151 = por %p149, %p150
      %p152 = scmp.ne.s32.totalorder %s140, %s141
      %p153 = scmp.eq.s32.totalorder %s89, 1
      %p154 = por %p152, %p153
      %p156 = scmp.ne.s32.totalorder %s141, %s155
      %p157 = scmp.eq.s32.totalorder %s89, 0
      %p158 = por %p156, %p157
      %s160 = sadd.s32 %s159, 1
      %p163 = scmp.eq.s32.totalorder %s83, 1
      %p164 = scmp.ne.s32.totalorder %s159, %s161
      %p165 = scmp.eq.s32.totalorder %s83, 0
      %p166 = por %p164, %p165
      %p167 = scmp.ne.s32.totalorder %s159, %s161
      %p168 = scmp.eq.s32.totalorder %s88, 1
      %p169 = por %p167, %p168
      %p170 = scmp.ne.s32.totalorder %s161, %s162
      %p171 = scmp.eq.s32.totalorder %s88, 0
      %p172 = por %p170, %p171
      %p173 = scmp.ne.s32.totalorder %s161, %s162
      %p174 = scmp.eq.s32.totalorder %s89, 1
      %p175 = por %p173, %p174
      %p177 = scmp.ne.s32.totalorder %s162, %s176
      %p178 = scmp.eq.s32.totalorder %s89, 0
      %p179 = por %p177, %p178
      %s181 = sadd.s32 %s180, 1
      %p184 = scmp.eq.s32.totalorder %s83, 1
      %p185 = scmp.ne.s32.totalorder %s180, %s182
      %p186 = scmp.eq.s32.totalorder %s83, 0
      %p187 = por %p185, %p186
      %p188 = scmp.ne.s32.totalorder %s180, %s182
      %p189 = scmp.eq.s32.totalorder %s88, 1
      %p190 = por %p188, %p189
      %p191 = scmp.ne.s32.totalorder %s182, %s183
      %p192 = scmp.eq.s32.totalorder %s88, 0
      %p193 = por %p191, %p192
      %p194 = scmp.ne.s32.totalorder %s182, %s183
      %p195 = scmp.eq.s32.totalorder %s89, 1
      %p196 = por %p194, %p195
      %p198 = scmp.ne.s32.totalorder %s183, %s197
      %p199 = scmp.eq.s32.totalorder %s89, 0
      %p200 = por %p198, %p199
      %s202 = sadd.s32 %s201, 1
      %p205 = scmp.eq.s32.totalorder %s83, 1
      %p206 = scmp.ne.s32.totalorder %s201, %s203
      %p207 = scmp.eq.s32.totalorder %s83, 0
      %p208 = por %p206, %p207
      %p209 = scmp.ne.s32.totalorder %s201, %s203
      %p210 = scmp.eq.s32.totalorder %s88, 1
      %p211 = por %p209, %p210
      %p212 = scmp.ne.s32.totalorder %s203, %s204
      %p213 = scmp.eq.s32.totalorder %s88, 0
      %p214 = por %p212, %p213
      %p215 = scmp.ne.s32.totalorder %s203, %s204
      %p216 = scmp.eq.s32.totalorder %s89, 1
      %p217 = por %p215, %p216
      %p219 = scmp.ne.s32.totalorder %s204, %s218
      %p220 = scmp.eq.s32.totalorder %s89, 0
      %p221 = por %p219, %p220
      %s223 = sadd.s32 %s222, 1
      %p226 = scmp.eq.s32.totalorder %s83, 1
      %p227 = scmp.ne.s32.totalorder %s222, %s224
      %p228 = scmp.eq.s32.totalorder %s83, 0
      %p229 = por %p227, %p228
      %p230 = scmp.ne.s32.totalorder %s222, %s224
      %p231 = scmp.eq.s32.totalorder %s88, 1
      %p232 = por %p230, %p231
      %p233 = scmp.ne.s32.totalorder %s224, %s225
      %p234 = scmp.eq.s32.totalorder %s88, 0
      %p235 = por %p233, %p234
      %p236 = scmp.ne.s32.totalorder %s224, %s225
      %p237 = scmp.eq.s32.totalorder %s89, 1
      %p238 = por %p236, %p237
      %p240 = scmp.ne.s32.totalorder %s225, %s239
      %p241 = scmp.eq.s32.totalorder %s89, 0
      %p242 = por %p240, %p241
      %s244 = sadd.s32 %s243, 1
      %p247 = scmp.eq.s32.totalorder %s83, 1
      %p248 = scmp.ne.s32.totalorder %s243, %s245
      %p249 = scmp.eq.s32.totalorder %s83, 0
      %p250 = por %p248, %p249
      %p251 = scmp.ne.s32.totalorder %s243, %s245
      %p252 = scmp.eq.s32.totalorder %s88, 1
      %p253 = por %p251, %p252
      %p254 = scmp.ne.s32.totalorder %s245, %s246
      %p255 = scmp.eq.s32.totalorder %s88, 0
      %p256 = por %p254, %p255
      %p257 = scmp.ne.s32.totalorder %s245, %s246
      %p258 = scmp.eq.s32.totalorder %s89, 1
      %p259 = por %p257, %p258
      %p261 = scmp.ne.s32.totalorder %s246, %s260
      %p262 = scmp.eq.s32.totalorder %s89, 0
      %p263 = por %p261, %p262
      %s265 = sadd.s32 %s264, 1
      %p268 = scmp.eq.s32.totalorder %s83, 1
      %p269 = scmp.ne.s32.totalorder %s264, %s266
      %p270 = scmp.eq.s32.totalorder %s83, 0
      %p271 = por %p269, %p270
      %p272 = scmp.ne.s32.totalorder %s264, %s266
      %p273 = scmp.eq.s32.totalorder %s88, 1
      %p274 = por %p272, %p273
      %p275 = scmp.ne.s32.totalorder %s266, %s267
      %p276 = scmp.eq.s32.totalorder %s88, 0
      %p277 = por %p275, %p276
      %p278 = scmp.ne.s32.totalorder %s266, %s267
      %p279 = scmp.eq.s32.totalorder %s89, 1
      %p280 = por %p278, %p279
      %p282 = scmp.ne.s32.totalorder %s267, %s281
      %p283 = scmp.eq.s32.totalorder %s89, 0
      %p284 = por %p282, %p283
      %s286 = sadd.s32 %s285, 1
      %p289 = scmp.eq.s32.totalorder %s83, 1
      %p290 = scmp.ne.s32.totalorder %s285, %s287
      %p291 = scmp.eq.s32.totalorder %s83, 0
      %p292 = por %p290, %p291
      %p293 = scmp.ne.s32.totalorder %s285, %s287
      %p294 = scmp.eq.s32.totalorder %s88, 1
      %p295 = por %p293, %p294
      %p296 = scmp.ne.s32.totalorder %s287, %s288
      %p297 = scmp.eq.s32.totalorder %s88, 0
      %p298 = por %p296, %p297
      %p299 = scmp.ne.s32.totalorder %s287, %s288
      %p300 = scmp.eq.s32.totalorder %s89, 1
      %p301 = por %p299, %p300
      %p303 = scmp.ne.s32.totalorder %s288, %s302
      %p304 = scmp.eq.s32.totalorder %s89, 0
      %p305 = por %p303, %p304
      %s307 = sadd.s32 %s306, 1
      %p310 = scmp.eq.s32.totalorder %s83, 1
      %p311 = scmp.ne.s32.totalorder %s306, %s308
      %p312 = scmp.eq.s32.totalorder %s83, 0
      %p313 = por %p311, %p312
      %p314 = scmp.ne.s32.totalorder %s306, %s308
      %p315 = scmp.eq.s32.totalorder %s88, 1
      %p316 = por %p314, %p315
      %p317 = scmp.ne.s32.totalorder %s308, %s309
      %p318 = scmp.eq.s32.totalorder %s88, 0
      %p319 = por %p317, %p318
      %p320 = scmp.ne.s32.totalorder %s308, %s309
      %p321 = scmp.eq.s32.totalorder %s89, 1
      %p322 = por %p320, %p321
      %p324 = scmp.ne.s32.totalorder %s309, %s323
      %p325 = scmp.eq.s32.totalorder %s89, 0
      %p326 = por %p324, %p325
      %s328 = sadd.s32 %s327, 1
      %p331 = scmp.eq.s32.totalorder %s83, 1
      %p332 = scmp.ne.s32.totalorder %s327, %s329
      %p333 = scmp.eq.s32.totalorder %s83, 0
      %p334 = por %p332, %p333
      %p335 = scmp.ne.s32.totalorder %s327, %s329
      %p336 = scmp.eq.s32.totalorder %s88, 1
      %p337 = por %p335, %p336
      %p338 = scmp.ne.s32.totalorder %s329, %s330
      %p339 = scmp.eq.s32.totalorder %s88, 0
      %p340 = por %p338, %p339
      %p341 = scmp.ne.s32.totalorder %s329, %s330
      %p342 = scmp.eq.s32.totalorder %s89, 1
      %p343 = por %p341, %p342
      %p345 = scmp.ne.s32.totalorder %s330, %s344
      %p346 = scmp.eq.s32.totalorder %s89, 0
      %p347 = por %p345, %p346
      %s349 = sadd.s32 %s348, 1
      %p352 = scmp.eq.s32.totalorder %s83, 1
      %p353 = scmp.ne.s32.totalorder %s348, %s350
      %p354 = scmp.eq.s32.totalorder %s83, 0
      %p355 = por %p353, %p354
      %p356 = scmp.ne.s32.totalorder %s348, %s350
      %p357 = scmp.eq.s32.totalorder %s88, 1
      %p358 = por %p356, %p357
      %p359 = scmp.ne.s32.totalorder %s350, %s351
      %p360 = scmp.eq.s32.totalorder %s88, 0
      %p361 = por %p359, %p360
      %p362 = scmp.ne.s32.totalorder %s350, %s351
      %p363 = scmp.eq.s32.totalorder %s89, 1
      %p364 = por %p362, %p363
      %p366 = scmp.ne.s32.totalorder %s351, %s365
      %p367 = scmp.eq.s32.totalorder %s89, 0
      %p368 = por %p366, %p367
      %s370 = sadd.s32 %s369, 1
      %p373 = scmp.eq.s32.totalorder %s83, 1
      %p374 = scmp.ne.s32.totalorder %s369, %s371
      %p375 = scmp.eq.s32.totalorder %s83, 0
      %p376 = por %p374, %p375
      %p377 = scmp.ne.s32.totalorder %s369, %s371
      %p378 = scmp.eq.s32.totalorder %s88, 1
      %p379 = por %p377, %p378
      %p380 = scmp.ne.s32.totalorder %s371, %s372
      %p381 = scmp.eq.s32.totalorder %s88, 0
      %p382 = por %p380, %p381
      %p383 = scmp.ne.s32.totalorder %s371, %s372
      %p384 = scmp.eq.s32.totalorder %s89, 1
      %p385 = por %p383, %p384
      %p387 = scmp.ne.s32.totalorder %s372, %s386
      %p388 = scmp.eq.s32.totalorder %s89, 0
      %p389 = por %p387, %p388
      %s391 = sadd.s32 %s390, 1
      %p394 = scmp.eq.s32.totalorder %s83, 1
      %p395 = scmp.ne.s32.totalorder %s390, %s392
      %p396 = scmp.eq.s32.totalorder %s83, 0
      %p397 = por %p395, %p396
      %p398 = scmp.ne.s32.totalorder %s390, %s392
      %p399 = scmp.eq.s32.totalorder %s88, 1
      %p400 = por %p398, %p399
      %p401 = scmp.ne.s32.totalorder %s392, %s393
      %p402 = scmp.eq.s32.totalorder %s88, 0
      %p403 = por %p401, %p402
      %p404 = scmp.ne.s32.totalorder %s392, %s393
      %p405 = scmp.eq.s32.totalorder %s89, 1
      %p406 = por %p404, %p405
      %p408 = scmp.ne.s32.totalorder %s393, %s407
      %p409 = scmp.eq.s32.totalorder %s89, 0
      %p410 = por %p408, %p409
      %s412 = sadd.s32 %s411, 1
      %p415 = scmp.eq.s32.totalorder %s83, 1
      %p416 = scmp.ne.s32.totalorder %s411, %s413
      %p417 = scmp.eq.s32.totalorder %s83, 0
      %p418 = por %p416, %p417
      %p419 = scmp.ne.s32.totalorder %s411, %s413
      %p420 = scmp.eq.s32.totalorder %s88, 1
      %p421 = por %p419, %p420
      %p422 = scmp.ne.s32.totalorder %s413, %s414
      %p423 = scmp.eq.s32.totalorder %s88, 0
      %p424 = por %p422, %p423
      %p425 = scmp.ne.s32.totalorder %s413, %s414
      %p426 = scmp.eq.s32.totalorder %s89, 1
      %p427 = por %p425, %p426
      %p429 = scmp.ne.s32.totalorder %s414, %s428
      %p430 = scmp.eq.s32.totalorder %s89, 0
      %p431 = por %p429, %p430
      %s433 = sadd.s32 %s432, 1
      %p436 = scmp.eq.s32.totalorder %s83, 1
      %p437 = scmp.ne.s32.totalorder %s432, %s434
      %p438 = scmp.eq.s32.totalorder %s83, 0
      %p439 = por %p437, %p438
      %p440 = scmp.ne.s32.totalorder %s432, %s434
      %p441 = scmp.eq.s32.totalorder %s88, 1
      %p442 = por %p440, %p441
      %p443 = scmp.ne.s32.totalorder %s434, %s435
      %p444 = scmp.eq.s32.totalorder %s88, 0
      %p445 = por %p443, %p444
      %p446 = scmp.ne.s32.totalorder %s434, %s435
      %p447 = scmp.eq.s32.totalorder %s89, 1
      %p448 = por %p446, %p447
      %p450 = scmp.ne.s32.totalorder %s435, %s449
      %p451 = scmp.eq.s32.totalorder %s89, 0
      %p452 = por %p450, %p451
      %s454 = sadd.s32 %s453, 1
      %p457 = scmp.eq.s32.totalorder %s83, 1
      %p458 = scmp.ne.s32.totalorder %s453, %s455
      %p459 = scmp.eq.s32.totalorder %s83, 0
      %p460 = por %p458, %p459
      %p461 = scmp.ne.s32.totalorder %s453, %s455
      %p462 = scmp.eq.s32.totalorder %s88, 1
      %p463 = por %p461, %p462
      %p464 = scmp.ne.s32.totalorder %s455, %s456
      %p465 = scmp.eq.s32.totalorder %s88, 0
      %p466 = por %p464, %p465
      %p467 = scmp.ne.s32.totalorder %s455, %s456
      %p468 = scmp.eq.s32.totalorder %s89, 1
      %p469 = por %p467, %p468
      %p471 = scmp.ne.s32.totalorder %s456, %s470
      %p472 = scmp.eq.s32.totalorder %s89, 0
      %p473 = por %p471, %p472
      %s475 = sadd.s32 %s474, 1
      %p478 = scmp.eq.s32.totalorder %s83, 1
      %p479 = scmp.ne.s32.totalorder %s474, %s476
      %p480 = scmp.eq.s32.totalorder %s83, 0
      %p481 = por %p479, %p480
      %p482 = scmp.ne.s32.totalorder %s474, %s476
      %p483 = scmp.eq.s32.totalorder %s88, 1
      %p484 = por %p482, %p483
      %p485 = scmp.ne.s32.totalorder %s476, %s477
      %p486 = scmp.eq.s32.totalorder %s88, 0
      %p487 = por %p485, %p486
      %p488 = scmp.ne.s32.totalorder %s476, %s477
      %p489 = scmp.eq.s32.totalorder %s89, 1
      %p490 = por %p488, %p489
      %p492 = scmp.ne.s32.totalorder %s477, %s491
      %p493 = scmp.eq.s32.totalorder %s89, 0
      %p494 = por %p492, %p493
      %s496 = sadd.s32 %s495, 1
      %p499 = scmp.eq.s32.totalorder %s83, 1
      %p500 = scmp.ne.s32.totalorder %s495, %s497
      %p501 = scmp.eq.s32.totalorder %s83, 0
      %p502 = por %p500, %p501
      %p503 = scmp.ne.s32.totalorder %s495, %s497
      %p504 = scmp.eq.s32.totalorder %s88, 1
      %p505 = por %p503, %p504
      %p506 = scmp.ne.s32.totalorder %s497, %s498
      %p507 = scmp.eq.s32.totalorder %s88, 0
      %p508 = por %p506, %p507
      %p509 = scmp.ne.s32.totalorder %s497, %s498
      %p510 = scmp.eq.s32.totalorder %s89, 1
      %p511 = por %p509, %p510
      %p513 = scmp.ne.s32.totalorder %s498, %s512
      %p514 = scmp.eq.s32.totalorder %s89, 0
      %p515 = por %p513, %p514
      %s517 = sadd.s32 %s516, 1
      %p520 = scmp.eq.s32.totalorder %s83, 1
      %p521 = scmp.ne.s32.totalorder %s516, %s518
      %p522 = scmp.eq.s32.totalorder %s83, 0
      %p523 = por %p521, %p522
      %p524 = scmp.ne.s32.totalorder %s516, %s518
      %p525 = scmp.eq.s32.totalorder %s88, 1
      %p526 = por %p524, %p525
      %p527 = scmp.ne.s32.totalorder %s518, %s519
      %p528 = scmp.eq.s32.totalorder %s88, 0
      %p529 = por %p527, %p528
      %p530 = scmp.ne.s32.totalorder %s518, %s519
      %p531 = scmp.eq.s32.totalorder %s89, 1
      %p532 = por %p530, %p531
      %p534 = scmp.ne.s32.totalorder %s519, %s533
      %p535 = scmp.eq.s32.totalorder %s89, 0
      %p536 = por %p534, %p535
      %s538 = sadd.s32 %s537, 1
      %p541 = scmp.eq.s32.totalorder %s83, 1
      %p542 = scmp.ne.s32.totalorder %s537, %s539
      %p543 = scmp.eq.s32.totalorder %s83, 0
      %p544 = por %p542, %p543
      %p545 = scmp.ne.s32.totalorder %s537, %s539
      %p546 = scmp.eq.s32.totalorder %s88, 1
      %p547 = por %p545, %p546
      %p548 = scmp.ne.s32.totalorder %s539, %s540
      %p549 = scmp.eq.s32.totalorder %s88, 0
      %p550 = por %p548, %p549
      %p551 = scmp.ne.s32.totalorder %s539, %s540
      %p552 = scmp.eq.s32.totalorder %s89, 1
      %p553 = por %p551, %p552
      %p555 = scmp.ne.s32.totalorder %s540, %s554
      %p556 = scmp.eq.s32.totalorder %s89, 0
      %p557 = por %p555, %p556
      %s559 = sadd.s32 %s558, 1
      %p562 = scmp.eq.s32.totalorder %s83, 1
      %p563 = scmp.ne.s32.totalorder %s558, %s560
      %p564 = scmp.eq.s32.totalorder %s83, 0
      %p565 = por %p563, %p564
      %p566 = scmp.ne.s32.totalorder %s558, %s560
      %p567 = scmp.eq.s32.totalorder %s88, 1
      %p568 = por %p566, %p567
      %p569 = scmp.ne.s32.totalorder %s560, %s561
      %p570 = scmp.eq.s32.totalorder %s88, 0
      %p571 = por %p569, %p570
      %p572 = scmp.ne.s32.totalorder %s560, %s561
      %p573 = scmp.eq.s32.totalorder %s89, 1
      %p574 = por %p572, %p573
      %p576 = scmp.ne.s32.totalorder %s561, %s575
      %p577 = scmp.eq.s32.totalorder %s89, 0
      %p578 = por %p576, %p577
      %s580 = sadd.s32 %s579, 1
      %p583 = scmp.eq.s32.totalorder %s83, 1
      %p584 = scmp.ne.s32.totalorder %s579, %s581
      %p585 = scmp.eq.s32.totalorder %s83, 0
      %p586 = por %p584, %p585
      %p587 = scmp.ne.s32.totalorder %s579, %s581
      %p588 = scmp.eq.s32.totalorder %s88, 1
      %p589 = por %p587, %p588
      %p590 = scmp.ne.s32.totalorder %s581, %s582
      %p591 = scmp.eq.s32.totalorder %s88, 0
      %p592 = por %p590, %p591
      %p593 = scmp.ne.s32.totalorder %s581, %s582
      %p594 = scmp.eq.s32.totalorder %s89, 1
      %p595 = por %p593, %p594
      %p597 = scmp.ne.s32.totalorder %s582, %s596
      %p598 = scmp.eq.s32.totalorder %s89, 0
      %p599 = por %p597, %p598
      %s601 = sadd.s32 %s600, 1
      %p604 = scmp.eq.s32.totalorder %s83, 1
      %p605 = scmp.ne.s32.totalorder %s600, %s602
      %p606 = scmp.eq.s32.totalorder %s83, 0
      %p607 = por %p605, %p606
      %p608 = scmp.ne.s32.totalorder %s600, %s602
      %p609 = scmp.eq.s32.totalorder %s88, 1
      %p610 = por %p608, %p609
      %p611 = scmp.ne.s32.totalorder %s602, %s603
      %p612 = scmp.eq.s32.totalorder %s88, 0
      %p613 = por %p611, %p612
      %p614 = scmp.ne.s32.totalorder %s602, %s603
      %p615 = scmp.eq.s32.totalorder %s89, 1
      %p616 = por %p614, %p615
      %p618 = scmp.ne.s32.totalorder %s603, %s617
      %p619 = scmp.eq.s32.totalorder %s89, 0
      %p620 = por %p618, %p619
      %s622 = sadd.s32 %s621, 1
      %p625 = scmp.eq.s32.totalorder %s83, 1
      %p626 = scmp.ne.s32.totalorder %s621, %s623
      %p627 = scmp.eq.s32.totalorder %s83, 0
      %p628 = por %p626, %p627
      %p629 = scmp.ne.s32.totalorder %s621, %s623
      %p630 = scmp.eq.s32.totalorder %s88, 1
      %p631 = por %p629, %p630
      %p632 = scmp.ne.s32.totalorder %s623, %s624
      %p633 = scmp.eq.s32.totalorder %s88, 0
      %p634 = por %p632, %p633
      %p635 = scmp.ne.s32.totalorder %s623, %s624
      %p636 = scmp.eq.s32.totalorder %s89, 1
      %p637 = por %p635, %p636
      %p639 = scmp.ne.s32.totalorder %s624, %s638
      %p640 = scmp.eq.s32.totalorder %s89, 0
      %p641 = por %p639, %p640
      %s643 = sadd.s32 %s642, 1
      %p646 = scmp.eq.s32.totalorder %s83, 1
      %p647 = scmp.ne.s32.totalorder %s642, %s644
      %p648 = scmp.eq.s32.totalorder %s83, 0
      %p649 = por %p647, %p648
      %p650 = scmp.ne.s32.totalorder %s642, %s644
      %p651 = scmp.eq.s32.totalorder %s88, 1
      %p652 = por %p650, %p651
      %p653 = scmp.ne.s32.totalorder %s644, %s645
      %p654 = scmp.eq.s32.totalorder %s88, 0
      %p655 = por %p653, %p654
      %p656 = scmp.ne.s32.totalorder %s644, %s645
      %p657 = scmp.eq.s32.totalorder %s89, 1
      %p658 = por %p656, %p657
      %p660 = scmp.ne.s32.totalorder %s645, %s659
      %p661 = scmp.eq.s32.totalorder %s89, 0
      %p662 = por %p660, %p661
      %s664 = sadd.s32 %s663, 1
      %p667 = scmp.eq.s32.totalorder %s83, 1
      %p668 = scmp.ne.s32.totalorder %s663, %s665
      %p669 = scmp.eq.s32.totalorder %s83, 0
      %p670 = por %p668, %p669
      %p671 = scmp.ne.s32.totalorder %s663, %s665
      %p672 = scmp.eq.s32.totalorder %s88, 1
      %p673 = por %p671, %p672
      %p674 = scmp.ne.s32.totalorder %s665, %s666
      %p675 = scmp.eq.s32.totalorder %s88, 0
      %p676 = por %p674, %p675
      %p677 = scmp.ne.s32.totalorder %s665, %s666
      %p678 = scmp.eq.s32.totalorder %s89, 1
      %p679 = por %p677, %p678
      %p681 = scmp.ne.s32.totalorder %s666, %s680
      %p682 = scmp.eq.s32.totalorder %s89, 0
      %p683 = por %p681, %p682
      %s685 = sadd.s32 %s684, 1
      %p688 = scmp.eq.s32.totalorder %s83, 1
      %p689 = scmp.ne.s32.totalorder %s684, %s686
      %p690 = scmp.eq.s32.totalorder %s83, 0
      %p691 = por %p689, %p690
      %p692 = scmp.ne.s32.totalorder %s684, %s686
      %p693 = scmp.eq.s32.totalorder %s88, 1
      %p694 = por %p692, %p693
      %p695 = scmp.ne.s32.totalorder %s686, %s687
      %p696 = scmp.eq.s32.totalorder %s88, 0
      %p697 = por %p695, %p696
      %p698 = scmp.ne.s32.totalorder %s686, %s687
      %p699 = scmp.eq.s32.totalorder %s89, 1
      %p700 = por %p698, %p699
      %p702 = scmp.ne.s32.totalorder %s687, %s701
      %p703 = scmp.eq.s32.totalorder %s89, 0
      %p704 = por %p702, %p703
      %s706 = sadd.s32 %s705, 1
      %p709 = scmp.eq.s32.totalorder %s83, 1
      %p710 = scmp.ne.s32.totalorder %s705, %s707
      %p711 = scmp.eq.s32.totalorder %s83, 0
      %p712 = por %p710, %p711
      %p713 = scmp.ne.s32.totalorder %s705, %s707
      %p714 = scmp.eq.s32.totalorder %s88, 1
      %p715 = por %p713, %p714
      %p716 = scmp.ne.s32.totalorder %s707, %s708
      %p717 = scmp.eq.s32.totalorder %s88, 0
      %p718 = por %p716, %p717
      %p719 = scmp.ne.s32.totalorder %s707, %s708
      %p720 = scmp.eq.s32.totalorder %s89, 1
      %p721 = por %p719, %p720
      %p723 = scmp.ne.s32.totalorder %s708, %s722
      %p724 = scmp.eq.s32.totalorder %s89, 0
      %p725 = por %p723, %p724
      %s727 = sadd.s32 %s726, 1
      %p730 = scmp.eq.s32.totalorder %s83, 1
      %p731 = scmp.ne.s32.totalorder %s726, %s728
      %p732 = scmp.eq.s32.totalorder %s83, 0
      %p733 = por %p731, %p732
      %p734 = scmp.ne.s32.totalorder %s726, %s728
      %p735 = scmp.eq.s32.totalorder %s88, 1
      %p736 = por %p734, %p735
      %p737 = scmp.ne.s32.totalorder %s728, %s729
      %p738 = scmp.eq.s32.totalorder %s88, 0
      %p739 = por %p737, %p738
      %p740 = scmp.ne.s32.totalorder %s728, %s729
      %p741 = scmp.eq.s32.totalorder %s89, 1
      %p742 = por %p740, %p741
      %p744 = scmp.ne.s32.totalorder %s729, %s743
      %p745 = scmp.eq.s32.totalorder %s89, 0
      %p746 = por %p744, %p745
      %s748 = sadd.s32 %s747, 1
      %p751 = scmp.eq.s32.totalorder %s83, 1
      %p752 = scmp.ne.s32.totalorder %s747, %s749
      %p753 = scmp.eq.s32.totalorder %s83, 0
      %p754 = por %p752, %p753
      %p755 = scmp.ne.s32.totalorder %s747, %s749
      %p756 = scmp.eq.s32.totalorder %s88, 1
      %p757 = por %p755, %p756
      %p758 = scmp.ne.s32.totalorder %s749, %s750
      %p759 = scmp.eq.s32.totalorder %s88, 0
      %p760 = por %p758, %p759
      %p761 = scmp.ne.s32.totalorder %s749, %s750
      %p762 = scmp.eq.s32.totalorder %s89, 1
      %p763 = por %p761, %p762
      %p765 = scmp.ne.s32.totalorder %s750, %s764
      %p766 = scmp.eq.s32.totalorder %s89, 0
      %p767 = por %p765, %p766
      %s769 = sadd.s32 %s768, 1
      %p772 = scmp.eq.s32.totalorder %s83, 1
      %p773 = scmp.ne.s32.totalorder %s768, %s770
      %p774 = scmp.eq.s32.totalorder %s83, 0
      %p775 = por %p773, %p774
      %p776 = scmp.ne.s32.totalorder %s768, %s770
      %p777 = scmp.eq.s32.totalorder %s88, 1
      %p778 = por %p776, %p777
      %p779 = scmp.ne.s32.totalorder %s770, %s771
      %p780 = scmp.eq.s32.totalorder %s88, 0
      %p781 = por %p779, %p780
      %p782 = scmp.ne.s32.totalorder %s770, %s771
      %p783 = scmp.eq.s32.totalorder %s89, 1
      %p784 = por %p782, %p783
      %p786 = scmp.ne.s32.totalorder %s771, %s785
      %p787 = scmp.eq.s32.totalorder %s89, 0
      %p788 = por %p786, %p787
      %s790 = sadd.s32 %s789, 1
      %p793 = scmp.eq.s32.totalorder %s83, 1
      %p794 = scmp.ne.s32.totalorder %s789, %s791
      %p795 = scmp.eq.s32.totalorder %s83, 0
      %p796 = por %p794, %p795
      %p797 = scmp.ne.s32.totalorder %s789, %s791
      %p798 = scmp.eq.s32.totalorder %s88, 1
      %p799 = por %p797, %p798
      %p800 = scmp.ne.s32.totalorder %s791, %s792
      %p801 = scmp.eq.s32.totalorder %s88, 0
      %p802 = por %p800, %p801
      %p803 = scmp.ne.s32.totalorder %s791, %s792
      %p804 = scmp.eq.s32.totalorder %s89, 1
      %p805 = por %p803, %p804
      %p807 = scmp.ne.s32.totalorder %s792, %s806
      %p808 = scmp.eq.s32.totalorder %s89, 0
      %p809 = por %p807, %p808
      %s811 = sadd.s32 %s810, 1
      %p814 = scmp.eq.s32.totalorder %s83, 1
      %p815 = scmp.ne.s32.totalorder %s810, %s812
      %p816 = scmp.eq.s32.totalorder %s83, 0
      %p817 = por %p815, %p816
      %p818 = scmp.ne.s32.totalorder %s810, %s812
      %p819 = scmp.eq.s32.totalorder %s88, 1
      %p820 = por %p818, %p819
      %p821 = scmp.ne.s32.totalorder %s812, %s813
      %p822 = scmp.eq.s32.totalorder %s88, 0
      %p823 = por %p821, %p822
      %p824 = scmp.ne.s32.totalorder %s812, %s813
      %p825 = scmp.eq.s32.totalorder %s89, 1
      %p826 = por %p824, %p825
      %p828 = scmp.ne.s32.totalorder %s813, %s827
      %p829 = scmp.eq.s32.totalorder %s89, 0
      %p830 = por %p828, %p829
      %s832 = sadd.s32 %s831, 1
      %p835 = scmp.eq.s32.totalorder %s83, 1
      %p836 = scmp.ne.s32.totalorder %s831, %s833
      %p837 = scmp.eq.s32.totalorder %s83, 0
      %p838 = por %p836, %p837
      %p839 = scmp.ne.s32.totalorder %s831, %s833
      %p840 = scmp.eq.s32.totalorder %s88, 1
      %p841 = por %p839, %p840
      %p842 = scmp.ne.s32.totalorder %s833, %s834
      %p843 = scmp.eq.s32.totalorder %s88, 0
      %p844 = por %p842, %p843
      %p845 = scmp.ne.s32.totalorder %s833, %s834
      %p846 = scmp.eq.s32.totalorder %s89, 1
      %p847 = por %p845, %p846
      %p849 = scmp.ne.s32.totalorder %s834, %s848
      %p850 = scmp.eq.s32.totalorder %s89, 0
      %p851 = por %p849, %p850
      %s852 = ssub.s32 %s83, %s90
      %p853 = scmp.eq.s32.totalorder %s852, 0
      %s855 = sadd.s32 %s854, 1
      %s856 = scalar_select %p853, %s854, %s855
      %p859 = pneg %p853
      %p860 = scmp.eq.s32.totalorder %s83, 1
      %p861 = por %p859, %p860
      %p862 = scmp.ne.s32.totalorder %s854, %s857
      %p863 = scmp.eq.s32.totalorder %s83, 0
      %p864 = por %p862, %p863
      %p865 = scmp.ne.s32.totalorder %s854, %s857
      %p866 = scmp.eq.s32.totalorder %s88, 1
      %p867 = por %p865, %p866
      %p868 = scmp.ne.s32.totalorder %s857, %s858
      %p869 = scmp.eq.s32.totalorder %s88, 0
      %p870 = por %p868, %p869
      %p871 = scmp.ne.s32.totalorder %s857, %s858
      %p872 = scmp.eq.s32.totalorder %s89, 1
      %p873 = por %p871, %p872
      %p875 = scmp.ne.s32.totalorder %s858, %s874
      %p876 = scmp.eq.s32.totalorder %s89, 0
      %p877 = por %p875, %p876
      %p878 = scmp.le.s32.totalorder 1, %s83
      %p879 = scmp.lt.s32.totalorder %s83, 3
      %p880 = pnand %p878, %p879
      %p881 = pneg %p880
      // Predicated region
      $region9: #{skip_att_unit_forward.1} parent=5 // pred_check
        _
      $region10: #{skip_att_unit_forward.1} parent=5 // pred_check_branch
        %883 = sbr.rel (%p880) target = $region12
      $region11: #{skip_att_unit_forward.1} parent=5 // pred_region
        %s884 = ssub.s32 %s83, 1
        // Predicated region
        $region13: #{skip_att_unit_forward.1} parent=11 // pred_check
          %p885 = pneg %p130
        $region14: #{skip_att_unit_forward.1} parent=11 // pred_check_branch
          %887 = sbr.rel (%p885) target = $region16
        $region15: #{skip_att_unit_forward.1} parent=11 // pred_region
          _
        $region16: #{skip_att_unit_forward.1} parent=11 // pred_fallthru
          _
        // Predicated region
        $region17: #{skip_att_unit_forward.1} parent=11 // pred_check
          %p888 = pneg %p151
        $region18: #{skip_att_unit_forward.1} parent=11 // pred_check_branch
          %890 = sbr.rel (%p888) target = $region20
        $region19: #{skip_att_unit_forward.1} parent=11 // pred_region
          _
        $region20: #{skip_att_unit_forward.1} parent=11 // pred_fallthru
          _
        // Predicated region
        $region21: #{skip_att_unit_forward.1} parent=11 // pred_check
          %p891 = pneg %p172
        $region22: #{skip_att_unit_forward.1} parent=11 // pred_check_branch
          %893 = sbr.rel (%p891) target = $region24
        $region23: #{skip_att_unit_forward.1} parent=11 // pred_region
          _
        $region24: #{skip_att_unit_forward.1} parent=11 // pred_fallthru
          _
        // Predicated region
        $region25: #{skip_att_unit_forward.1} parent=11 // pred_check
          %p894 = pneg %p193
        $region26: #{skip_att_unit_forward.1} parent=11 // pred_check_branch
          %896 = sbr.rel (%p894) target = $region28
        $region27: #{skip_att_unit_forward.1} parent=11 // pred_region
          %s898 = ssub.s32 64, 64
          %899 = vsyncadd [#allocation3], %s898
          %s901 = sshll.u32 [#allocation2], 4
          %s902 = int_to_ptr.vmem [resolvable:$true] %s901
          %904 = dma.hbm_to_vmem [thread:$0]  %s9, 64, %s902, [#allocation3]
        $region28: #{skip_att_unit_forward.1} parent=11 // pred_fallthru
          _
        // Predicated region
        $region29: #{skip_att_unit_forward.1} parent=11 // pred_check
          %p905 = pneg %p214
        $region30: #{skip_att_unit_forward.1} parent=11 // pred_check_branch
          %907 = sbr.rel (%p905) target = $region32
        $region31: #{skip_att_unit_forward.1} parent=11 // pred_region
          %s909 = ssub.s32 64, 64
          %910 = vsyncadd [#allocation5], %s909
          %s912 = sshll.u32 [#allocation4], 4
          %s913 = int_to_ptr.vmem [resolvable:$true] %s912
          %915 = dma.hbm_to_vmem [thread:$0]  %s11, 64, %s913, [#allocation5]
        $region32: #{skip_att_unit_forward.1} parent=11 // pred_fallthru
          _
        // Predicated region
        $region33: #{skip_att_unit_forward.1} parent=11 // pred_check
          %p916 = pneg %p235
        $region34: #{skip_att_unit_forward.1} parent=11 // pred_check_branch
          %918 = sbr.rel (%p916) target = $region36
        $region35: #{skip_att_unit_forward.1} parent=11 // pred_region
          %s920 = ssub.s32 64, 64
          %921 = vsyncadd [#allocation5], %s920
          %s923 = sshll.u32 [#allocation6], 4
          %s924 = int_to_ptr.vmem [resolvable:$true] %s923
          %926 = dma.hbm_to_vmem [thread:$0]  %s13, 64, %s924, [#allocation5]
        $region36: #{skip_att_unit_forward.1} parent=11 // pred_fallthru
          _
        // Predicated region
        $region37: #{skip_att_unit_forward.1} parent=11 // pred_check
          %p927 = pneg %p256
        $region38: #{skip_att_unit_forward.1} parent=11 // pred_check_branch
          %929 = sbr.rel (%p927) target = $region40
        $region39: #{skip_att_unit_forward.1} parent=11 // pred_region
          %s931 = ssub.s32 64, 64
          %932 = vsyncadd [#allocation8], %s931
          %s934 = sshll.u32 [#allocation7], 4
          %s935 = int_to_ptr.vmem [resolvable:$true] %s934
          %937 = dma.hbm_to_vmem [thread:$0]  %s15, 64, %s935, [#allocation8]
        $region40: #{skip_att_unit_forward.1} parent=11 // pred_fallthru
          _
        // Predicated region
        $region41: #{skip_att_unit_forward.1} parent=11 // pred_check
          %p938 = pneg %p277
        $region42: #{skip_att_unit_forward.1} parent=11 // pred_check_branch
          %940 = sbr.rel (%p938) target = $region44
        $region43: #{skip_att_unit_forward.1} parent=11 // pred_region
          %s942 = ssub.s32 64, 64
          %943 = vsyncadd [#allocation8], %s942
          %s945 = sshll.u32 [#allocation9], 4
          %s946 = int_to_ptr.vmem [resolvable:$true] %s945
          %948 = dma.hbm_to_vmem [thread:$0]  %s17, 64, %s946, [#allocation8]
        $region44: #{skip_att_unit_forward.1} parent=11 // pred_fallthru
          _
        // Predicated region
        $region45: #{skip_att_unit_forward.1} parent=11 // pred_check
          %p949 = pneg %p298
        $region46: #{skip_att_unit_forward.1} parent=11 // pred_check_branch
          %951 = sbr.rel (%p949) target = $region48
        $region47: #{skip_att_unit_forward.1} parent=11 // pred_region
          %s953 = ssub.s32 64, 64
          %954 = vsyncadd [#allocation11], %s953
          %s956 = sshll.u32 [#allocation10], 4
          %s957 = int_to_ptr.vmem [resolvable:$true] %s956
          %959 = dma.hbm_to_vmem [thread:$0]  %s19, 64, %s957, [#allocation11]
        $region48: #{skip_att_unit_forward.1} parent=11 // pred_fallthru
          _
        // Predicated region
        $region49: #{skip_att_unit_forward.1} parent=11 // pred_check
          %p960 = pneg %p319
        $region50: #{skip_att_unit_forward.1} parent=11 // pred_check_branch
          %962 = sbr.rel (%p960) target = $region52
        $region51: #{skip_att_unit_forward.1} parent=11 // pred_region
          _
        $region52: #{skip_att_unit_forward.1} parent=11 // pred_fallthru
          _
        // Predicated region
        $region53: #{skip_att_unit_forward.1} parent=11 // pred_check
          %p963 = pneg %p340
        $region54: #{skip_att_unit_forward.1} parent=11 // pred_check_branch
          %965 = sbr.rel (%p963) target = $region56
        $region55: #{skip_att_unit_forward.1} parent=11 // pred_region
          _
        $region56: #{skip_att_unit_forward.1} parent=11 // pred_fallthru
          _
        // Predicated region
        $region57: #{skip_att_unit_forward.1} parent=11 // pred_check
          %p966 = pneg %p361
        $region58: #{skip_att_unit_forward.1} parent=11 // pred_check_branch
          %968 = sbr.rel (%p966) target = $region60
        $region59: #{skip_att_unit_forward.1} parent=11 // pred_region
          _
        $region60: #{skip_att_unit_forward.1} parent=11 // pred_fallthru
          _
        // Predicated region
        $region61: #{skip_att_unit_forward.1} parent=11 // pred_check
          %p969 = pneg %p382
        $region62: #{skip_att_unit_forward.1} parent=11 // pred_check_branch
          %971 = sbr.rel (%p969) target = $region64
        $region63: #{skip_att_unit_forward.1} parent=11 // pred_region
          _
        $region64: #{skip_att_unit_forward.1} parent=11 // pred_fallthru
          _
        // Predicated region
        $region65: #{skip_att_unit_forward.1} parent=11 // pred_check
          %p972 = pneg %p403
        $region66: #{skip_att_unit_forward.1} parent=11 // pred_check_branch
          %974 = sbr.rel (%p972) target = $region68
        $region67: #{skip_att_unit_forward.1} parent=11 // pred_region
          _
        $region68: #{skip_att_unit_forward.1} parent=11 // pred_fallthru
          _
        // Predicated region
        $region69: #{skip_att_unit_forward.1} parent=11 // pred_check
          %p975 = pneg %p424
        $region70: #{skip_att_unit_forward.1} parent=11 // pred_check_branch
          %977 = sbr.rel (%p975) target = $region72
        $region71: #{skip_att_unit_forward.1} parent=11 // pred_region
          _
        $region72: #{skip_att_unit_forward.1} parent=11 // pred_fallthru
          _
        // Predicated region
        $region73: #{skip_att_unit_forward.1} parent=11 // pred_check
          %p978 = pneg %p445
        $region74: #{skip_att_unit_forward.1} parent=11 // pred_check_branch
          %980 = sbr.rel (%p978) target = $region76
        $region75: #{skip_att_unit_forward.1} parent=11 // pred_region
          %s982 = ssub.s32 128, 128
          %983 = vsyncadd [#allocation11], %s982
          %s985 = sshll.u32 [#allocation12], 4
          %s986 = int_to_ptr.vmem [resolvable:$true] %s985
          %988 = dma.hbm_to_vmem [thread:$0]  %s33, 128, %s986, [#allocation11]
        $region76: #{skip_att_unit_forward.1} parent=11 // pred_fallthru
          _
        // Predicated region
        $region77: #{skip_att_unit_forward.1} parent=11 // pred_check
          %p989 = pneg %p466
        $region78: #{skip_att_unit_forward.1} parent=11 // pred_check_branch
          %991 = sbr.rel (%p989) target = $region80
        $region79: #{skip_att_unit_forward.1} parent=11 // pred_region
          _
        $region80: #{skip_att_unit_forward.1} parent=11 // pred_fallthru
          _
        // Predicated region
        $region81: #{skip_att_unit_forward.1} parent=11 // pred_check
          %p992 = pneg %p487
        $region82: #{skip_att_unit_forward.1} parent=11 // pred_check_branch
          %994 = sbr.rel (%p992) target = $region84
        $region83: #{skip_att_unit_forward.1} parent=11 // pred_region
          _
        $region84: #{skip_att_unit_forward.1} parent=11 // pred_fallthru
          _
        // Predicated region
        $region85: #{skip_att_unit_forward.1} parent=11 // pred_check
          %p995 = pneg %p508
        $region86: #{skip_att_unit_forward.1} parent=11 // pred_check_branch
          %997 = sbr.rel (%p995) target = $region88
        $region87: #{skip_att_unit_forward.1} parent=11 // pred_region
          _
        $region88: #{skip_att_unit_forward.1} parent=11 // pred_fallthru
          _
        // Predicated region
        $region89: #{skip_att_unit_forward.1} parent=11 // pred_check
          %p998 = pneg %p529
        $region90: #{skip_att_unit_forward.1} parent=11 // pred_check_branch
          %1000 = sbr.rel (%p998) target = $region92
        $region91: #{skip_att_unit_forward.1} parent=11 // pred_region
          _
        $region92: #{skip_att_unit_forward.1} parent=11 // pred_fallthru
          _
        // Predicated region
        $region93: #{skip_att_unit_forward.1} parent=11 // pred_check
          %p1001 = pneg %p550
        $region94: #{skip_att_unit_forward.1} parent=11 // pred_check_branch
          %1003 = sbr.rel (%p1001) target = $region96
        $region95: #{skip_att_unit_forward.1} parent=11 // pred_region
          _
        $region96: #{skip_att_unit_forward.1} parent=11 // pred_fallthru
          _
        // Predicated region
        $region97: #{skip_att_unit_forward.1} parent=11 // pred_check
          %p1004 = pneg %p571
        $region98: #{skip_att_unit_forward.1} parent=11 // pred_check_branch
          %1006 = sbr.rel (%p1004) target = $region100
        $region99: #{skip_att_unit_forward.1} parent=11 // pred_region
          _
        $region100: #{skip_att_unit_forward.1} parent=11 // pred_fallthru
          _
        // Predicated region
        $region101: #{skip_att_unit_forward.1} parent=11 // pred_check
          %p1007 = pneg %p592
        $region102: #{skip_att_unit_forward.1} parent=11 // pred_check_branch
          %1009 = sbr.rel (%p1007) target = $region104
        $region103: #{skip_att_unit_forward.1} parent=11 // pred_region
          _
        $region104: #{skip_att_unit_forward.1} parent=11 // pred_fallthru
          _
        // Predicated region
        $region105: #{skip_att_unit_forward.1} parent=11 // pred_check
          %p1010 = pneg %p613
        $region106: #{skip_att_unit_forward.1} parent=11 // pred_check_branch
          %1012 = sbr.rel (%p1010) target = $region108
        $region107: #{skip_att_unit_forward.1} parent=11 // pred_region
          _
        $region108: #{skip_att_unit_forward.1} parent=11 // pred_fallthru
          _
        // Predicated region
        $region109: #{skip_att_unit_forward.1} parent=11 // pred_check
          %p1013 = pneg %p634
        $region110: #{skip_att_unit_forward.1} parent=11 // pred_check_branch
          %1015 = sbr.rel (%p1013) target = $region112
        $region111: #{skip_att_unit_forward.1} parent=11 // pred_region
          _
        $region112: #{skip_att_unit_forward.1} parent=11 // pred_fallthru
          _
        // Predicated region
        $region113: #{skip_att_unit_forward.1} parent=11 // pred_check
          %p1016 = pneg %p655
        $region114: #{skip_att_unit_forward.1} parent=11 // pred_check_branch
          %1018 = sbr.rel (%p1016) target = $region116
        $region115: #{skip_att_unit_forward.1} parent=11 // pred_region
          _
        $region116: #{skip_att_unit_forward.1} parent=11 // pred_fallthru
          _
        // Predicated region
        $region117: #{skip_att_unit_forward.1} parent=11 // pred_check
          %p1019 = pneg %p676
        $region118: #{skip_att_unit_forward.1} parent=11 // pred_check_branch
          %1021 = sbr.rel (%p1019) target = $region120
        $region119: #{skip_att_unit_forward.1} parent=11 // pred_region
          _
        $region120: #{skip_att_unit_forward.1} parent=11 // pred_fallthru
          _
        // Predicated region
        $region121: #{skip_att_unit_forward.1} parent=11 // pred_check
          %p1022 = pneg %p697
        $region122: #{skip_att_unit_forward.1} parent=11 // pred_check_branch
          %1024 = sbr.rel (%p1022) target = $region124
        $region123: #{skip_att_unit_forward.1} parent=11 // pred_region
          _
        $region124: #{skip_att_unit_forward.1} parent=11 // pred_fallthru
          _
        // Predicated region
        $region125: #{skip_att_unit_forward.1} parent=11 // pred_check
          %p1025 = pneg %p718
        $region126: #{skip_att_unit_forward.1} parent=11 // pred_check_branch
          %1027 = sbr.rel (%p1025) target = $region128
        $region127: #{skip_att_unit_forward.1} parent=11 // pred_region
          _
        $region128: #{skip_att_unit_forward.1} parent=11 // pred_fallthru
          _
        // Predicated region
        $region129: #{skip_att_unit_forward.1} parent=11 // pred_check
          %p1028 = pneg %p739
        $region130: #{skip_att_unit_forward.1} parent=11 // pred_check_branch
          %1030 = sbr.rel (%p1028) target = $region132
        $region131: #{skip_att_unit_forward.1} parent=11 // pred_region
          _
        $region132: #{skip_att_unit_forward.1} parent=11 // pred_fallthru
          _
        // Predicated region
        $region133: #{skip_att_unit_forward.1} parent=11 // pred_check
          %p1031 = pneg %p760
        $region134: #{skip_att_unit_forward.1} parent=11 // pred_check_branch
          %1033 = sbr.rel (%p1031) target = $region136
        $region135: #{skip_att_unit_forward.1} parent=11 // pred_region
          _
        $region136: #{skip_att_unit_forward.1} parent=11 // pred_fallthru
          _
        // Predicated region
        $region137: #{skip_att_unit_forward.1} parent=11 // pred_check
          %p1034 = pneg %p781
        $region138: #{skip_att_unit_forward.1} parent=11 // pred_check_branch
          %1036 = sbr.rel (%p1034) target = $region140
        $region139: #{skip_att_unit_forward.1} parent=11 // pred_region
          _
        $region140: #{skip_att_unit_forward.1} parent=11 // pred_fallthru
          _
        // Predicated region
        $region141: #{skip_att_unit_forward.1} parent=11 // pred_check
          %p1037 = pneg %p802
        $region142: #{skip_att_unit_forward.1} parent=11 // pred_check_branch
          %1039 = sbr.rel (%p1037) target = $region144
        $region143: #{skip_att_unit_forward.1} parent=11 // pred_region
          _
        $region144: #{skip_att_unit_forward.1} parent=11 // pred_fallthru
          _
        // Predicated region
        $region145: #{skip_att_unit_forward.1} parent=11 // pred_check
          %p1040 = pneg %p823
        $region146: #{skip_att_unit_forward.1} parent=11 // pred_check_branch
          %1042 = sbr.rel (%p1040) target = $region148
        $region147: #{skip_att_unit_forward.1} parent=11 // pred_region
          _
        $region148: #{skip_att_unit_forward.1} parent=11 // pred_fallthru
          _
        // Predicated region
        $region149: #{skip_att_unit_forward.1} parent=11 // pred_check
          %p1043 = pneg %p844
        $region150: #{skip_att_unit_forward.1} parent=11 // pred_check_branch
          %1045 = sbr.rel (%p1043) target = $region152
        $region151: #{skip_att_unit_forward.1} parent=11 // pred_region
          _
        $region152: #{skip_att_unit_forward.1} parent=11 // pred_fallthru
          _
      $region12: #{skip_att_unit_forward.1} parent=5 // pred_fallthru
        _
      %p1046 = scmp.lt.s32.totalorder %s83, 2
      // Predicated region
      $region153: #{skip_att_unit_forward.1} parent=5 // pred_check
        %p1047 = pneg %p1046
      $region154: #{skip_att_unit_forward.1} parent=5 // pred_check_branch
        %1049 = sbr.rel (%p1047) target = $region156
      $region155: #{skip_att_unit_forward.1} parent=5 // pred_region
        // Predicated region
        $region157: #{skip_att_unit_forward.1} parent=155 // pred_check
          %p1050 = pneg %p103
        $region158: #{skip_att_unit_forward.1} parent=155 // pred_check_branch
          %1052 = sbr.rel (%p1050) target = $region160
        $region159: #{skip_att_unit_forward.1} parent=155 // pred_region
          %p1053 = scmp.lt.s32.totalorder %s83, 1
          %s1054 = scalar_select %p1053, %s83, 1
          %s1055 = smul.addr %s1054, 2
          %s1056 = smul.addr %s1055, 8
          %s1057 = scalar_lea.vmem %s1, %s1056
        $region160: #{skip_att_unit_forward.1} parent=155 // pred_fallthru
          _
      $region156: #{skip_att_unit_forward.1} parent=5 // pred_fallthru
        _
      %p1058 = scmp.le.s32.totalorder 1, %s83
      %p1059 = scmp.lt.s32.totalorder %s83, 3
      %p1060 = pnand %p1058, %p1059
      %p1061 = pneg %p1060
      // Predicated region
      $region161: #{skip_att_unit_forward.1} parent=5 // pred_check
        _
      $region162: #{skip_att_unit_forward.1} parent=5 // pred_check_branch
        %1063 = sbr.rel (%p1060) target = $region164
      $region163: #{skip_att_unit_forward.1} parent=5 // pred_region
        %s1064 = ssub.s32 %s83, 1
        // Predicated region
        $region165: #{skip_att_unit_forward.1} parent=163 // pred_check
          %p1065 = pneg %p193
        $region166: #{skip_att_unit_forward.1} parent=163 // pred_check_branch
          %1067 = sbr.rel (%p1065) target = $region168
        $region167: #{skip_att_unit_forward.1} parent=163 // pred_region
          %1068 = dma.done [#allocation3], 64
        $region168: #{skip_att_unit_forward.1} parent=163 // pred_fallthru
          _
        // Predicated region
        $region169: #{skip_att_unit_forward.1} parent=163 // pred_check
          %p1069 = pneg %p214
        $region170: #{skip_att_unit_forward.1} parent=163 // pred_check_branch
          %1071 = sbr.rel (%p1069) target = $region172
        $region171: #{skip_att_unit_forward.1} parent=163 // pred_region
          %1072 = dma.done [#allocation5], 64
        $region172: #{skip_att_unit_forward.1} parent=163 // pred_fallthru
          _
        // Predicated region
        $region173: #{skip_att_unit_forward.1} parent=163 // pred_check
          %p1073 = pneg %p235
        $region174: #{skip_att_unit_forward.1} parent=163 // pred_check_branch
          %1075 = sbr.rel (%p1073) target = $region176
        $region175: #{skip_att_unit_forward.1} parent=163 // pred_region
          %1076 = dma.done [#allocation5], 64
        $region176: #{skip_att_unit_forward.1} parent=163 // pred_fallthru
          _
        // Predicated region
        $region177: #{skip_att_unit_forward.1} parent=163 // pred_check
          %p1077 = pneg %p256
        $region178: #{skip_att_unit_forward.1} parent=163 // pred_check_branch
          %1079 = sbr.rel (%p1077) target = $region180
        $region179: #{skip_att_unit_forward.1} parent=163 // pred_region
          %1080 = dma.done [#allocation8], 64
        $region180: #{skip_att_unit_forward.1} parent=163 // pred_fallthru
          _
        // Predicated region
        $region181: #{skip_att_unit_forward.1} parent=163 // pred_check
          %p1081 = pneg %p277
        $region182: #{skip_att_unit_forward.1} parent=163 // pred_check_branch
          %1083 = sbr.rel (%p1081) target = $region184
        $region183: #{skip_att_unit_forward.1} parent=163 // pred_region
          %1084 = dma.done [#allocation8], 64
        $region184: #{skip_att_unit_forward.1} parent=163 // pred_fallthru
          _
        // Predicated region
        $region185: #{skip_att_unit_forward.1} parent=163 // pred_check
          %p1085 = pneg %p298
        $region186: #{skip_att_unit_forward.1} parent=163 // pred_check_branch
          %1087 = sbr.rel (%p1085) target = $region188
        $region187: #{skip_att_unit_forward.1} parent=163 // pred_region
          %1088 = dma.done [#allocation11], 64
        $region188: #{skip_att_unit_forward.1} parent=163 // pred_fallthru
          _
        // Predicated region
        $region189: #{skip_att_unit_forward.1} parent=163 // pred_check
          %p1089 = pneg %p445
        $region190: #{skip_att_unit_forward.1} parent=163 // pred_check_branch
          %1091 = sbr.rel (%p1089) target = $region192
        $region191: #{skip_att_unit_forward.1} parent=163 // pred_region
          %1092 = dma.done [#allocation11], 128
        $region192: #{skip_att_unit_forward.1} parent=163 // pred_fallthru
          _
        %p1093 = scmp.lt.s32.totalorder %s88, 1
        %s1094 = scalar_select %p1093, %s88, 1
        %s1095 = smul.addr %s1094, 2
        %s1096 = smul.addr %s1095, 8
        %s1097 = scalar_lea.vmem %s1, %s1096
        %p1098 = pneg %p109
        %p1099 = pneg %p106
        %p1100 = pneg %p130
        %p1101 = pneg %p127
        %p1102 = pneg %p151
        %p1103 = pneg %p148
        %p1104 = pneg %p172
        %p1105 = pneg %p169
        %p1106 = pneg %p193
        %p1107 = pneg %p190
        %p1108 = pneg %p214
        %p1109 = pneg %p211
        %p1110 = pneg %p235
        %p1111 = pneg %p232
        %p1112 = pneg %p256
        %p1113 = pneg %p253
        %p1114 = pneg %p277
        %p1115 = pneg %p274
        %p1116 = pneg %p298
        %p1117 = pneg %p295
        %p1118 = pneg %p319
        %p1119 = pneg %p316
        %p1120 = pneg %p340
        %p1121 = pneg %p337
        %p1122 = pneg %p361
        %p1123 = pneg %p358
        %p1124 = pneg %p382
        %p1125 = pneg %p379
        %p1126 = pneg %p403
        %p1127 = pneg %p400
        %p1128 = pneg %p424
        %p1129 = pneg %p421
        %p1130 = pneg %p445
        %p1131 = pneg %p442
        %p1132 = pneg %p466
        %p1133 = pneg %p463
        %p1134 = pneg %p487
        %p1135 = pneg %p484
        %p1136 = pneg %p508
        %p1137 = pneg %p505
        %p1138 = pneg %p529
        %p1139 = pneg %p526
        %p1140 = pneg %p550
        %p1141 = pneg %p547
        %p1142 = pneg %p571
        %p1143 = pneg %p568
        %p1144 = pneg %p592
        %p1145 = pneg %p589
        %p1146 = pneg %p613
        %p1147 = pneg %p610
        %p1148 = pneg %p634
        %p1149 = pneg %p631
        %p1150 = pneg %p655
        %p1151 = pneg %p652
        %p1152 = pneg %p676
        %p1153 = pneg %p673
        %p1154 = pneg %p697
        %p1155 = pneg %p694
        %p1156 = pneg %p718
        %p1157 = pneg %p715
        %p1158 = pneg %p739
        %p1159 = pneg %p736
        %p1160 = pneg %p760
        %p1161 = pneg %p757
        %p1162 = pneg %p781
        %p1163 = pneg %p778
        %p1164 = pneg %p802
        %p1165 = pneg %p799
        %p1166 = pneg %p823
        %p1167 = pneg %p820
        %p1168 = pneg %p844
        %p1169 = pneg %p841
        %p1170 = pneg %p870
        %p1171 = pneg %p867
        %p1172 = scmp.lt.s32.totalorder %s88, 1
        %s1173 = scalar_select %p1172, %s88, 1
        %s1174 = smul.addr %s1173, 8
        %s1175 = smul.addr %s1174, 8
        %s1176 = scalar_lea.vmem %s73, %s1175
        %p1177 = scmp.lt.s32.totalorder %s88, 1
        %s1178 = scalar_select %p1177, %s88, 1
        %s1179 = smul.addr %s1178, 2
        %s1180 = smul.addr %s1179, 8
        %s1181 = scalar_lea.vmem %s1, %s1180
        %p1182 = scmp.lt.s32.totalorder %s88, 1
        %s1183 = scalar_select %p1182, %s88, 1
        %s1184 = smul.addr %s1183, 8
        %s1185 = smul.addr %s1184, 8
        %s1186 = scalar_lea.vmem %s73, %s1185
        %v1187 = vld [vmem:[%s3] sm:$0xff]
        %v1188 = vld [vmem:[%s3 + $0x8] sm:$0xff]
        %v1189 = vld [vmem:[%s1181] sm:$0xff]
        %v1190 = vld [vmem:[%s1181 + $0x8] sm:$0xff]
        %v1191 = vld [vmem:[%s47] sm:$0xff]
        %1193 = vset.pattern.permute.xlu0 0
        %1194 = vperm.xlu0 %1193, %v1191
        %v1195 = vpop.permute.xlu0 %1194
        %v1197 = vmul.f32 %v1189, %v1195
        %v1198 = vmul.f32 %v1190, %v1195
        %v1199 = vld [vmem:[%s49] sm:$0xff]
        %1201 = vset.pattern.permute.xlu0 0
        %1202 = vperm.xlu0 %1201, %v1199
        %v1203 = vpop.permute.xlu0 %1202
        %v1205 = vadd.f32 %v1197, %v1203
        %v1206 = vadd.f32 %v1198, %v1203
        %v1207 = vmax.f32 %v1205, 0.0
        %v1208 = vmax.f32 %v1206, 0.0
        %v1209 = vld [vmem:[%s51] sm:$0xf]
        %vm1210 = vcmask 64512
        %v1212 = vsel %vm1210, %v1209, 0
        %1214 = vmatprep.subr.mxu0 0.0
        %1215 = vmatpush1.msra.mxu0 0.0
        %1216 = vmatprep.subr.mxu0 0.0
        %1217 = vmatpush1.msra.mxu0 0.0
        %1218 = vmatprep.subr.mxu0 0.0
        %1219 = vmatpush1.msra.mxu0 0.0
        %1220 = vmatprep.subr.mxu0 0.0
        %1221 = vmatpush1.msra.mxu0 0.0
        %1222 = vmatprep.subr.mxu0 0.0
        %1223 = vmatpush1.msra.mxu0 0.0
        %1224 = vmatprep.subr.mxu0 0.0
        %1225 = vmatpush1.msra.mxu0 0.0
        %1226 = vmatprep.subr.mxu0 0.0
        %1227 = vmatpush1.msra.mxu0 0.0
        %1228 = vmatprep.subr.mxu0 0.0
        %1229 = vmatpush1.msra.mxu0 0.0
        %1230 = vmatprep.subr.mxu0 0.0
        %1231 = vmatpush1.msra.mxu0 0.0
        %1232 = vmatprep.subr.mxu0 0.0
        %1233 = vmatpush1.msra.mxu0 0.0
        %1234 = vmatprep.subr.mxu0 0.0
        %1235 = vmatpush1.msra.mxu0 0.0
        %1236 = vmatprep.subr.mxu0 0.0
        %1237 = vmatpush1.msra.mxu0 0.0
        %1238 = vmatprep.subr.mxu0 0.0
        %1239 = vmatpush1.msra.mxu0 0.0
        %1240 = vmatprep.subr.mxu0 0.0
        %1241 = vmatpush1.msra.mxu0 0.0
        %1242 = vmatprep.subr.mxu0 0.0
        %1243 = vmatpush1.msra.mxu0 0.0
        %1244 = vmatprep.subr.mxu0 %v1208
        %1245 = vmatpush1.msra.mxu0 %v1207
        %1246 = vmatprep.subr.mxu0 0.0
        %1247 = vmatpush2.msra.mxu0 0.0
        %1248 = vmatprep.subr.mxu0 0.0
        %1249 = vmatpush2.msra.mxu0 0.0
        %1250 = vmatprep.subr.mxu0 0.0
        %1251 = vmatpush2.msra.mxu0 0.0
        %1252 = vmatprep.subr.mxu0 0.0
        %1253 = vmatpush2.msra.mxu0 0.0
        %1254 = vmatprep.subr.mxu0 0.0
        %1255 = vmatpush2.msra.mxu0 0.0
        %1256 = vmatprep.subr.mxu0 0.0
        %1257 = vmatpush2.msra.mxu0 0.0
        %1258 = vmatprep.subr.mxu0 0.0
        %1259 = vmatpush2.msra.mxu0 0.0
        %1260 = vmatprep.subr.mxu0 0.0
        %1261 = vmatpush2.msra.mxu0 0.0
        %1262 = vmatprep.subr.mxu0 0.0
        %1263 = vmatpush2.msra.mxu0 0.0
        %1264 = vmatprep.subr.mxu0 0.0
        %1265 = vmatpush2.msra.mxu0 0.0
        %1266 = vmatprep.subr.mxu0 0.0
        %1267 = vmatpush2.msra.mxu0 0.0
        %1268 = vmatprep.subr.mxu0 0.0
        %1269 = vmatpush2.msra.mxu0 0.0
        %1270 = vmatprep.subr.mxu0 0.0
        %1271 = vmatpush2.msra.mxu0 0.0
        %1272 = vmatprep.subr.mxu0 0.0
        %1273 = vmatpush2.msra.mxu0 0.0
        %1274 = vmatprep.subr.mxu0 0.0
        %1275 = vmatpush2.msra.mxu0 0.0
        %1276 = vmatprep.subr.mxu0 0.0
        %1277 = vmatpush2.msra.mxu0 0.0
        %1278 = vmatprep.mubr.f32.mxu0 0.0
        %1279 = vmatmul.mubr.f32.gmra.mxu0 %v1212
        %v1280 = vpop.f32.mrf.mxu0
        %v1281 = vadd.f32 0.0, %v1280
        %v1282 = vpop.f32.mrf.mxu0
        %v1283 = vadd.f32 0.0, %v1282
        %1284 = vdwg.mxu0
        %v1285 = vld [vmem:[%s55] sm:$0xf]
        %1287 = vset.pattern.permute.xlu0 0
        %1288 = vperm.xlu0 %1287, %v1285
        %v1289 = vpop.permute.xlu0 %1288
        %v1291 = vmul.f32 %v1281, %v1289
        %v1292 = vmul.f32 %v1283, %v1289
        %v1293 = vld [vmem:[%s57] sm:$0xf]
        %1295 = vset.pattern.permute.xlu0 0
        %1296 = vperm.xlu0 %1295, %v1293
        %v1297 = vpop.permute.xlu0 %1296
        %v1299 = vadd.f32 %v1291, %v1297
        %v1300 = vadd.f32 %v1292, %v1297
        %v1301 = vmax.f32 %v1299, 0.0
        %v1302 = vmax.f32 %v1300, 0.0
        %v1303 = vld [vmem:[%s59] sm:$0xff]
        %v1304 = vld [vmem:[%s59 + $0x8] sm:$0xff]
        %v1305 = vld [vmem:[%s53] sm:$0xff]
        %v1306 = vld [vmem:[%s53 + $0x8] sm:$0xff]
        %1308 = vset.pattern.permute.xlu0 0
        %1309 = vperm.xlu0 %1308, %v1305
        %v1310 = vpop.permute.xlu0 %1309
        %1313 = vset.pattern.permute.xlu0 0
        %1314 = vperm.xlu0 %1313, %v1306
        %v1315 = vpop.permute.xlu0 %1314
        %vm1317 = vcmask 31744
        %v1319 = vsel %vm1317, %v1303, 0
        %v1322 = vsel %vm1317, %v1304, 0
        %vm1324 = vcmask 1043456
        %v1326 = vsel %vm1324, %v1301, 0
        %v1329 = vsel %vm1324, %v1302, 0
        %1331 = vmatprep.subr.mxu0 0.0
        %1332 = vmatpush1.msra.mxu0 0.0
        %1333 = vmatprep.subr.mxu0 0.0
        %1334 = vmatpush1.msra.mxu0 0.0
        %1335 = vmatprep.subr.mxu0 0.0
        %1336 = vmatpush1.msra.mxu0 0.0
        %1337 = vmatprep.subr.mxu0 0.0
        %1338 = vmatpush1.msra.mxu0 0.0
        %1339 = vmatprep.subr.mxu0 0.0
        %1340 = vmatpush1.msra.mxu0 0.0
        %1341 = vmatprep.subr.mxu0 0.0
        %1342 = vmatpush1.msra.mxu0 0.0
        %1343 = vmatprep.subr.mxu0 0.0
        %1344 = vmatpush1.msra.mxu0 0.0
        %1345 = vmatprep.subr.mxu0 0.0
        %1346 = vmatpush1.msra.mxu0 0.0
        %1347 = vmatprep.subr.mxu0 0.0
        %1348 = vmatpush1.msra.mxu0 0.0
        %1349 = vmatprep.subr.mxu0 0.0
        %1350 = vmatpush1.msra.mxu0 0.0
        %1351 = vmatprep.subr.mxu0 0.0
        %1352 = vmatpush1.msra.mxu0 0.0
        %1353 = vmatprep.subr.mxu0 0.0
        %1354 = vmatpush1.msra.mxu0 0.0
        %1355 = vmatprep.subr.mxu0 0.0
        %1356 = vmatpush1.msra.mxu0 0.0
        %1357 = vmatprep.subr.mxu0 0.0
        %1358 = vmatpush1.msra.mxu0 0.0
        %1359 = vmatprep.subr.mxu0 0.0
        %1360 = vmatpush1.msra.mxu0 0.0
        %1361 = vmatprep.subr.mxu0 %v1329
        %1362 = vmatpush1.msra.mxu0 %v1326
        %1363 = vmatprep.subr.mxu0 0.0
        %1364 = vmatpush2.msra.mxu0 0.0
        %1365 = vmatprep.subr.mxu0 0.0
        %1366 = vmatpush2.msra.mxu0 0.0
        %1367 = vmatprep.subr.mxu0 0.0
        %1368 = vmatpush2.msra.mxu0 0.0
        %1369 = vmatprep.subr.mxu0 0.0
        %1370 = vmatpush2.msra.mxu0 0.0
        %1371 = vmatprep.subr.mxu0 0.0
        %1372 = vmatpush2.msra.mxu0 0.0
        %1373 = vmatprep.subr.mxu0 0.0
        %1374 = vmatpush2.msra.mxu0 0.0
        %1375 = vmatprep.subr.mxu0 0.0
        %1376 = vmatpush2.msra.mxu0 0.0
        %1377 = vmatprep.subr.mxu0 0.0
        %1378 = vmatpush2.msra.mxu0 0.0
        %1379 = vmatprep.subr.mxu0 0.0
        %1380 = vmatpush2.msra.mxu0 0.0
        %1381 = vmatprep.subr.mxu0 0.0
        %1382 = vmatpush2.msra.mxu0 0.0
        %1383 = vmatprep.subr.mxu0 0.0
        %1384 = vmatpush2.msra.mxu0 0.0
        %1385 = vmatprep.subr.mxu0 0.0
        %1386 = vmatpush2.msra.mxu0 0.0
        %1387 = vmatprep.subr.mxu0 0.0
        %1388 = vmatpush2.msra.mxu0 0.0
        %1389 = vmatprep.subr.mxu0 0.0
        %1390 = vmatpush2.msra.mxu0 0.0
        %1391 = vmatprep.subr.mxu0 0.0
        %1392 = vmatpush2.msra.mxu0 0.0
        %1393 = vmatprep.subr.mxu0 0.0
        %1394 = vmatpush2.msra.mxu0 0.0
        %1395 = vmatprep.mubr.f32.mxu0 0.0
        %1396 = vmatmul.mubr.f32.gmra.mxu0 %v1319
        %v1397 = vpop.f32.mrf.mxu0
        %v1398 = vadd.f32 %v1310, %v1397
        %v1399 = vpop.f32.mrf.mxu0
        %v1400 = vadd.f32 %v1310, %v1399
        %1401 = vmatprep.mubr.f32.mxu0 0.0
        %1402 = vmatmul.mubr.f32.gmra.mxu0 %v1322
        %v1403 = vpop.f32.mrf.mxu0
        %v1404 = vadd.f32 %v1315, %v1403
        %v1405 = vpop.f32.mrf.mxu0
        %v1406 = vadd.f32 %v1315, %v1405
        %1407 = vdwg.mxu0
        %v1408 = vld [vmem:[%s65] sm:$0xff]
        %v1409 = vld [vmem:[%s65 + $0x8] sm:$0xff]
        %1411 = vset.pattern.permute.xlu0 0
        %1412 = vperm.xlu0 %1411, %v1408
        %v1413 = vpop.permute.xlu0 %1412
        %1416 = vset.pattern.permute.xlu0 0
        %1417 = vperm.xlu0 %1416, %v1409
        %v1418 = vpop.permute.xlu0 %1417
        %v1420 = vmul.f32 %v1398, %v1413
        %v1421 = vmul.f32 %v1400, %v1413
        %v1422 = vmul.f32 %v1404, %v1418
        %v1423 = vmul.f32 %v1406, %v1418
        %v1424 = vld [vmem:[%s67] sm:$0xff]
        %v1425 = vld [vmem:[%s67 + $0x8] sm:$0xff]
        %1427 = vset.pattern.permute.xlu0 0
        %1428 = vperm.xlu0 %1427, %v1424
        %v1429 = vpop.permute.xlu0 %1428
        %1432 = vset.pattern.permute.xlu0 0
        %1433 = vperm.xlu0 %1432, %v1425
        %v1434 = vpop.permute.xlu0 %1433
        %v1436 = vadd.f32 %v1420, %v1429
        %v1437 = vadd.f32 %v1421, %v1429
        %v1438 = vadd.f32 %v1422, %v1434
        %v1439 = vadd.f32 %v1423, %v1434
        %v1440 = vmax.f32 %v1436, 0.0
        %v1441 = vmax.f32 %v1437, 0.0
        %v1442 = vmax.f32 %v1438, 0.0
        %v1443 = vmax.f32 %v1439, 0.0
        %v1444 = vadd.f32 %v1440, %v1441
        %1445 = vadd.xlane.f32.xlu0 %v1444
        %v1446 = vpop.xlane.xlu0 %1445
        %v1447 = vadd.f32 %v1442, %v1443
        %1448 = vadd.xlane.f32.xlu0 %v1447
        %v1449 = vpop.xlane.xlu0 %1448
        %v1450 = vrcp.pop 256.0
        %v1451 = vmul.f32 %v1446, %v1450
        %v1452 = vmul.f32 %v1449, %v1450
        %v1453 = vld [vmem:[%s69] sm:$0x3]
        %v1454 = vld [vmem:[%s61] sm:$0x3]
        %vm1455 = vcmask 130048
        %v1457 = vsel %vm1455, %v1453, 0
        %1459 = vmatprep.subr.mxu0 0.0
        %1460 = vmatpush1.msra.mxu0 0.0
        %1461 = vmatprep.subr.mxu0 0.0
        %1462 = vmatpush1.msra.mxu0 0.0
        %1463 = vmatprep.subr.mxu0 0.0
        %1464 = vmatpush1.msra.mxu0 0.0
        %1465 = vmatprep.subr.mxu0 0.0
        %1466 = vmatpush1.msra.mxu0 0.0
        %1467 = vmatprep.subr.mxu0 0.0
        %1468 = vmatpush1.msra.mxu0 0.0
        %1469 = vmatprep.subr.mxu0 0.0
        %1470 = vmatpush1.msra.mxu0 0.0
        %1471 = vmatprep.subr.mxu0 0.0
        %1472 = vmatpush1.msra.mxu0 0.0
        %1473 = vmatprep.subr.mxu0 0.0
        %1474 = vmatpush1.msra.mxu0 0.0
        %1475 = vmatprep.subr.mxu0 0.0
        %1476 = vmatpush1.msra.mxu0 0.0
        %1477 = vmatprep.subr.mxu0 0.0
        %1478 = vmatpush1.msra.mxu0 0.0
        %1479 = vmatprep.subr.mxu0 0.0
        %1480 = vmatpush1.msra.mxu0 0.0
        %1481 = vmatprep.subr.mxu0 0.0
        %1482 = vmatpush1.msra.mxu0 0.0
        %1483 = vmatprep.subr.mxu0 0.0
        %1484 = vmatpush1.msra.mxu0 0.0
        %1485 = vmatprep.subr.mxu0 0.0
        %1486 = vmatpush1.msra.mxu0 0.0
        %1487 = vmatprep.subr.mxu0 0.0
        %1488 = vmatpush1.msra.mxu0 %v1452
        %1489 = vmatprep.subr.mxu0 0.0
        %1490 = vmatpush1.msra.mxu0 %v1451
        %1491 = vmatprep.subr.mxu0 0.0
        %1492 = vmatpush2.msra.mxu0 0.0
        %1493 = vmatprep.subr.mxu0 0.0
        %1494 = vmatpush2.msra.mxu0 0.0
        %1495 = vmatprep.subr.mxu0 0.0
        %1496 = vmatpush2.msra.mxu0 0.0
        %1497 = vmatprep.subr.mxu0 0.0
        %1498 = vmatpush2.msra.mxu0 0.0
        %1499 = vmatprep.subr.mxu0 0.0
        %1500 = vmatpush2.msra.mxu0 0.0
        %1501 = vmatprep.subr.mxu0 0.0
        %1502 = vmatpush2.msra.mxu0 0.0
        %1503 = vmatprep.subr.mxu0 0.0
        %1504 = vmatpush2.msra.mxu0 0.0
        %1505 = vmatprep.subr.mxu0 0.0
        %1506 = vmatpush2.msra.mxu0 0.0
        %1507 = vmatprep.subr.mxu0 0.0
        %1508 = vmatpush2.msra.mxu0 0.0
        %1509 = vmatprep.subr.mxu0 0.0
        %1510 = vmatpush2.msra.mxu0 0.0
        %1511 = vmatprep.subr.mxu0 0.0
        %1512 = vmatpush2.msra.mxu0 0.0
        %1513 = vmatprep.subr.mxu0 0.0
        %1514 = vmatpush2.msra.mxu0 0.0
        %1515 = vmatprep.subr.mxu0 0.0
        %1516 = vmatpush2.msra.mxu0 0.0
        %1517 = vmatprep.subr.mxu0 0.0
        %1518 = vmatpush2.msra.mxu0 0.0
        %1519 = vmatprep.subr.mxu0 0.0
        %1520 = vmatpush2.msra.mxu0 0.0
        %1521 = vmatprep.subr.mxu0 0.0
        %1522 = vmatpush2.msra.mxu0 0.0
        %1523 = vmatprep.mubr.f32.mxu0 0.0
        %1524 = vmatmul.mubr.f32.gmra.mxu0 %v1457
        %v1525 = vpop.f32.mrf.mxu0
        %v1526 = vadd.f32 %v1454, %v1525
        %v1527 = vpop.f32.mrf.mxu0
        %1528 = vdwg.mxu0
        %v1529 = vmax.f32 %v1526, 0.0
        %v1530 = vld [vmem:[%s71] sm:$0xff]
        %v1531 = vld [vmem:[%s71 + $0x8] sm:$0xff]
        %v1532 = vld [vmem:[%s71 + $0x10] sm:$0xff]
        %v1533 = vld [vmem:[%s71 + $0x18] sm:$0xff]
        %v1534 = vld [vmem:[%s63] sm:$0xff]
        %v1535 = vld [vmem:[%s63 + $0x8] sm:$0xff]
        %v1536 = vld [vmem:[%s63 + $0x10] sm:$0xff]
        %v1537 = vld [vmem:[%s63 + $0x18] sm:$0xff]
        %vm1538 = vcmask 15360
        %v1540 = vsel %vm1538, %v1530, 0
        %v1543 = vsel %vm1538, %v1531, 0
        %v1546 = vsel %vm1538, %v1532, 0
        %v1549 = vsel %vm1538, %v1533, 0
        %vm1551 = vcmask 1041408
        %v1553 = vsel %vm1551, %v1529, 0
        %1555 = vmatprep.subr.mxu0 0.0
        %1556 = vmatpush1.msra.mxu0 0.0
        %1557 = vmatprep.subr.mxu0 0.0
        %1558 = vmatpush1.msra.mxu0 0.0
        %1559 = vmatprep.subr.mxu0 0.0
        %1560 = vmatpush1.msra.mxu0 0.0
        %1561 = vmatprep.subr.mxu0 0.0
        %1562 = vmatpush1.msra.mxu0 0.0
        %1563 = vmatprep.subr.mxu0 0.0
        %1564 = vmatpush1.msra.mxu0 0.0
        %1565 = vmatprep.subr.mxu0 0.0
        %1566 = vmatpush1.msra.mxu0 0.0
        %1567 = vmatprep.subr.mxu0 0.0
        %1568 = vmatpush1.msra.mxu0 0.0
        %1569 = vmatprep.subr.mxu0 0.0
        %1570 = vmatpush1.msra.mxu0 0.0
        %1571 = vmatprep.subr.mxu0 0.0
        %1572 = vmatpush1.msra.mxu0 0.0
        %1573 = vmatprep.subr.mxu0 0.0
        %1574 = vmatpush1.msra.mxu0 0.0
        %1575 = vmatprep.subr.mxu0 0.0
        %1576 = vmatpush1.msra.mxu0 0.0
        %1577 = vmatprep.subr.mxu0 0.0
        %1578 = vmatpush1.msra.mxu0 0.0
        %1579 = vmatprep.subr.mxu0 0.0
        %1580 = vmatpush1.msra.mxu0 0.0
        %1581 = vmatprep.subr.mxu0 0.0
        %1582 = vmatpush1.msra.mxu0 0.0
        %1583 = vmatprep.subr.mxu0 0.0
        %1584 = vmatpush1.msra.mxu0 0.0
        %1585 = vmatprep.subr.mxu0 0.0
        %1586 = vmatpush1.msra.mxu0 %v1553
        %1587 = vmatprep.subr.mxu0 0.0
        %1588 = vmatpush2.msra.mxu0 0.0
        %1589 = vmatprep.subr.mxu0 0.0
        %1590 = vmatpush2.msra.mxu0 0.0
        %1591 = vmatprep.subr.mxu0 0.0
        %1592 = vmatpush2.msra.mxu0 0.0
        %1593 = vmatprep.subr.mxu0 0.0
        %1594 = vmatpush2.msra.mxu0 0.0
        %1595 = vmatprep.subr.mxu0 0.0
        %1596 = vmatpush2.msra.mxu0 0.0
        %1597 = vmatprep.subr.mxu0 0.0
        %1598 = vmatpush2.msra.mxu0 0.0
        %1599 = vmatprep.subr.mxu0 0.0
        %1600 = vmatpush2.msra.mxu0 0.0
        %1601 = vmatprep.subr.mxu0 0.0
        %1602 = vmatpush2.msra.mxu0 0.0
        %1603 = vmatprep.subr.mxu0 0.0
        %1604 = vmatpush2.msra.mxu0 0.0
        %1605 = vmatprep.subr.mxu0 0.0
        %1606 = vmatpush2.msra.mxu0 0.0
        %1607 = vmatprep.subr.mxu0 0.0
        %1608 = vmatpush2.msra.mxu0 0.0
        %1609 = vmatprep.subr.mxu0 0.0
        %1610 = vmatpush2.msra.mxu0 0.0
        %1611 = vmatprep.subr.mxu0 0.0
        %1612 = vmatpush2.msra.mxu0 0.0
        %1613 = vmatprep.subr.mxu0 0.0
        %1614 = vmatpush2.msra.mxu0 0.0
        %1615 = vmatprep.subr.mxu0 0.0
        %1616 = vmatpush2.msra.mxu0 0.0
        %1617 = vmatprep.subr.mxu0 0.0
        %1618 = vmatpush2.msra.mxu0 0.0
        %1619 = vmatprep.mubr.f32.mxu0 0.0
        %1620 = vmatmul.mubr.f32.gmra.mxu0 %v1540
        %v1621 = vpop.f32.mrf.mxu0
        %v1622 = vadd.f32 %v1534, %v1621
        %v1623 = vpop.f32.mrf.mxu0
        %1624 = vmatprep.mubr.f32.mxu0 0.0
        %1625 = vmatmul.mubr.f32.gmra.mxu0 %v1543
        %v1626 = vpop.f32.mrf.mxu0
        %v1627 = vadd.f32 %v1535, %v1626
        %v1628 = vpop.f32.mrf.mxu0
        %1629 = vmatprep.mubr.f32.mxu0 0.0
        %1630 = vmatmul.mubr.f32.gmra.mxu0 %v1546
        %v1631 = vpop.f32.mrf.mxu0
        %v1632 = vadd.f32 %v1536, %v1631
        %v1633 = vpop.f32.mrf.mxu0
        %1634 = vmatprep.mubr.f32.mxu0 0.0
        %1635 = vmatmul.mubr.f32.gmra.mxu0 %v1549
        %v1636 = vpop.f32.mrf.mxu0
        %v1637 = vadd.f32 %v1537, %v1636
        %v1638 = vpop.f32.mrf.mxu0
        %1639 = vdwg.mxu0
        %v1640 = vxor.u32 %v1622, 2147483648
        %v1641 = vxor.u32 %v1627, 2147483648
        %v1642 = vxor.u32 %v1632, 2147483648
        %v1643 = vxor.u32 %v1637, 2147483648
        %v1644 = vmul.f32 %v1640, 1.442695
        %v1645 = vpow.pop %v1644
        %v1646 = vmul.f32 %v1641, 1.442695
        %v1647 = vpow.pop %v1646
        %v1648 = vmul.f32 %v1642, 1.442695
        %v1649 = vpow.pop %v1648
        %v1650 = vmul.f32 %v1643, 1.442695
        %v1651 = vpow.pop %v1650
        %v1652 = vadd.f32 %v1645, 1.0
        %v1653 = vadd.f32 %v1647, 1.0
        %v1654 = vadd.f32 %v1649, 1.0
        %v1655 = vadd.f32 %v1651, 1.0
        %v1656 = vrcp.pop %v1652
        %v1657 = vmul.f32 1.0, %v1656
        %v1658 = vrcp.pop %v1653
        %v1659 = vmul.f32 1.0, %v1658
        %v1660 = vrcp.pop %v1654
        %v1661 = vmul.f32 1.0, %v1660
        %v1662 = vrcp.pop %v1655
        %v1663 = vmul.f32 1.0, %v1662
        %v1664 = vld [vmem:[%s5] sm:$0xff]
        %v1665 = vld [vmem:[%s5 + $0x8] sm:$0xff]
        %1667 = vset.pattern.permute.xlu0 0
        %1668 = vperm.xlu0 %1667, %v1664
        %v1669 = vpop.permute.xlu0 %1668
        %1672 = vset.pattern.permute.xlu0 0
        %1673 = vperm.xlu0 %1672, %v1665
        %v1674 = vpop.permute.xlu0 %1673
        %v1676 = vmul.f32 %v1398, %v1669
        %v1677 = vmul.f32 %v1400, %v1669
        %v1678 = vmul.f32 %v1404, %v1674
        %v1679 = vmul.f32 %v1406, %v1674
        %v1680 = vld [vmem:[%s7] sm:$0xff]
        %v1681 = vld [vmem:[%s7 + $0x8] sm:$0xff]
        %1683 = vset.pattern.permute.xlu0 0
        %1684 = vperm.xlu0 %1683, %v1680
        %v1685 = vpop.permute.xlu0 %1684
        %1688 = vset.pattern.permute.xlu0 0
        %1689 = vperm.xlu0 %1688, %v1681
        %v1690 = vpop.permute.xlu0 %1689
        %v1692 = vadd.f32 %v1676, %v1685
        %v1693 = vadd.f32 %v1677, %v1685
        %v1694 = vadd.f32 %v1678, %v1690
        %v1695 = vadd.f32 %v1679, %v1690
        %v1696 = vmax.f32 %v1692, 0.0
        %v1697 = vmax.f32 %v1693, 0.0
        %v1698 = vmax.f32 %v1694, 0.0
        %v1699 = vmax.f32 %v1695, 0.0
        %v1700 = vld [vmem:[#allocation2] sm:$0xf]
        %v1702 = vsel %vm1455, %v1700, 0
        %1704 = vmatprep.subr.mxu0 0.0
        %1705 = vmatpush1.msra.mxu0 0.0
        %1706 = vmatprep.subr.mxu0 0.0
        %1707 = vmatpush1.msra.mxu0 0.0
        %1708 = vmatprep.subr.mxu0 0.0
        %1709 = vmatpush1.msra.mxu0 0.0
        %1710 = vmatprep.subr.mxu0 0.0
        %1711 = vmatpush1.msra.mxu0 0.0
        %1712 = vmatprep.subr.mxu0 0.0
        %1713 = vmatpush1.msra.mxu0 0.0
        %1714 = vmatprep.subr.mxu0 0.0
        %1715 = vmatpush1.msra.mxu0 0.0
        %1716 = vmatprep.subr.mxu0 0.0
        %1717 = vmatpush1.msra.mxu0 0.0
        %1718 = vmatprep.subr.mxu0 0.0
        %1719 = vmatpush1.msra.mxu0 0.0
        %1720 = vmatprep.subr.mxu0 0.0
        %1721 = vmatpush1.msra.mxu0 0.0
        %1722 = vmatprep.subr.mxu0 0.0
        %1723 = vmatpush1.msra.mxu0 0.0
        %1724 = vmatprep.subr.mxu0 0.0
        %1725 = vmatpush1.msra.mxu0 0.0
        %1726 = vmatprep.subr.mxu0 0.0
        %1727 = vmatpush1.msra.mxu0 0.0
        %1728 = vmatprep.subr.mxu0 0.0
        %1729 = vmatpush1.msra.mxu0 0.0
        %1730 = vmatprep.subr.mxu0 0.0
        %1731 = vmatpush1.msra.mxu0 0.0
        %1732 = vmatprep.subr.mxu0 %v1699
        %1733 = vmatpush1.msra.mxu0 %v1698
        %1734 = vmatprep.subr.mxu0 %v1697
        %1735 = vmatpush1.msra.mxu0 %v1696
        %1736 = vmatprep.subr.mxu0 0.0
        %1737 = vmatpush2.msra.mxu0 0.0
        %1738 = vmatprep.subr.mxu0 0.0
        %1739 = vmatpush2.msra.mxu0 0.0
        %1740 = vmatprep.subr.mxu0 0.0
        %1741 = vmatpush2.msra.mxu0 0.0
        %1742 = vmatprep.subr.mxu0 0.0
        %1743 = vmatpush2.msra.mxu0 0.0
        %1744 = vmatprep.subr.mxu0 0.0
        %1745 = vmatpush2.msra.mxu0 0.0
        %1746 = vmatprep.subr.mxu0 0.0
        %1747 = vmatpush2.msra.mxu0 0.0
        %1748 = vmatprep.subr.mxu0 0.0
        %1749 = vmatpush2.msra.mxu0 0.0
        %1750 = vmatprep.subr.mxu0 0.0
        %1751 = vmatpush2.msra.mxu0 0.0
        %1752 = vmatprep.subr.mxu0 0.0
        %1753 = vmatpush2.msra.mxu0 0.0
        %1754 = vmatprep.subr.mxu0 0.0
        %1755 = vmatpush2.msra.mxu0 0.0
        %1756 = vmatprep.subr.mxu0 0.0
        %1757 = vmatpush2.msra.mxu0 0.0
        %1758 = vmatprep.subr.mxu0 0.0
        %1759 = vmatpush2.msra.mxu0 0.0
        %1760 = vmatprep.subr.mxu0 0.0
        %1761 = vmatpush2.msra.mxu0 0.0
        %1762 = vmatprep.subr.mxu0 0.0
        %1763 = vmatpush2.msra.mxu0 0.0
        %1764 = vmatprep.subr.mxu0 0.0
        %1765 = vmatpush2.msra.mxu0 0.0
        %1766 = vmatprep.subr.mxu0 0.0
        %1767 = vmatpush2.msra.mxu0 0.0
        %1768 = vmatprep.mubr.f32.mxu0 0.0
        %1769 = vmatmul.mubr.f32.gmra.mxu0 %v1702
        %v1770 = vpop.f32.mrf.mxu0
        %v1771 = vadd.f32 0.0, %v1770
        %v1772 = vpop.f32.mrf.mxu0
        %v1773 = vadd.f32 0.0, %v1772
        %1774 = vdwg.mxu0
        %v1775 = vld [vmem:[#allocation4] sm:$0xf]
        %1777 = vset.pattern.permute.xlu0 0
        %1778 = vperm.xlu0 %1777, %v1775
        %v1779 = vpop.permute.xlu0 %1778
        %v1781 = vmul.f32 %v1771, %v1779
        %v1782 = vmul.f32 %v1773, %v1779
        %v1783 = vld [vmem:[#allocation6] sm:$0xf]
        %1785 = vset.pattern.permute.xlu0 0
        %1786 = vperm.xlu0 %1785, %v1783
        %v1787 = vpop.permute.xlu0 %1786
        %v1789 = vadd.f32 %v1781, %v1787
        %v1790 = vadd.f32 %v1782, %v1787
        %v1791 = vmax.f32 %v1789, 0.0
        %v1792 = vmax.f32 %v1790, 0.0
        %1793 = vrot.lane.b32.xlu0 %v1791, 17
        %v1794 = vpop.permute.xlu0 %1793
        %1795 = vrot.lane.b32.xlu0 %v1792, 17
        %v1796 = vpop.permute.xlu0 %1795
        %v1797 = vlaneseq
        %v1798 = vand.u32 %v1797, 127
        %vm1799 = vcmp.lt.s32.totalorder %v1798, 17
        %v1800 = vsel %vm1799, %v1794, %v1796
        %v1801 = vsel %vm1799, %v1796, %v1794
        %v1802 = vlaneseq
        %v1803 = vshrl.u32 %v1802, 7
        %v1804 = vsub.s32 0, %v1803
        %v1805 = vrot.slane %v1187, %v1804
        %v1806 = vlaneseq
        %v1807 = vshrl.u32 %v1806, 7
        %v1808 = vsub.s32 0, %v1807
        %v1809 = vrot.slane %v1188, %v1808
        %v1810 = vmul.f32 %v1801, %v1805
        %v1811 = vmul.f32 %v1800, %v1809
        %1812 = vrot.lane.b32.xlu0 %v1791, 16
        %v1813 = vpop.permute.xlu0 %1812
        %1814 = vrot.lane.b32.xlu0 %v1792, 16
        %v1815 = vpop.permute.xlu0 %1814
        %vm1816 = vcmp.lt.s32.totalorder %v1798, 16
        %v1817 = vsel %vm1816, %v1813, %v1815
        %v1818 = vsel %vm1816, %v1815, %v1813
        %v1819 = vlaneseq
        %v1820 = vshrl.u32 %v1819, 7
        %v1821 = vsub.s32 1, %v1820
        %v1822 = vrot.slane %v1187, %v1821
        %v1823 = vlaneseq
        %v1824 = vshrl.u32 %v1823, 7
        %v1825 = vsub.s32 1, %v1824
        %v1826 = vrot.slane %v1188, %v1825
        %v1827 = vmul.f32 %v1818, %v1822
        %v1828 = vmul.f32 %v1817, %v1826
        %1829 = vrot.lane.b32.xlu0 %v1791, 15
        %v1830 = vpop.permute.xlu0 %1829
        %1831 = vrot.lane.b32.xlu0 %v1792, 15
        %v1832 = vpop.permute.xlu0 %1831
        %vm1833 = vcmp.lt.s32.totalorder %v1798, 15
        %v1834 = vsel %vm1833, %v1830, %v1832
        %v1835 = vsel %vm1833, %v1832, %v1830
        %v1836 = vlaneseq
        %v1837 = vshrl.u32 %v1836, 7
        %v1838 = vsub.s32 2, %v1837
        %v1839 = vrot.slane %v1187, %v1838
        %v1840 = vlaneseq
        %v1841 = vshrl.u32 %v1840, 7
        %v1842 = vsub.s32 2, %v1841
        %v1843 = vrot.slane %v1188, %v1842
        %v1844 = vmul.f32 %v1835, %v1839
        %v1845 = vmul.f32 %v1834, %v1843
        %1846 = vrot.lane.b32.xlu0 %v1791, 1
        %v1847 = vpop.permute.xlu0 %1846
        %1848 = vrot.lane.b32.xlu0 %v1792, 1
        %v1849 = vpop.permute.xlu0 %1848
        %vm1850 = vcmp.lt.s32.totalorder %v1798, 1
        %v1851 = vsel %vm1850, %v1847, %v1849
        %v1852 = vsel %vm1850, %v1849, %v1847
        %v1853 = vlaneseq
        %v1854 = vshrl.u32 %v1853, 7
        %v1855 = vsub.s32 3, %v1854
        %v1856 = vrot.slane %v1187, %v1855
        %v1857 = vlaneseq
        %v1858 = vshrl.u32 %v1857, 7
        %v1859 = vsub.s32 3, %v1858
        %v1860 = vrot.slane %v1188, %v1859
        %v1861 = vmul.f32 %v1852, %v1856
        %v1862 = vmul.f32 %v1851, %v1860
        %1863 = vrot.lane.b32.xlu0 %v1791, 127
        %v1864 = vpop.permute.xlu0 %1863
        %1865 = vrot.lane.b32.xlu0 %v1792, 127
        %v1866 = vpop.permute.xlu0 %1865
        %vm1867 = vcmp.lt.s32.totalorder %v1798, 127
        %v1868 = vsel %vm1867, %v1864, %v1866
        %v1869 = vsel %vm1867, %v1866, %v1864
        %v1870 = vlaneseq
        %v1871 = vshrl.u32 %v1870, 7
        %v1872 = vsub.s32 4, %v1871
        %v1873 = vrot.slane %v1187, %v1872
        %v1874 = vlaneseq
        %v1875 = vshrl.u32 %v1874, 7
        %v1876 = vsub.s32 4, %v1875
        %v1877 = vrot.slane %v1188, %v1876
        %v1878 = vmul.f32 %v1868, %v1873
        %v1879 = vmul.f32 %v1869, %v1877
        %1880 = vrot.lane.b32.xlu0 %v1791, 113
        %v1881 = vpop.permute.xlu0 %1880
        %1882 = vrot.lane.b32.xlu0 %v1792, 113
        %v1883 = vpop.permute.xlu0 %1882
        %vm1884 = vcmp.lt.s32.totalorder %v1798, 113
        %v1885 = vsel %vm1884, %v1881, %v1883
        %v1886 = vsel %vm1884, %v1883, %v1881
        %v1887 = vlaneseq
        %v1888 = vshrl.u32 %v1887, 7
        %v1889 = vsub.s32 5, %v1888
        %v1890 = vrot.slane %v1187, %v1889
        %v1891 = vlaneseq
        %v1892 = vshrl.u32 %v1891, 7
        %v1893 = vsub.s32 5, %v1892
        %v1894 = vrot.slane %v1188, %v1893
        %v1895 = vmul.f32 %v1885, %v1890
        %v1896 = vmul.f32 %v1886, %v1894
        %1897 = vrot.lane.b32.xlu0 %v1791, 112
        %v1898 = vpop.permute.xlu0 %1897
        %1899 = vrot.lane.b32.xlu0 %v1792, 112
        %v1900 = vpop.permute.xlu0 %1899
        %vm1901 = vcmp.lt.s32.totalorder %v1798, 112
        %v1902 = vsel %vm1901, %v1898, %v1900
        %v1903 = vsel %vm1901, %v1900, %v1898
        %v1904 = vlaneseq
        %v1905 = vshrl.u32 %v1904, 7
        %v1906 = vsub.s32 6, %v1905
        %v1907 = vrot.slane %v1187, %v1906
        %v1908 = vlaneseq
        %v1909 = vshrl.u32 %v1908, 7
        %v1910 = vsub.s32 6, %v1909
        %v1911 = vrot.slane %v1188, %v1910
        %v1912 = vmul.f32 %v1902, %v1907
        %v1913 = vmul.f32 %v1903, %v1911
        %1914 = vrot.lane.b32.xlu0 %v1791, 111
        %v1915 = vpop.permute.xlu0 %1914
        %1916 = vrot.lane.b32.xlu0 %v1792, 111
        %v1917 = vpop.permute.xlu0 %1916
        %vm1918 = vcmp.lt.s32.totalorder %v1798, 111
        %v1919 = vsel %vm1918, %v1915, %v1917
        %v1920 = vsel %vm1918, %v1917, %v1915
        %v1921 = vlaneseq
        %v1922 = vshrl.u32 %v1921, 7
        %v1923 = vsub.s32 7, %v1922
        %v1924 = vrot.slane %v1187, %v1923
        %v1925 = vlaneseq
        %v1926 = vshrl.u32 %v1925, 7
        %v1927 = vsub.s32 7, %v1926
        %v1928 = vrot.slane %v1188, %v1927
        %v1929 = vmul.f32 %v1919, %v1924
        %v1930 = vmul.f32 %v1920, %v1928
        %v1933 = vrot.slane %v1827, 4
        %v1934 = vrot.slane %v1828, 4
        %v1939 = vrot.slane %v1861, 4
        %v1940 = vrot.slane %v1862, 4
        %v1945 = vrot.slane %v1878, 4
        %v1946 = vrot.slane %v1879, 4
        %v1951 = vrot.slane %v1912, 4
        %v1952 = vrot.slane %v1913, 4
        %v1955 = vsel %vm1324, %v1810, %v1933
        %v1956 = vsel %vm1324, %v1811, %v1934
        %v1957 = vsel %vm1324, %v1844, %v1939
        %v1958 = vsel %vm1324, %v1845, %v1940
        %v1959 = vsel %vm1324, %v1791, %v1945
        %v1960 = vsel %vm1324, %v1792, %v1946
        %v1961 = vsel %vm1324, %v1895, %v1951
        %v1962 = vsel %vm1324, %v1896, %v1952
        %v1963 = vld [vmem:[#allocation7] sm:$0xf]
        %vm1964 = vcmask 293888
        %v1966 = vsel %vm1964, %v1963, 0
        %v1969 = vsel %vm1324, %v1929, 0
        %v1972 = vsel %vm1324, %v1930, 0
        %1974 = vmatprep.subr.mxu0 0.0
        %1975 = vmatpush1.msra.mxu0 0.0
        %1976 = vmatprep.subr.mxu0 0.0
        %1977 = vmatpush1.msra.mxu0 0.0
        %1978 = vmatprep.subr.mxu0 0.0
        %1979 = vmatpush1.msra.mxu0 0.0
        %1980 = vmatprep.subr.mxu0 0.0
        %1981 = vmatpush1.msra.mxu0 0.0
        %1982 = vmatprep.subr.mxu0 0.0
        %1983 = vmatpush1.msra.mxu0 0.0
        %1984 = vmatprep.subr.mxu0 0.0
        %1985 = vmatpush1.msra.mxu0 0.0
        %1986 = vmatprep.subr.mxu0 0.0
        %1987 = vmatpush1.msra.mxu0 0.0
        %1988 = vmatprep.subr.mxu0 0.0
        %1989 = vmatpush1.msra.mxu0 0.0
        %1990 = vmatprep.subr.mxu0 0.0
        %1991 = vmatpush1.msra.mxu0 0.0
        %1992 = vmatprep.subr.mxu0 0.0
        %1993 = vmatpush1.msra.mxu0 0.0
        %1994 = vmatprep.subr.mxu0 0.0
        %1995 = vmatpush1.msra.mxu0 0.0
        %1996 = vmatprep.subr.mxu0 %v1972
        %1997 = vmatpush1.msra.mxu0 %v1969
        %1998 = vmatprep.subr.mxu0 %v1962
        %1999 = vmatpush1.msra.mxu0 %v1961
        %2000 = vmatprep.subr.mxu0 %v1960
        %2001 = vmatpush1.msra.mxu0 %v1959
        %2002 = vmatprep.subr.mxu0 %v1958
        %2003 = vmatpush1.msra.mxu0 %v1957
        %2004 = vmatprep.subr.mxu0 %v1956
        %2005 = vmatpush1.msra.mxu0 %v1955
        %2006 = vmatprep.subr.mxu0 0.0
        %2007 = vmatpush2.msra.mxu0 0.0
        %2008 = vmatprep.subr.mxu0 0.0
        %2009 = vmatpush2.msra.mxu0 0.0
        %2010 = vmatprep.subr.mxu0 0.0
        %2011 = vmatpush2.msra.mxu0 0.0
        %2012 = vmatprep.subr.mxu0 0.0
        %2013 = vmatpush2.msra.mxu0 0.0
        %2014 = vmatprep.subr.mxu0 0.0
        %2015 = vmatpush2.msra.mxu0 0.0
        %2016 = vmatprep.subr.mxu0 0.0
        %2017 = vmatpush2.msra.mxu0 0.0
        %2018 = vmatprep.subr.mxu0 0.0
        %2019 = vmatpush2.msra.mxu0 0.0
        %2020 = vmatprep.subr.mxu0 0.0
        %2021 = vmatpush2.msra.mxu0 0.0
        %2022 = vmatprep.subr.mxu0 0.0
        %2023 = vmatpush2.msra.mxu0 0.0
        %2024 = vmatprep.subr.mxu0 0.0
        %2025 = vmatpush2.msra.mxu0 0.0
        %2026 = vmatprep.subr.mxu0 0.0
        %2027 = vmatpush2.msra.mxu0 0.0
        %2028 = vmatprep.subr.mxu0 0.0
        %2029 = vmatpush2.msra.mxu0 0.0
        %2030 = vmatprep.subr.mxu0 0.0
        %2031 = vmatpush2.msra.mxu0 0.0
        %2032 = vmatprep.subr.mxu0 0.0
        %2033 = vmatpush2.msra.mxu0 0.0
        %2034 = vmatprep.subr.mxu0 0.0
        %2035 = vmatpush2.msra.mxu0 0.0
        %2036 = vmatprep.subr.mxu0 0.0
        %2037 = vmatpush2.msra.mxu0 0.0
        %2038 = vmatprep.mubr.f32.mxu0 0.0
        %2039 = vmatmul.mubr.f32.gmra.mxu0 %v1966
        %v2040 = vpop.f32.mrf.mxu0
        %v2041 = vadd.f32 0.0, %v2040
        %v2042 = vpop.f32.mrf.mxu0
        %v2043 = vadd.f32 0.0, %v2042
        %2044 = vdwg.mxu0
        %v2045 = vld [vmem:[#allocation9] sm:$0xf]
        %2047 = vset.pattern.permute.xlu0 0
        %2048 = vperm.xlu0 %2047, %v2045
        %v2049 = vpop.permute.xlu0 %2048
        %v2051 = vmul.f32 %v2041, %v2049
        %v2052 = vmul.f32 %v2043, %v2049
        %v2053 = vld [vmem:[#allocation10] sm:$0xf]
        %2055 = vset.pattern.permute.xlu0 0
        %2056 = vperm.xlu0 %2055, %v2053
        %v2057 = vpop.permute.xlu0 %2056
        %v2059 = vadd.f32 %v2051, %v2057
        %v2060 = vadd.f32 %v2052, %v2057
        %v2061 = vmax.f32 %v2059, 0.0
        %v2062 = vmax.f32 %v2060, 0.0
        %v2063 = vld [vmem:[%s21] sm:$0xff]
        %v2064 = vld [vmem:[%s21 + $0x8] sm:$0xff]
        %v2066 = vsel %vm1317, %v2063, 0
        %v2069 = vsel %vm1317, %v2064, 0
        %v2072 = vsel %vm1324, %v2061, 0
        %v2075 = vsel %vm1324, %v2062, 0
        %2077 = vmatprep.subr.mxu0 0.0
        %2078 = vmatpush1.msra.mxu0 0.0
        %2079 = vmatprep.subr.mxu0 0.0
        %2080 = vmatpush1.msra.mxu0 0.0
        %2081 = vmatprep.subr.mxu0 0.0
        %2082 = vmatpush1.msra.mxu0 0.0
        %2083 = vmatprep.subr.mxu0 0.0
        %2084 = vmatpush1.msra.mxu0 0.0
        %2085 = vmatprep.subr.mxu0 0.0
        %2086 = vmatpush1.msra.mxu0 0.0
        %2087 = vmatprep.subr.mxu0 0.0
        %2088 = vmatpush1.msra.mxu0 0.0
        %2089 = vmatprep.subr.mxu0 0.0
        %2090 = vmatpush1.msra.mxu0 0.0
        %2091 = vmatprep.subr.mxu0 0.0
        %2092 = vmatpush1.msra.mxu0 0.0
        %2093 = vmatprep.subr.mxu0 0.0
        %2094 = vmatpush1.msra.mxu0 0.0
        %2095 = vmatprep.subr.mxu0 0.0
        %2096 = vmatpush1.msra.mxu0 0.0
        %2097 = vmatprep.subr.mxu0 0.0
        %2098 = vmatpush1.msra.mxu0 0.0
        %2099 = vmatprep.subr.mxu0 0.0
        %2100 = vmatpush1.msra.mxu0 0.0
        %2101 = vmatprep.subr.mxu0 0.0
        %2102 = vmatpush1.msra.mxu0 0.0
        %2103 = vmatprep.subr.mxu0 0.0
        %2104 = vmatpush1.msra.mxu0 0.0
        %2105 = vmatprep.subr.mxu0 0.0
        %2106 = vmatpush1.msra.mxu0 0.0
        %2107 = vmatprep.subr.mxu0 %v2075
        %2108 = vmatpush1.msra.mxu0 %v2072
        %2109 = vmatprep.subr.mxu0 0.0
        %2110 = vmatpush2.msra.mxu0 0.0
        %2111 = vmatprep.subr.mxu0 0.0
        %2112 = vmatpush2.msra.mxu0 0.0
        %2113 = vmatprep.subr.mxu0 0.0
        %2114 = vmatpush2.msra.mxu0 0.0
        %2115 = vmatprep.subr.mxu0 0.0
        %2116 = vmatpush2.msra.mxu0 0.0
        %2117 = vmatprep.subr.mxu0 0.0
        %2118 = vmatpush2.msra.mxu0 0.0
        %2119 = vmatprep.subr.mxu0 0.0
        %2120 = vmatpush2.msra.mxu0 0.0
        %2121 = vmatprep.subr.mxu0 0.0
        %2122 = vmatpush2.msra.mxu0 0.0
        %2123 = vmatprep.subr.mxu0 0.0
        %2124 = vmatpush2.msra.mxu0 0.0
        %2125 = vmatprep.subr.mxu0 0.0
        %2126 = vmatpush2.msra.mxu0 0.0
        %2127 = vmatprep.subr.mxu0 0.0
        %2128 = vmatpush2.msra.mxu0 0.0
        %2129 = vmatprep.subr.mxu0 0.0
        %2130 = vmatpush2.msra.mxu0 0.0
        %2131 = vmatprep.subr.mxu0 0.0
        %2132 = vmatpush2.msra.mxu0 0.0
        %2133 = vmatprep.subr.mxu0 0.0
        %2134 = vmatpush2.msra.mxu0 0.0
        %2135 = vmatprep.subr.mxu0 0.0
        %2136 = vmatpush2.msra.mxu0 0.0
        %2137 = vmatprep.subr.mxu0 0.0
        %2138 = vmatpush2.msra.mxu0 0.0
        %2139 = vmatprep.subr.mxu0 0.0
        %2140 = vmatpush2.msra.mxu0 0.0
        %2141 = vmatprep.mubr.f32.mxu0 0.0
        %2142 = vmatmul.mubr.f32.gmra.mxu0 %v2066
        %v2143 = vpop.f32.mrf.mxu0
        %v2144 = vadd.f32 %v1398, %v2143
        %v2145 = vpop.f32.mrf.mxu0
        %v2146 = vadd.f32 %v1400, %v2145
        %2147 = vmatprep.mubr.f32.mxu0 0.0
        %2148 = vmatmul.mubr.f32.gmra.mxu0 %v2069
        %v2149 = vpop.f32.mrf.mxu0
        %v2150 = vadd.f32 %v1404, %v2149
        %v2151 = vpop.f32.mrf.mxu0
        %v2152 = vadd.f32 %v1406, %v2151
        %2153 = vdwg.mxu0
        %v2154 = vld [vmem:[%s41] sm:$0xff]
        %v2155 = vld [vmem:[%s41 + $0x8] sm:$0xff]
        %2157 = vset.pattern.permute.xlu0 0
        %2158 = vperm.xlu0 %2157, %v2154
        %v2159 = vpop.permute.xlu0 %2158
        %2162 = vset.pattern.permute.xlu0 0
        %2163 = vperm.xlu0 %2162, %v2155
        %v2164 = vpop.permute.xlu0 %2163
        %v2166 = vmul.f32 %v2144, %v2159
        %v2167 = vmul.f32 %v2146, %v2159
        %v2168 = vmul.f32 %v2150, %v2164
        %v2169 = vmul.f32 %v2152, %v2164
        %v2170 = vld [vmem:[%s43] sm:$0xff]
        %v2171 = vld [vmem:[%s43 + $0x8] sm:$0xff]
        %2173 = vset.pattern.permute.xlu0 0
        %2174 = vperm.xlu0 %2173, %v2170
        %v2175 = vpop.permute.xlu0 %2174
        %2178 = vset.pattern.permute.xlu0 0
        %2179 = vperm.xlu0 %2178, %v2171
        %v2180 = vpop.permute.xlu0 %2179
        %v2182 = vadd.f32 %v2166, %v2175
        %v2183 = vadd.f32 %v2167, %v2175
        %v2184 = vadd.f32 %v2168, %v2180
        %v2185 = vadd.f32 %v2169, %v2180
        %v2186 = vmax.f32 %v2182, 0.0
        %v2187 = vmax.f32 %v2183, 0.0
        %v2188 = vmax.f32 %v2184, 0.0
        %v2189 = vmax.f32 %v2185, 0.0
        %v2190 = vld [vmem:[%s45] sm:$0xff]
        %v2191 = vld [vmem:[%s45 + $0x8] sm:$0xff]
        %v2192 = vld [vmem:[%s45 + $0x10] sm:$0xff]
        %v2193 = vld [vmem:[%s45 + $0x18] sm:$0xff]
        %v2195 = vsel %vm1455, %v2190, 0
        %v2198 = vsel %vm1455, %v2191, 0
        %v2201 = vsel %vm1455, %v2192, 0
        %v2204 = vsel %vm1455, %v2193, 0
        %2206 = vmatprep.subr.mxu0 0.0
        %2207 = vmatpush1.msra.mxu0 0.0
        %2208 = vmatprep.subr.mxu0 0.0
        %2209 = vmatpush1.msra.mxu0 0.0
        %2210 = vmatprep.subr.mxu0 0.0
        %2211 = vmatpush1.msra.mxu0 0.0
        %2212 = vmatprep.subr.mxu0 0.0
        %2213 = vmatpush1.msra.mxu0 0.0
        %2214 = vmatprep.subr.mxu0 0.0
        %2215 = vmatpush1.msra.mxu0 0.0
        %2216 = vmatprep.subr.mxu0 0.0
        %2217 = vmatpush1.msra.mxu0 0.0
        %2218 = vmatprep.subr.mxu0 0.0
        %2219 = vmatpush1.msra.mxu0 0.0
        %2220 = vmatprep.subr.mxu0 0.0
        %2221 = vmatpush1.msra.mxu0 0.0
        %2222 = vmatprep.subr.mxu0 0.0
        %2223 = vmatpush1.msra.mxu0 0.0
        %2224 = vmatprep.subr.mxu0 0.0
        %2225 = vmatpush1.msra.mxu0 0.0
        %2226 = vmatprep.subr.mxu0 0.0
        %2227 = vmatpush1.msra.mxu0 0.0
        %2228 = vmatprep.subr.mxu0 0.0
        %2229 = vmatpush1.msra.mxu0 0.0
        %2230 = vmatprep.subr.mxu0 0.0
        %2231 = vmatpush1.msra.mxu0 0.0
        %2232 = vmatprep.subr.mxu0 0.0
        %2233 = vmatpush1.msra.mxu0 0.0
        %2234 = vmatprep.subr.mxu0 %v2189
        %2235 = vmatpush1.msra.mxu0 %v2188
        %2236 = vmatprep.subr.mxu0 %v2187
        %2237 = vmatpush1.msra.mxu0 %v2186
        %2238 = vmatprep.subr.mxu0 0.0
        %2239 = vmatpush2.msra.mxu0 0.0
        %2240 = vmatprep.subr.mxu0 0.0
        %2241 = vmatpush2.msra.mxu0 0.0
        %2242 = vmatprep.subr.mxu0 0.0
        %2243 = vmatpush2.msra.mxu0 0.0
        %2244 = vmatprep.subr.mxu0 0.0
        %2245 = vmatpush2.msra.mxu0 0.0
        %2246 = vmatprep.subr.mxu0 0.0
        %2247 = vmatpush2.msra.mxu0 0.0
        %2248 = vmatprep.subr.mxu0 0.0
        %2249 = vmatpush2.msra.mxu0 0.0
        %2250 = vmatprep.subr.mxu0 0.0
        %2251 = vmatpush2.msra.mxu0 0.0
        %2252 = vmatprep.subr.mxu0 0.0
        %2253 = vmatpush2.msra.mxu0 0.0
        %2254 = vmatprep.subr.mxu0 0.0
        %2255 = vmatpush2.msra.mxu0 0.0
        %2256 = vmatprep.subr.mxu0 0.0
        %2257 = vmatpush2.msra.mxu0 0.0
        %2258 = vmatprep.subr.mxu0 0.0
        %2259 = vmatpush2.msra.mxu0 0.0
        %2260 = vmatprep.subr.mxu0 0.0
        %2261 = vmatpush2.msra.mxu0 0.0
        %2262 = vmatprep.subr.mxu0 0.0
        %2263 = vmatpush2.msra.mxu0 0.0
        %2264 = vmatprep.subr.mxu0 0.0
        %2265 = vmatpush2.msra.mxu0 0.0
        %2266 = vmatprep.subr.mxu0 0.0
        %2267 = vmatpush2.msra.mxu0 0.0
        %2268 = vmatprep.subr.mxu0 0.0
        %2269 = vmatpush2.msra.mxu0 0.0
        %2270 = vmatprep.mubr.f32.mxu0 0.0
        %2271 = vmatmul.mubr.f32.gmra.mxu0 %v2195
        %v2272 = vpop.f32.mrf.mxu0
        %v2273 = vadd.f32 0.0, %v2272
        %v2274 = vpop.f32.mrf.mxu0
        %v2275 = vadd.f32 0.0, %v2274
        %2276 = vmatprep.mubr.f32.mxu0 0.0
        %2277 = vmatmul.mubr.f32.gmra.mxu0 %v2198
        %v2278 = vpop.f32.mrf.mxu0
        %v2279 = vadd.f32 0.0, %v2278
        %v2280 = vpop.f32.mrf.mxu0
        %v2281 = vadd.f32 0.0, %v2280
        %2282 = vmatprep.mubr.f32.mxu0 0.0
        %2283 = vmatmul.mubr.f32.gmra.mxu0 %v2201
        %v2284 = vpop.f32.mrf.mxu0
        %v2285 = vadd.f32 0.0, %v2284
        %v2286 = vpop.f32.mrf.mxu0
        %v2287 = vadd.f32 0.0, %v2286
        %2288 = vmatprep.mubr.f32.mxu0 0.0
        %2289 = vmatmul.mubr.f32.gmra.mxu0 %v2204
        %v2290 = vpop.f32.mrf.mxu0
        %v2291 = vadd.f32 0.0, %v2290
        %v2292 = vpop.f32.mrf.mxu0
        %v2293 = vadd.f32 0.0, %v2292
        %2294 = vdwg.mxu0
        %v2295 = vld [vmem:[%s23] sm:$0xff]
        %v2296 = vld [vmem:[%s23 + $0x8] sm:$0xff]
        %2298 = vset.pattern.permute.xlu0 0
        %2299 = vperm.xlu0 %2298, %v2295
        %v2300 = vpop.permute.xlu0 %2299
        %2303 = vset.pattern.permute.xlu0 0
        %2304 = vperm.xlu0 %2303, %v2296
        %v2305 = vpop.permute.xlu0 %2304
        %v2307 = vmul.f32 %v2144, %v2300
        %v2308 = vmul.f32 %v2146, %v2300
        %v2309 = vmul.f32 %v2150, %v2305
        %v2310 = vmul.f32 %v2152, %v2305
        %v2311 = vld [vmem:[%s25] sm:$0xff]
        %v2312 = vld [vmem:[%s25 + $0x8] sm:$0xff]
        %2314 = vset.pattern.permute.xlu0 0
        %2315 = vperm.xlu0 %2314, %v2311
        %v2316 = vpop.permute.xlu0 %2315
        %2319 = vset.pattern.permute.xlu0 0
        %2320 = vperm.xlu0 %2319, %v2312
        %v2321 = vpop.permute.xlu0 %2320
        %v2323 = vadd.f32 %v2307, %v2316
        %v2324 = vadd.f32 %v2308, %v2316
        %v2325 = vadd.f32 %v2309, %v2321
        %v2326 = vadd.f32 %v2310, %v2321
        %v2327 = vmax.f32 %v2323, 0.0
        %v2328 = vmax.f32 %v2324, 0.0
        %v2329 = vmax.f32 %v2325, 0.0
        %v2330 = vmax.f32 %v2326, 0.0
        %v2331 = vld [vmem:[%s27] sm:$0xff]
        %v2333 = vsel %vm1455, %v2331, 0
        %2335 = vmatprep.subr.mxu0 0.0
        %2336 = vmatpush1.msra.mxu0 0.0
        %2337 = vmatprep.subr.mxu0 0.0
        %2338 = vmatpush1.msra.mxu0 0.0
        %2339 = vmatprep.subr.mxu0 0.0
        %2340 = vmatpush1.msra.mxu0 0.0
        %2341 = vmatprep.subr.mxu0 0.0
        %2342 = vmatpush1.msra.mxu0 0.0
        %2343 = vmatprep.subr.mxu0 0.0
        %2344 = vmatpush1.msra.mxu0 0.0
        %2345 = vmatprep.subr.mxu0 0.0
        %2346 = vmatpush1.msra.mxu0 0.0
        %2347 = vmatprep.subr.mxu0 0.0
        %2348 = vmatpush1.msra.mxu0 0.0
        %2349 = vmatprep.subr.mxu0 0.0
        %2350 = vmatpush1.msra.mxu0 0.0
        %2351 = vmatprep.subr.mxu0 0.0
        %2352 = vmatpush1.msra.mxu0 0.0
        %2353 = vmatprep.subr.mxu0 0.0
        %2354 = vmatpush1.msra.mxu0 0.0
        %2355 = vmatprep.subr.mxu0 0.0
        %2356 = vmatpush1.msra.mxu0 0.0
        %2357 = vmatprep.subr.mxu0 0.0
        %2358 = vmatpush1.msra.mxu0 0.0
        %2359 = vmatprep.subr.mxu0 0.0
        %2360 = vmatpush1.msra.mxu0 0.0
        %2361 = vmatprep.subr.mxu0 0.0
        %2362 = vmatpush1.msra.mxu0 0.0
        %2363 = vmatprep.subr.mxu0 %v2330
        %2364 = vmatpush1.msra.mxu0 %v2329
        %2365 = vmatprep.subr.mxu0 %v2328
        %2366 = vmatpush1.msra.mxu0 %v2327
        %2367 = vmatprep.subr.mxu0 0.0
        %2368 = vmatpush2.msra.mxu0 0.0
        %2369 = vmatprep.subr.mxu0 0.0
        %2370 = vmatpush2.msra.mxu0 0.0
        %2371 = vmatprep.subr.mxu0 0.0
        %2372 = vmatpush2.msra.mxu0 0.0
        %2373 = vmatprep.subr.mxu0 0.0
        %2374 = vmatpush2.msra.mxu0 0.0
        %2375 = vmatprep.subr.mxu0 0.0
        %2376 = vmatpush2.msra.mxu0 0.0
        %2377 = vmatprep.subr.mxu0 0.0
        %2378 = vmatpush2.msra.mxu0 0.0
        %2379 = vmatprep.subr.mxu0 0.0
        %2380 = vmatpush2.msra.mxu0 0.0
        %2381 = vmatprep.subr.mxu0 0.0
        %2382 = vmatpush2.msra.mxu0 0.0
        %2383 = vmatprep.subr.mxu0 0.0
        %2384 = vmatpush2.msra.mxu0 0.0
        %2385 = vmatprep.subr.mxu0 0.0
        %2386 = vmatpush2.msra.mxu0 0.0
        %2387 = vmatprep.subr.mxu0 0.0
        %2388 = vmatpush2.msra.mxu0 0.0
        %2389 = vmatprep.subr.mxu0 0.0
        %2390 = vmatpush2.msra.mxu0 0.0
        %2391 = vmatprep.subr.mxu0 0.0
        %2392 = vmatpush2.msra.mxu0 0.0
        %2393 = vmatprep.subr.mxu0 0.0
        %2394 = vmatpush2.msra.mxu0 0.0
        %2395 = vmatprep.subr.mxu0 0.0
        %2396 = vmatpush2.msra.mxu0 0.0
        %2397 = vmatprep.subr.mxu0 0.0
        %2398 = vmatpush2.msra.mxu0 0.0
        %2399 = vmatprep.mubr.f32.mxu0 0.0
        %2400 = vmatmul.mubr.f32.gmra.mxu0 %v2333
        %v2401 = vpop.f32.mrf.mxu0
        %v2402 = vadd.f32 0.0, %v2401
        %v2403 = vpop.f32.mrf.mxu0
        %v2404 = vadd.f32 0.0, %v2403
        %2405 = vdwg.mxu0
        %v2406 = vld [vmem:[%s29] sm:$0xff]
        %2408 = vset.pattern.permute.xlu0 0
        %2409 = vperm.xlu0 %2408, %v2406
        %v2410 = vpop.permute.xlu0 %2409
        %v2412 = vmul.f32 %v2402, %v2410
        %v2413 = vmul.f32 %v2404, %v2410
        %v2414 = vld [vmem:[%s31] sm:$0xff]
        %2416 = vset.pattern.permute.xlu0 0
        %2417 = vperm.xlu0 %2416, %v2414
        %v2418 = vpop.permute.xlu0 %2417
        %v2420 = vadd.f32 %v2412, %v2418
        %v2421 = vadd.f32 %v2413, %v2418
        %v2422 = vmax.f32 %v2420, 0.0
        %v2423 = vmax.f32 %v2421, 0.0
        %2424 = vrot.lane.b32.xlu0 %v2422, 17
        %v2425 = vpop.permute.xlu0 %2424
        %2426 = vrot.lane.b32.xlu0 %v2423, 17
        %v2427 = vpop.permute.xlu0 %2426
        %v2428 = vsel %vm1799, %v2425, %v2427
        %v2429 = vsel %vm1799, %v2427, %v2425
        %v2430 = vmul.f32 %v2429, %v1805
        %v2431 = vmul.f32 %v2428, %v1809
        %2432 = vrot.lane.b32.xlu0 %v2422, 16
        %v2433 = vpop.permute.xlu0 %2432
        %2434 = vrot.lane.b32.xlu0 %v2423, 16
        %v2435 = vpop.permute.xlu0 %2434
        %v2436 = vsel %vm1816, %v2433, %v2435
        %v2437 = vsel %vm1816, %v2435, %v2433
        %v2438 = vmul.f32 %v2437, %v1822
        %v2439 = vmul.f32 %v2436, %v1826
        %2440 = vrot.lane.b32.xlu0 %v2422, 15
        %v2441 = vpop.permute.xlu0 %2440
        %2442 = vrot.lane.b32.xlu0 %v2423, 15
        %v2443 = vpop.permute.xlu0 %2442
        %v2444 = vsel %vm1833, %v2441, %v2443
        %v2445 = vsel %vm1833, %v2443, %v2441
        %v2446 = vmul.f32 %v2445, %v1839
        %v2447 = vmul.f32 %v2444, %v1843
        %2448 = vrot.lane.b32.xlu0 %v2422, 1
        %v2449 = vpop.permute.xlu0 %2448
        %2450 = vrot.lane.b32.xlu0 %v2423, 1
        %v2451 = vpop.permute.xlu0 %2450
        %v2452 = vsel %vm1850, %v2449, %v2451
        %v2453 = vsel %vm1850, %v2451, %v2449
        %v2454 = vmul.f32 %v2453, %v1856
        %v2455 = vmul.f32 %v2452, %v1860
        %2456 = vrot.lane.b32.xlu0 %v2422, 127
        %v2457 = vpop.permute.xlu0 %2456
        %2458 = vrot.lane.b32.xlu0 %v2423, 127
        %v2459 = vpop.permute.xlu0 %2458
        %v2460 = vsel %vm1867, %v2457, %v2459
        %v2461 = vsel %vm1867, %v2459, %v2457
        %v2462 = vmul.f32 %v2460, %v1873
        %v2463 = vmul.f32 %v2461, %v1877
        %2464 = vrot.lane.b32.xlu0 %v2422, 113
        %v2465 = vpop.permute.xlu0 %2464
        %2466 = vrot.lane.b32.xlu0 %v2423, 113
        %v2467 = vpop.permute.xlu0 %2466
        %v2468 = vsel %vm1884, %v2465, %v2467
        %v2469 = vsel %vm1884, %v2467, %v2465
        %v2470 = vmul.f32 %v2468, %v1890
        %v2471 = vmul.f32 %v2469, %v1894
        %2472 = vrot.lane.b32.xlu0 %v2422, 112
        %v2473 = vpop.permute.xlu0 %2472
        %2474 = vrot.lane.b32.xlu0 %v2423, 112
        %v2475 = vpop.permute.xlu0 %2474
        %v2476 = vsel %vm1901, %v2473, %v2475
        %v2477 = vsel %vm1901, %v2475, %v2473
        %v2478 = vmul.f32 %v2476, %v1907
        %v2479 = vmul.f32 %v2477, %v1911
        %2480 = vrot.lane.b32.xlu0 %v2422, 111
        %v2481 = vpop.permute.xlu0 %2480
        %2482 = vrot.lane.b32.xlu0 %v2423, 111
        %v2483 = vpop.permute.xlu0 %2482
        %v2484 = vsel %vm1918, %v2481, %v2483
        %v2485 = vsel %vm1918, %v2483, %v2481
        %v2486 = vmul.f32 %v2484, %v1924
        %v2487 = vmul.f32 %v2485, %v1928
        %v2488 = vld [vmem:[#allocation12] sm:$0xff]
        %vm2489 = vcmask 588800
        %v2491 = vsel %vm2489, %v2488, 0
        %2493 = vmatprep.subr.mxu0 0.0
        %2494 = vmatpush1.msra.mxu0 0.0
        %2495 = vmatprep.subr.mxu0 0.0
        %2496 = vmatpush1.msra.mxu0 0.0
        %2497 = vmatprep.subr.mxu0 0.0
        %2498 = vmatpush1.msra.mxu0 0.0
        %2499 = vmatprep.subr.mxu0 0.0
        %2500 = vmatpush1.msra.mxu0 0.0
        %2501 = vmatprep.subr.mxu0 0.0
        %2502 = vmatpush1.msra.mxu0 0.0
        %2503 = vmatprep.subr.mxu0 0.0
        %2504 = vmatpush1.msra.mxu0 0.0
        %2505 = vmatprep.subr.mxu0 0.0
        %2506 = vmatpush1.msra.mxu0 0.0
        %2507 = vmatprep.subr.mxu0 %v2487
        %2508 = vmatpush1.msra.mxu0 %v2486
        %2509 = vmatprep.subr.mxu0 %v2479
        %2510 = vmatpush1.msra.mxu0 %v2478
        %2511 = vmatprep.subr.mxu0 %v2471
        %2512 = vmatpush1.msra.mxu0 %v2470
        %2513 = vmatprep.subr.mxu0 %v2463
        %2514 = vmatpush1.msra.mxu0 %v2462
        %2515 = vmatprep.subr.mxu0 %v2423
        %2516 = vmatpush1.msra.mxu0 %v2422
        %2517 = vmatprep.subr.mxu0 %v2455
        %2518 = vmatpush1.msra.mxu0 %v2454
        %2519 = vmatprep.subr.mxu0 %v2447
        %2520 = vmatpush1.msra.mxu0 %v2446
        %2521 = vmatprep.subr.mxu0 %v2439
        %2522 = vmatpush1.msra.mxu0 %v2438
        %2523 = vmatprep.subr.mxu0 %v2431
        %2524 = vmatpush1.msra.mxu0 %v2430
        %2525 = vmatprep.subr.mxu0 0.0
        %2526 = vmatpush2.msra.mxu0 0.0
        %2527 = vmatprep.subr.mxu0 0.0
        %2528 = vmatpush2.msra.mxu0 0.0
        %2529 = vmatprep.subr.mxu0 0.0
        %2530 = vmatpush2.msra.mxu0 0.0
        %2531 = vmatprep.subr.mxu0 0.0
        %2532 = vmatpush2.msra.mxu0 0.0
        %2533 = vmatprep.subr.mxu0 0.0
        %2534 = vmatpush2.msra.mxu0 0.0
        %2535 = vmatprep.subr.mxu0 0.0
        %2536 = vmatpush2.msra.mxu0 0.0
        %2537 = vmatprep.subr.mxu0 0.0
        %2538 = vmatpush2.msra.mxu0 0.0
        %2539 = vmatprep.subr.mxu0 0.0
        %2540 = vmatpush2.msra.mxu0 0.0
        %2541 = vmatprep.subr.mxu0 0.0
        %2542 = vmatpush2.msra.mxu0 0.0
        %2543 = vmatprep.subr.mxu0 0.0
        %2544 = vmatpush2.msra.mxu0 0.0
        %2545 = vmatprep.subr.mxu0 0.0
        %2546 = vmatpush2.msra.mxu0 0.0
        %2547 = vmatprep.subr.mxu0 0.0
        %2548 = vmatpush2.msra.mxu0 0.0
        %2549 = vmatprep.subr.mxu0 0.0
        %2550 = vmatpush2.msra.mxu0 0.0
        %2551 = vmatprep.subr.mxu0 0.0
        %2552 = vmatpush2.msra.mxu0 0.0
        %2553 = vmatprep.subr.mxu0 0.0
        %2554 = vmatpush2.msra.mxu0 0.0
        %2555 = vmatprep.subr.mxu0 0.0
        %2556 = vmatpush2.msra.mxu0 0.0
        %2557 = vmatprep.mubr.f32.mxu0 0.0
        %2558 = vmatmul.mubr.f32.gmra.mxu0 %v2491
        %v2559 = vpop.f32.mrf.mxu0
        %v2560 = vadd.f32 0.0, %v2559
        %v2561 = vpop.f32.mrf.mxu0
        %v2562 = vadd.f32 0.0, %v2561
        %2563 = vdwg.mxu0
        %v2564 = vld [vmem:[%s35] sm:$0xff]
        %2566 = vset.pattern.permute.xlu0 0
        %2567 = vperm.xlu0 %2566, %v2564
        %v2568 = vpop.permute.xlu0 %2567
        %v2570 = vmul.f32 %v2560, %v2568
        %v2571 = vmul.f32 %v2562, %v2568
        %v2572 = vld [vmem:[%s37] sm:$0xff]
        %2574 = vset.pattern.permute.xlu0 0
        %2575 = vperm.xlu0 %2574, %v2572
        %v2576 = vpop.permute.xlu0 %2575
        %v2578 = vadd.f32 %v2570, %v2576
        %v2579 = vadd.f32 %v2571, %v2576
        %v2580 = vmax.f32 %v2578, 0.0
        %v2581 = vmax.f32 %v2579, 0.0
        %v2582 = vld [vmem:[%s39] sm:$0xff]
        %v2583 = vld [vmem:[%s39 + $0x8] sm:$0xff]
        %v2584 = vld [vmem:[%s39 + $0x10] sm:$0xff]
        %v2585 = vld [vmem:[%s39 + $0x18] sm:$0xff]
        %v2587 = vsel %vm1210, %v2582, 0
        %v2590 = vsel %vm1210, %v2583, 0
        %v2593 = vsel %vm1210, %v2584, 0
        %v2596 = vsel %vm1210, %v2585, 0
        %2598 = vmatprep.subr.mxu0 0.0
        %2599 = vmatpush1.msra.mxu0 0.0
        %2600 = vmatprep.subr.mxu0 0.0
        %2601 = vmatpush1.msra.mxu0 0.0
        %2602 = vmatprep.subr.mxu0 0.0
        %2603 = vmatpush1.msra.mxu0 0.0
        %2604 = vmatprep.subr.mxu0 0.0
        %2605 = vmatpush1.msra.mxu0 0.0
        %2606 = vmatprep.subr.mxu0 0.0
        %2607 = vmatpush1.msra.mxu0 0.0
        %2608 = vmatprep.subr.mxu0 0.0
        %2609 = vmatpush1.msra.mxu0 0.0
        %2610 = vmatprep.subr.mxu0 0.0
        %2611 = vmatpush1.msra.mxu0 0.0
        %2612 = vmatprep.subr.mxu0 0.0
        %2613 = vmatpush1.msra.mxu0 0.0
        %2614 = vmatprep.subr.mxu0 0.0
        %2615 = vmatpush1.msra.mxu0 0.0
        %2616 = vmatprep.subr.mxu0 0.0
        %2617 = vmatpush1.msra.mxu0 0.0
        %2618 = vmatprep.subr.mxu0 0.0
        %2619 = vmatpush1.msra.mxu0 0.0
        %2620 = vmatprep.subr.mxu0 0.0
        %2621 = vmatpush1.msra.mxu0 0.0
        %2622 = vmatprep.subr.mxu0 0.0
        %2623 = vmatpush1.msra.mxu0 0.0
        %2624 = vmatprep.subr.mxu0 0.0
        %2625 = vmatpush1.msra.mxu0 0.0
        %2626 = vmatprep.subr.mxu0 0.0
        %2627 = vmatpush1.msra.mxu0 0.0
        %2628 = vmatprep.subr.mxu0 %v2581
        %2629 = vmatpush1.msra.mxu0 %v2580
        %2630 = vmatprep.subr.mxu0 0.0
        %2631 = vmatpush2.msra.mxu0 0.0
        %2632 = vmatprep.subr.mxu0 0.0
        %2633 = vmatpush2.msra.mxu0 0.0
        %2634 = vmatprep.subr.mxu0 0.0
        %2635 = vmatpush2.msra.mxu0 0.0
        %2636 = vmatprep.subr.mxu0 0.0
        %2637 = vmatpush2.msra.mxu0 0.0
        %2638 = vmatprep.subr.mxu0 0.0
        %2639 = vmatpush2.msra.mxu0 0.0
        %2640 = vmatprep.subr.mxu0 0.0
        %2641 = vmatpush2.msra.mxu0 0.0
        %2642 = vmatprep.subr.mxu0 0.0
        %2643 = vmatpush2.msra.mxu0 0.0
        %2644 = vmatprep.subr.mxu0 0.0
        %2645 = vmatpush2.msra.mxu0 0.0
        %2646 = vmatprep.subr.mxu0 0.0
        %2647 = vmatpush2.msra.mxu0 0.0
        %2648 = vmatprep.subr.mxu0 0.0
        %2649 = vmatpush2.msra.mxu0 0.0
        %2650 = vmatprep.subr.mxu0 0.0
        %2651 = vmatpush2.msra.mxu0 0.0
        %2652 = vmatprep.subr.mxu0 0.0
        %2653 = vmatpush2.msra.mxu0 0.0
        %2654 = vmatprep.subr.mxu0 0.0
        %2655 = vmatpush2.msra.mxu0 0.0
        %2656 = vmatprep.subr.mxu0 0.0
        %2657 = vmatpush2.msra.mxu0 0.0
        %2658 = vmatprep.subr.mxu0 0.0
        %2659 = vmatpush2.msra.mxu0 0.0
        %2660 = vmatprep.subr.mxu0 0.0
        %2661 = vmatpush2.msra.mxu0 0.0
        %2662 = vmatprep.mubr.f32.mxu0 0.0
        %2663 = vmatmul.mubr.f32.gmra.mxu0 %v2587
        %v2664 = vpop.f32.mrf.mxu0
        %v2665 = vadd.f32 %v2273, %v2664
        %v2666 = vpop.f32.mrf.mxu0
        %v2667 = vadd.f32 %v2275, %v2666
        %2668 = vmatprep.mubr.f32.mxu0 0.0
        %2669 = vmatmul.mubr.f32.gmra.mxu0 %v2590
        %v2670 = vpop.f32.mrf.mxu0
        %v2671 = vadd.f32 %v2279, %v2670
        %v2672 = vpop.f32.mrf.mxu0
        %v2673 = vadd.f32 %v2281, %v2672
        %2674 = vmatprep.mubr.f32.mxu0 0.0
        %2675 = vmatmul.mubr.f32.gmra.mxu0 %v2593
        %v2676 = vpop.f32.mrf.mxu0
        %v2677 = vadd.f32 %v2285, %v2676
        %v2678 = vpop.f32.mrf.mxu0
        %v2679 = vadd.f32 %v2287, %v2678
        %2680 = vmatprep.mubr.f32.mxu0 0.0
        %2681 = vmatmul.mubr.f32.gmra.mxu0 %v2596
        %v2682 = vpop.f32.mrf.mxu0
        %v2683 = vadd.f32 %v2291, %v2682
        %v2684 = vpop.f32.mrf.mxu0
        %v2685 = vadd.f32 %v2293, %v2684
        %2686 = vdwg.mxu0
        %2688 = vset.pattern.permute.xlu0 0
        %2689 = vperm.xlu0 %2688, %v1657
        %v2690 = vpop.permute.xlu0 %2689
        %2693 = vset.pattern.permute.xlu0 0
        %2694 = vperm.xlu0 %2693, %v1659
        %v2695 = vpop.permute.xlu0 %2694
        %2698 = vset.pattern.permute.xlu0 0
        %2699 = vperm.xlu0 %2698, %v1661
        %v2700 = vpop.permute.xlu0 %2699
        %2703 = vset.pattern.permute.xlu0 0
        %2704 = vperm.xlu0 %2703, %v1663
        %v2705 = vpop.permute.xlu0 %2704
        %v2707 = vmul.f32 %v2665, %v2690
        %v2708 = vmul.f32 %v2667, %v2690
        %v2709 = vmul.f32 %v2671, %v2695
        %v2710 = vmul.f32 %v2673, %v2695
        %v2711 = vmul.f32 %v2677, %v2700
        %v2712 = vmul.f32 %v2679, %v2700
        %v2713 = vmul.f32 %v2683, %v2705
        %v2714 = vmul.f32 %v2685, %v2705
        %v2715 = vadd.f32 %v2707, %v2690
        %v2716 = vadd.f32 %v2708, %v2690
        %v2717 = vadd.f32 %v2709, %v2695
        %v2718 = vadd.f32 %v2710, %v2695
        %v2719 = vadd.f32 %v2711, %v2700
        %v2720 = vadd.f32 %v2712, %v2700
        %v2721 = vadd.f32 %v2713, %v2705
        %v2722 = vadd.f32 %v2714, %v2705
        %2723 = vst [vmem:[%s1186] sm:$0xff] %v2715
        %2724 = vst [vmem:[%s1186 + $0x8] sm:$0xff] %v2716
        %2725 = vst [vmem:[%s1186 + $0x10] sm:$0xff] %v2717
        %2726 = vst [vmem:[%s1186 + $0x18] sm:$0xff] %v2718
        %2727 = vst [vmem:[%s1186 + $0x20] sm:$0xff] %v2719
        %2728 = vst [vmem:[%s1186 + $0x28] sm:$0xff] %v2720
        %2729 = vst [vmem:[%s1186 + $0x30] sm:$0xff] %v2721
        %2730 = vst [vmem:[%s1186 + $0x38] sm:$0xff] %v2722
        %p2731 = scmp.lt.s32.totalorder %s88, 1
        %s2732 = scalar_select %p2731, %s88, 1
        %s2733 = smul.addr %s2732, 8
        %s2734 = smul.addr %s2733, 8
        %s2735 = scalar_lea.vmem %s73, %s2734
        // Predicated region
        $region193: #{skip_att_unit_forward.1} parent=163 // pred_check
          %p2736 = pneg %p867
        $region194: #{skip_att_unit_forward.1} parent=163 // pred_check_branch
          %2738 = sbr.rel (%p2736) target = $region196
        $region195: #{skip_att_unit_forward.1} parent=163 // pred_region
          _
        $region196: #{skip_att_unit_forward.1} parent=163 // pred_fallthru
          _
      $region164: #{skip_att_unit_forward.1} parent=5 // pred_fallthru
        _
      %p2739 = scmp.le.s32.totalorder 2, %s83
      // Predicated region
      $region197: #{skip_att_unit_forward.1} parent=5 // pred_check
        %p2740 = pneg %p2739
      $region198: #{skip_att_unit_forward.1} parent=5 // pred_check_branch
        %2742 = sbr.rel (%p2740) target = $region200
      $region199: #{skip_att_unit_forward.1} parent=5 // pred_region
        %s2743 = ssub.s32 %s83, 2
        // Predicated region
        $region201: #{skip_att_unit_forward.1} parent=199 // pred_check
          %p2744 = pneg %p873
        $region202: #{skip_att_unit_forward.1} parent=199 // pred_check_branch
          %2746 = sbr.rel (%p2744) target = $region204
        $region203: #{skip_att_unit_forward.1} parent=199 // pred_region
          %p2747 = scmp.lt.s32.totalorder %s89, 1
          %s2748 = scalar_select %p2747, %s89, 1
          %s2749 = smul.addr %s2748, 8
          %s2750 = smul.addr %s2749, 8
          %s2751 = scalar_lea.vmem %s73, %s2750
        $region204: #{skip_att_unit_forward.1} parent=199 // pred_fallthru
          _
      $region200: #{skip_att_unit_forward.1} parent=5 // pred_fallthru
        _
    $region6: #{skip_att_unit_forward.1} parent=1 // loop_footer
      %s87 = sadd.s32 1, %s83
    $region7: #{skip_att_unit_forward.1} parent=1 // loop_footer_branch
      %82 = sbr.rel target = $region3
    $region8: #{skip_att_unit_forward.1} parent=1 // loop_exit
      _
    %2752 = vsyncpa [#allocation3], 1
    %s2753 = scalar_lea.sflag [#allocation3], 1
    %2754 = vsyncpa %s2753, 1
    %2755 = vsyncpa [#allocation5], 1
    %2756 = vsyncpa [#allocation8], 1
    %2757 = vsyncpa [#allocation11], 1

</llo_original>
